<compile_context>
chip_gen: v7x
topology: tpu7x:2x2x1
jax: 0.10.0
libtpu: 0.0.40
codegen_flags: <defaults>
</compile_context>

<pallas_src>
import functools

import jax
import jax.numpy as jnp
from jax.experimental import pallas as pl
from jax.experimental.pallas import tpu as pltpu

EPS = 1e-5  # nn.InstanceNorm2d default


# ----------------------------------------------------------------------------
# Pallas kernel: one batch element per grid step, everything fused.
# Layout: feature maps are (C, Lq) with Lq = Ho * (Wo + 2); columns j >= Wo of
# each row are "garbage" and are masked out of all statistics / re-staging.
# ----------------------------------------------------------------------------
def _fna_kernel(xph_ref, mask_ref,
                w_a1_ref, w_a2_ref, ga2_ref, ba2_ref,
                w_a3_ref, ga3_ref, ba3_ref, w_a4_ref,
                w_m1_ref, gm1_ref, bm1_ref,
                w_m2_ref, gm2_ref, bm2_ref,
                out_ref,
                mid_ref, big_ref,
                *, s, Ho, Wo, Wrow, Lq, Lbuf, Cin, addition):
    f32 = jnp.float32
    bf16 = jnp.bfloat16
    inv_P = 1.0 / float(Ho * Wo)
    mask = mask_ref[...]                      # (1, Lq) f32, 1.0 at valid columns

    def restage(buf, v):
        # Write masked bf16 `v` (C, Lq) as the interior of a zero-padded map:
        # one contiguous lane store + two thin head/tail zero strips.
        c = buf.shape[0]
        buf[:, 0:Wrow + 1] = jnp.zeros((c, Wrow + 1), bf16)
        buf[:, Wrow + 1:Wrow + 1 + Lq] = (v * mask).astype(bf16)
        buf[:, Wrow + 1 + Lq:Lbuf] = jnp.zeros((c, Lbuf - Wrow - 1 - Lq), bf16)

    def conv3x3_buf(buf, w_ref):
        # Stride-1 3x3 conv over a padded scratch map; every tap operand is a
        # contiguous lane slice (no relayout).  w_ref: (9, Co, Ci) bf16.
        c_out = w_ref.shape[1]
        acc = jnp.zeros((c_out, Lq), f32)
        for dy in range(3):
            for dx in range(3):
                sl = buf[:, dy * Wrow + dx: dy * Wrow + dx + Lq]
                acc = acc + jnp.dot(w_ref[dy * 3 + dx], sl,
                                    preferred_element_type=f32)
        return acc

    def conv3x3_strided():
        # Stride-s 3x3 conv over the phase-split padded input (w_m1: (9,Co,Ci)).
        c_out = w_m1_ref.shape[1]
        acc = jnp.zeros((c_out, Lq), f32)
        for dy in range(3):
            for dx in range(3):
                k = (dy % s) * s + (dx % s)                 # stride phase
                shift = (dy // s) * Wrow + (dx // s)        # lane shift
                sl = xph_ref[0, k * Cin:(k + 1) * Cin, shift:shift + Lq]
                acc = acc + jnp.dot(w_m1_ref[dy * 3 + dx], sl,
                                    preferred_element_type=f32)
        return acc

    def inst_norm_relu(v, g_ref, b_ref):
        # Two-pass masked statistics over the Ho*Wo valid positions (f32).
        m1 = jnp.sum(v * mask, axis=1, keepdims=True) * inv_P
        d = v - m1
        var = jnp.sum(d * d * mask, axis=1, keepdims=True) * inv_P
        y = d * jax.lax.rsqrt(var + EPS) * g_ref[...] + b_ref[...]
        return jnp.maximum(y, 0.0)

    # ---------------- attention branch ----------------
    # f1 = 1x1 conv, stride s (reads x at (s*i, s*j)).
    k0 = (1 % s) * s + (1 % s)
    sh0 = (1 // s) * (Wrow + 1)
    xs = xph_ref[0, k0 * Cin:(k0 + 1) * Cin, sh0:sh0 + Lq]          # (Cin, Lq)
    f1 = jnp.dot(w_a1_ref[...], xs, preferred_element_type=f32)     # (Cmid_p, Lq)

    restage(mid_ref, f1)
    f2 = inst_norm_relu(conv3x3_buf(mid_ref, w_a2_ref), ga2_ref, ba2_ref) + f1
    restage(mid_ref, f2)
    f3 = inst_norm_relu(conv3x3_buf(mid_ref, w_a3_ref), ga3_ref, ba3_ref) + f2
    attention = jnp.dot(w_a4_ref[...], f3.astype(bf16),
                        preferred_element_type=f32)                 # (Cout, Lq)

    # ---------------- main branch ----------------
    m1 = inst_norm_relu(conv3x3_strided(), gm1_ref, bm1_ref)
    restage(big_ref, m1)
    features = inst_norm_relu(conv3x3_buf(big_ref, w_m2_ref), gm2_ref, bm2_ref)

    out = attention * features
    if addition:
        out = out + features
    # Lane-dense store over the full flattened spatial extent.
    out_ref[0] = out.astype(out_ref.dtype)


# ----------------------------------------------------------------------------
# Wrapper: layout glue (bf16 cast, padding, stride-phase split, channel-major
# weights, masks, BlockSpecs) + pallas_call.
# ----------------------------------------------------------------------------
def fna_pallas(x, params, *, step, addition):
    """x: (N, Cin, H, W) float32 NCHW.  Returns (N, Cout, Ho, Wo) float32."""
    N, Cin, H, W = x.shape
    s = int(step)
    Cmid = Cin // 8
    Cmid_p = max(Cmid, 8)            # pad tiny attention channels for the MXU
    pc = Cmid_p - Cmid
    Cout = params['w_m1'].shape[-1]
    Ho = (H - 1) // s + 1
    Wo = (W - 1) // s + 1
    Wrow = Wo + 2                    # row stride of every flattened map
    Lq = Ho * Wrow                   # flattened conv-output extent (incl. garbage cols)
    hh = 2 // s                      # max within-phase row/col tap offset
    Hph = Ho + hh
    Lph = (Hph + 1) * Wrow           # one extra zero row absorbs tap over-reads
    Lbuf = (Ho + 3) * Wrow           # padded scratch map + tap over-read slack
    bf16 = jnp.bfloat16
    f32 = jnp.float32

    # ---- input: cast to bf16 FIRST, zero-pad, stride-phase split, flatten ----
    xb = x.astype(bf16)
    if s == 1:
        # No phase split needed: single pad straight into the final flat layout.
        xph = jnp.pad(xb, ((0, 0), (0, 0),
                           (1, Hph + 1 - H - 1), (1, Wrow - W - 1)))
        xph = xph.reshape(N, Cin, Lph)
    else:
        x_pad = jnp.pad(xb, ((0, 0), (0, 0), (1, 1), (1, 1)))
        phs = []
        for py in range(s):
            for px in range(s):
                ph = x_pad[:, :, py::s, px::s]
                ph = jnp.pad(ph, ((0, 0), (0, 0),
                                  (0, Hph + 1 - ph.shape[2]),
                                  (0, Wrow - ph.shape[3])))
                phs.append(ph.reshape(N, Cin, Lph))
        xph = jnp.concatenate(phs, axis=1)          # (N, s*s*Cin, Lph)

    # Column-validity mask (1 at the Wo real columns of each output row).
    mask = jnp.concatenate(
        [jnp.ones((Ho, Wo), f32), jnp.zeros((Ho, Wrow - Wo), f32)],
        axis=1).reshape(1, Lq)

    # ---- weights: channel-major (output-channel on sublanes), bf16 MXU inputs.
    def tap_major(w):                 # (3,3,Ci,Co) -> (9, Co, Ci)
        return jnp.transpose(w, (0, 1, 3, 2)).reshape(9, w.shape[3], w.shape[2])

    w_a1 = jnp.pad(params['w_a1'].T, ((0, pc), (0, 0))).astype(bf16)   # (Cmid_p, Cin)
    w_a2 = jnp.pad(tap_major(params['w_a2']),
                   ((0, 0), (0, pc), (0, pc))).astype(bf16)            # (9, Cmid_p, Cmid_p)
    w_a3 = jnp.pad(tap_major(params['w_a3']),
                   ((0, 0), (0, pc), (0, pc))).astype(bf16)
    w_a4 = jnp.pad(params['w_a4'].T, ((0, 0), (0, pc))).astype(bf16)   # (Cout, Cmid_p)
    w_m1 = tap_major(params['w_m1']).astype(bf16)                      # (9, Cout, Cin)
    w_m2 = tap_major(params['w_m2']).astype(bf16)                      # (9, Cout, Cout)

    def col(v, pad_rows=0, pad_val=0.0):   # (1,C) affine param -> (C_p, 1) column, f32
        v = v.reshape(-1, 1).astype(f32)
        if pad_rows:
            v = jnp.pad(v, ((0, pad_rows), (0, 0)), constant_values=pad_val)
        return v

    ga2 = col(params['ga2'], pc, 1.0)   # gamma pad = 1, beta pad = 0 keeps the
    ba2 = col(params['ba2'], pc, 0.0)   # padded mid channels identically zero
    ga3 = col(params['ga3'], pc, 1.0)
    ba3 = col(params['ba3'], pc, 0.0)
    gm1, bm1 = col(params['gm1']), col(params['bm1'])
    gm2, bm2 = col(params['gm2']), col(params['bm2'])

    consts = [mask, w_a1, w_a2, ga2, ba2, w_a3, ga3, ba3, w_a4,
              w_m1, gm1, bm1, w_m2, gm2, bm2]

    def const_spec(shape):
        zeros = (0,) * len(shape)
        return pl.BlockSpec(shape, lambda n, _z=zeros: _z)

    in_specs = [pl.BlockSpec((1, s * s * Cin, Lph), lambda n: (n, 0, 0))]
    in_specs += [const_spec(c.shape) for c in consts]

    # Explicit per-step VMEM footprint estimate -> vmem_limit_bytes (the scoped
    # default is only 16/32 MiB depending on generation).
    est = (2 * s * s * Cin * Lph * 2            # double-buffered bf16 input block
           + 2 * Cout * Lq * 4                  # double-buffered f32 output block
           + (Cmid_p + Cout) * Lbuf * 2         # bf16 padded scratch maps
           + 12 * Cout * Lq * 4                 # f32 intermediates / temporaries
           + sum(int(c.size) * c.dtype.itemsize for c in consts))
    vmem_limit = int(min(max(2 * est, 32 * 2**20), 64 * 2**20))

    kernel = functools.partial(
        _fna_kernel, s=s, Ho=Ho, Wo=Wo, Wrow=Wrow, Lq=Lq, Lbuf=Lbuf,
        Cin=Cin, addition=bool(addition))

    out_flat = pl.pallas_call(
        kernel,
        out_shape=jax.ShapeDtypeStruct((N, Cout, Lq), x.dtype),
        grid=(N,),
        in_specs=in_specs,
        out_specs=pl.BlockSpec((1, Cout, Lq), lambda n: (n, 0, 0)),
        scratch_shapes=[
            pltpu.VMEM((Cmid_p, Lbuf), bf16),    # attention-branch padded map
            pltpu.VMEM((Cout, Lbuf), bf16),      # main-branch padded map
        ],
        # Batch axis is truly parallel (one writer per output block) -> lets
        # v7x shard batch elements across its two TensorCores.
        compiler_params=pltpu.CompilerParams(
            dimension_semantics=("parallel",),
            vmem_limit_bytes=vmem_limit),
    )(xph, *consts)

    # Drop the garbage columns; return NCHW like the PyTorch module.
    return out_flat.reshape(N, Cout, Ho, Wrow)[:, :, :, :Wo]


# ----------------------------------------------------------------------------
# Deterministic parameter init (shapes from FNA.__init__; HWIO conv layout).
# ----------------------------------------------------------------------------
def init_params(key, Cin, Cout):
    Cmid = Cin // 8
    ks = jax.random.split(key, 14)

    def cw(k, shape, fan_in):
        return jax.random.normal(k, shape, jnp.float32) / jnp.sqrt(float(fan_in))

    def gamma(k, c):
        return 1.0 + 0.1 * jax.random.normal(k, (1, c), jnp.float32)

    def beta(k, c):
        return 0.1 * jax.random.normal(k, (1, c), jnp.float32)

    return dict(
        w_a1=cw(ks[0], (Cin, Cmid), Cin),                  # 1x1, stride=step
        w_a2=cw(ks[1], (3, 3, Cmid, Cmid), 9 * Cmid),
        ga2=gamma(ks[2], Cmid), ba2=beta(ks[3], Cmid),
        w_a3=cw(ks[4], (3, 3, Cmid, Cmid), 9 * Cmid),
        ga3=gamma(ks[5], Cmid), ba3=beta(ks[6], Cmid),
        w_a4=cw(ks[7], (Cmid, Cout), Cmid),                # 1x1
        w_m1=cw(ks[8], (3, 3, Cin, Cout), 9 * Cin),        # 3x3, stride=step
        gm1=gamma(ks[9], Cout), bm1=beta(ks[10], Cout),
        w_m2=cw(ks[11], (3, 3, Cout, Cout), 9 * Cout),
        gm2=gamma(ks[12], Cout), bm2=beta(ks[13], Cout),
    )


# ----------------------------------------------------------------------------
# Pure-JAX reference (NHWC) for a sanity check of the kernel.
# ----------------------------------------------------------------------------
def fna_reference(x, p, *, step, addition):
    s = int(step)

    def conv3(v, w, stride):
        return jax.lax.conv_general_dilated(
            v, w, (stride, stride), ((1, 1), (1, 1)),
            dimension_numbers=('NHWC', 'HWIO', 'NHWC'))

    def inorm(v, g, b):
        mean = jnp.mean(v, axis=(1, 2), keepdims=True)
        var = jnp.mean((v - mean) ** 2, axis=(1, 2), keepdims=True)
        return ((v - mean) * jax.lax.rsqrt(var + EPS)
                * g.reshape(1, 1, 1, -1) + b.reshape(1, 1, 1, -1))

    relu = lambda v: jnp.maximum(v, 0.0)

    f1 = jnp.einsum('nhwc,cd->nhwd', x[:, ::s, ::s, :], p['w_a1'])
    f2 = relu(inorm(conv3(f1, p['w_a2'], 1), p['ga2'], p['ba2'])) + f1
    f3 = relu(inorm(conv3(f2, p['w_a3'], 1), p['ga3'], p['ba3'])) + f2
    attention = jnp.einsum('nhwc,cd->nhwd', f3, p['w_a4'])

    m1 = relu(inorm(conv3(x, p['w_m1'], s), p['gm1'], p['bm1']))
    features = relu(inorm(conv3(m1, p['w_m2'], 1), p['gm2'], p['bm2']))

    out = attention * features
    if addition:
        out = out + features
    return out


if __name__ == "__main__":
    key = jax.random.PRNGKey(0)
    kx, kp = jax.random.split(key)

    # Small shapes consistent with the module (in_channels must be >= 8).
    N, Cin, H, W = 2, 16, 16, 16
    Cout, step, addition = 16, 2, True

    x = jax.random.normal(kx, (N, Cin, H, W), jnp.float32)    # NCHW (PyTorch layout)
    params = init_params(kp, Cin, Cout)

    out = fna_pallas(x, params, step=step, addition=addition)
    out = jax.block_until_ready(out)

    x_nhwc = jnp.transpose(x, (0, 2, 3, 1))
    ref = jnp.transpose(
        fna_reference(x_nhwc, params, step=step, addition=addition), (0, 3, 1, 2))

    assert out.shape == (N, Cout, H // step, W // step), out.shape
    # Tolerance accounts for bf16 MXU matmul inputs (accumulation and all
    # InstanceNorm statistics remain f32); a functional bug would blow this
    # tolerance by orders of magnitude.
    err = jnp.abs(out - ref)
    tol = 2e-1 + 5e-2 * jnp.abs(ref)
    max_err = float(jnp.max(err))
    assert bool(jnp.all(err <= tol)), f"kernel/reference mismatch: max abs err {max_err}"

    print("KERNEL_OK")
</pallas_src>

<mosaic_0001>
module attributes {stable_mosaic.version = 11 : i64} {
  func.func @_fna_kernel(%arg0: i32, %arg1: memref<1x64x100xbf16, #tpu.memory_space<vmem>>, %arg2: memref<1x80xf32, #tpu.memory_space<vmem>>, %arg3: memref<8x16xbf16, #tpu.memory_space<vmem>>, %arg4: memref<9x8x8xbf16, #tpu.memory_space<vmem>>, %arg5: memref<8x1xf32, #tpu.memory_space<vmem>>, %arg6: memref<8x1xf32, #tpu.memory_space<vmem>>, %arg7: memref<9x8x8xbf16, #tpu.memory_space<vmem>>, %arg8: memref<8x1xf32, #tpu.memory_space<vmem>>, %arg9: memref<8x1xf32, #tpu.memory_space<vmem>>, %arg10: memref<16x8xbf16, #tpu.memory_space<vmem>>, %arg11: memref<9x16x16xbf16, #tpu.memory_space<vmem>>, %arg12: memref<16x1xf32, #tpu.memory_space<vmem>>, %arg13: memref<16x1xf32, #tpu.memory_space<vmem>>, %arg14: memref<9x16x16xbf16, #tpu.memory_space<vmem>>, %arg15: memref<16x1xf32, #tpu.memory_space<vmem>>, %arg16: memref<16x1xf32, #tpu.memory_space<vmem>>, %arg17: memref<1x16x80xf32, #tpu.memory_space<vmem>>, %arg18: memref<8x110xbf16, #tpu.memory_space<vmem>>, %arg19: memref<16x110xbf16, #tpu.memory_space<vmem>>) attributes {dimension_semantics = [#tpu.dimension_semantics<parallel>], iteration_bounds = array<i64: 2>, scalar_prefetch = 0 : i64, scratch_operands = 2 : i64, tpu.core_type = #tpu.core_type<tc>, window_params = [{transform_indices = @transform_0, window_bounds = array<i64: 1, 64, 100>}, {pipeline_mode = #tpu.pipeline_mode<synchronous>, transform_indices = @transform_1, window_bounds = array<i64: 1, 80>}, {pipeline_mode = #tpu.pipeline_mode<synchronous>, transform_indices = @transform_2, window_bounds = array<i64: 8, 16>}, {pipeline_mode = #tpu.pipeline_mode<synchronous>, transform_indices = @transform_3, window_bounds = array<i64: 9, 8, 8>}, {pipeline_mode = #tpu.pipeline_mode<synchronous>, transform_indices = @transform_4, window_bounds = array<i64: 8, 1>}, {pipeline_mode = #tpu.pipeline_mode<synchronous>, transform_indices = @transform_5, window_bounds = array<i64: 8, 1>}, {pipeline_mode = #tpu.pipeline_mode<synchronous>, transform_indices = @transform_6, window_bounds = array<i64: 9, 8, 8>}, {pipeline_mode = #tpu.pipeline_mode<synchronous>, transform_indices = @transform_7, window_bounds = array<i64: 8, 1>}, {pipeline_mode = #tpu.pipeline_mode<synchronous>, transform_indices = @transform_8, window_bounds = array<i64: 8, 1>}, {pipeline_mode = #tpu.pipeline_mode<synchronous>, transform_indices = @transform_9, window_bounds = array<i64: 16, 8>}, {pipeline_mode = #tpu.pipeline_mode<synchronous>, transform_indices = @transform_10, window_bounds = array<i64: 9, 16, 16>}, {pipeline_mode = #tpu.pipeline_mode<synchronous>, transform_indices = @transform_11, window_bounds = array<i64: 16, 1>}, {pipeline_mode = #tpu.pipeline_mode<synchronous>, transform_indices = @transform_12, window_bounds = array<i64: 16, 1>}, {pipeline_mode = #tpu.pipeline_mode<synchronous>, transform_indices = @transform_13, window_bounds = array<i64: 9, 16, 16>}, {pipeline_mode = #tpu.pipeline_mode<synchronous>, transform_indices = @transform_14, window_bounds = array<i64: 16, 1>}, {pipeline_mode = #tpu.pipeline_mode<synchronous>, transform_indices = @transform_15, window_bounds = array<i64: 16, 1>}, {transform_indices = @transform_16, window_bounds = array<i64: 1, 16, 80>}]} {
    %c0 = arith.constant 0 : index
    %c0_0 = arith.constant 0 : index
    %0 = vector.load %arg2[%c0, %c0_0] : memref<1x80xf32, #tpu.memory_space<vmem>>, vector<1x80xf32>
    %c0_1 = arith.constant 0 : index
    %c48 = arith.constant 48 : index
    %c0_2 = arith.constant 0 : index
    %1 = vector.load %arg1[%c0_1, %c48, %c0_2] : memref<1x64x100xbf16, #tpu.memory_space<vmem>>, vector<1x16x80xbf16>
    %2 = vector.shape_cast %1 : vector<1x16x80xbf16> to vector<16x80xbf16>
    %c0_3 = arith.constant 0 : index
    %c0_4 = arith.constant 0 : index
    %3 = vector.load %arg3[%c0_3, %c0_4] : memref<8x16xbf16, #tpu.memory_space<vmem>>, vector<8x16xbf16>
    %cst = arith.constant dense<0.000000e+00> : vector<8x80xf32>
    %4 = tpu.matmul %3, %2, %cst {dimension_numbers = #tpu.dot_dimension_numbers<[1], [0], [0], [1], [0, 0, 1, 1], [], []>} : vector<8x16xbf16>, vector<16x80xbf16>, vector<8x80xf32> -> vector<8x80xf32>
    %cst_5 = arith.constant 0.000000e+00 : bf16
    %5 = vector.broadcast %cst_5 : bf16 to vector<8x11xbf16>
    %c0_6 = arith.constant 0 : index
    %c0_7 = arith.constant 0 : index
    %6 = vector.load %arg18[%c0_6, %c0_7] : memref<8x110xbf16, #tpu.memory_space<vmem>>, vector<8x11xbf16>
    tpu.vector_store %arg18[%c0_6, %c0_7], %5 {strides = array<i32>} : memref<8x110xbf16, #tpu.memory_space<vmem>>, vector<8x11xbf16>,
    %7 = vector.broadcast %0 : vector<1x80xf32> to vector<8x80xf32>
    %8 = arith.mulf %4, %7 : vector<8x80xf32>
    %9 = arith.truncf %8 : vector<8x80xf32> to vector<8x80xbf16>
    %c0_8 = arith.constant 0 : index
    %c11 = arith.constant 11 : index
    %10 = vector.load %arg18[%c0_8, %c11] : memref<8x110xbf16, #tpu.memory_space<vmem>>, vector<8x80xbf16>
    tpu.vector_store %arg18[%c0_8, %c11], %9 {strides = array<i32>} : memref<8x110xbf16, #tpu.memory_space<vmem>>, vector<8x80xbf16>,
    %cst_9 = arith.constant 0.000000e+00 : bf16
    %11 = vector.broadcast %cst_9 : bf16 to vector<8x19xbf16>
    %c0_10 = arith.constant 0 : index
    %c91 = arith.constant 91 : index
    %12 = vector.load %arg18[%c0_10, %c91] : memref<8x110xbf16, #tpu.memory_space<vmem>>, vector<8x19xbf16>
    tpu.vector_store %arg18[%c0_10, %c91], %11 {strides = array<i32>} : memref<8x110xbf16, #tpu.memory_space<vmem>>, vector<8x19xbf16>,
    %cst_11 = arith.constant 0.000000e+00 : f32
    %13 = vector.broadcast %cst_11 : f32 to vector<8x80xf32>
    %c0_12 = arith.constant 0 : index
    %c0_13 = arith.constant 0 : index
    %14 = vector.load %arg18[%c0_12, %c0_13] : memref<8x110xbf16, #tpu.memory_space<vmem>>, vector<8x80xbf16>
    %c0_14 = arith.constant 0 : index
    %c0_15 = arith.constant 0 : index
    %c0_16 = arith.constant 0 : index
    %15 = vector.load %arg4[%c0_14, %c0_15, %c0_16] : memref<9x8x8xbf16, #tpu.memory_space<vmem>>, vector<1x8x8xbf16>
    %16 = vector.shape_cast %15 : vector<1x8x8xbf16> to vector<8x8xbf16>
    %cst_17 = arith.constant dense<0.000000e+00> : vector<8x80xf32>
    %17 = tpu.matmul %16, %14, %cst_17 {dimension_numbers = #tpu.dot_dimension_numbers<[1], [0], [0], [1], [0, 0, 1, 1], [], []>} : vector<8x8xbf16>, vector<8x80xbf16>, vector<8x80xf32> -> vector<8x80xf32>
    %18 = arith.addf %13, %17 : vector<8x80xf32>
    %c0_18 = arith.constant 0 : index
    %c1 = arith.constant 1 : index
    %19 = vector.load %arg18[%c0_18, %c1] : memref<8x110xbf16, #tpu.memory_space<vmem>>, vector<8x80xbf16>
    %c1_19 = arith.constant 1 : index
    %c0_20 = arith.constant 0 : index
    %c0_21 = arith.constant 0 : index
    %20 = vector.load %arg4[%c1_19, %c0_20, %c0_21] : memref<9x8x8xbf16, #tpu.memory_space<vmem>>, vector<1x8x8xbf16>
    %21 = vector.shape_cast %20 : vector<1x8x8xbf16> to vector<8x8xbf16>
    %cst_22 = arith.constant dense<0.000000e+00> : vector<8x80xf32>
    %22 = tpu.matmul %21, %19, %cst_22 {dimension_numbers = #tpu.dot_dimension_numbers<[1], [0], [0], [1], [0, 0, 1, 1], [], []>} : vector<8x8xbf16>, vector<8x80xbf16>, vector<8x80xf32> -> vector<8x80xf32>
    %23 = arith.addf %18, %22 : vector<8x80xf32>
    %c0_23 = arith.constant 0 : index
    %c2 = arith.constant 2 : index
    %24 = vector.load %arg18[%c0_23, %c2] : memref<8x110xbf16, #tpu.memory_space<vmem>>, vector<8x80xbf16>
    %c2_24 = arith.constant 2 : index
    %c0_25 = arith.constant 0 : index
    %c0_26 = arith.constant 0 : index
    %25 = vector.load %arg4[%c2_24, %c0_25, %c0_26] : memref<9x8x8xbf16, #tpu.memory_space<vmem>>, vector<1x8x8xbf16>
    %26 = vector.shape_cast %25 : vector<1x8x8xbf16> to vector<8x8xbf16>
    %cst_27 = arith.constant dense<0.000000e+00> : vector<8x80xf32>
    %27 = tpu.matmul %26, %24, %cst_27 {dimension_numbers = #tpu.dot_dimension_numbers<[1], [0], [0], [1], [0, 0, 1, 1], [], []>} : vector<8x8xbf16>, vector<8x80xbf16>, vector<8x80xf32> -> vector<8x80xf32>
    %28 = arith.addf %23, %27 : vector<8x80xf32>
    %c0_28 = arith.constant 0 : index
    %c10 = arith.constant 10 : index
    %29 = vector.load %arg18[%c0_28, %c10] : memref<8x110xbf16, #tpu.memory_space<vmem>>, vector<8x80xbf16>
    %c3 = arith.constant 3 : index
    %c0_29 = arith.constant 0 : index
    %c0_30 = arith.constant 0 : index
    %30 = vector.load %arg4[%c3, %c0_29, %c0_30] : memref<9x8x8xbf16, #tpu.memory_space<vmem>>, vector<1x8x8xbf16>
    %31 = vector.shape_cast %30 : vector<1x8x8xbf16> to vector<8x8xbf16>
    %cst_31 = arith.constant dense<0.000000e+00> : vector<8x80xf32>
    %32 = tpu.matmul %31, %29, %cst_31 {dimension_numbers = #tpu.dot_dimension_numbers<[1], [0], [0], [1], [0, 0, 1, 1], [], []>} : vector<8x8xbf16>, vector<8x80xbf16>, vector<8x80xf32> -> vector<8x80xf32>
    %33 = arith.addf %28, %32 : vector<8x80xf32>
    %c0_32 = arith.constant 0 : index
    %c11_33 = arith.constant 11 : index
    %34 = vector.load %arg18[%c0_32, %c11_33] : memref<8x110xbf16, #tpu.memory_space<vmem>>, vector<8x80xbf16>
    %c4 = arith.constant 4 : index
    %c0_34 = arith.constant 0 : index
    %c0_35 = arith.constant 0 : index
    %35 = vector.load %arg4[%c4, %c0_34, %c0_35] : memref<9x8x8xbf16, #tpu.memory_space<vmem>>, vector<1x8x8xbf16>
    %36 = vector.shape_cast %35 : vector<1x8x8xbf16> to vector<8x8xbf16>
    %cst_36 = arith.constant dense<0.000000e+00> : vector<8x80xf32>
    %37 = tpu.matmul %36, %34, %cst_36 {dimension_numbers = #tpu.dot_dimension_numbers<[1], [0], [0], [1], [0, 0, 1, 1], [], []>} : vector<8x8xbf16>, vector<8x80xbf16>, vector<8x80xf32> -> vector<8x80xf32>
    %38 = arith.addf %33, %37 : vector<8x80xf32>
    %c0_37 = arith.constant 0 : index
    %c12 = arith.constant 12 : index
    %39 = vector.load %arg18[%c0_37, %c12] : memref<8x110xbf16, #tpu.memory_space<vmem>>, vector<8x80xbf16>
    %c5 = arith.constant 5 : index
    %c0_38 = arith.constant 0 : index
    %c0_39 = arith.constant 0 : index
    %40 = vector.load %arg4[%c5, %c0_38, %c0_39] : memref<9x8x8xbf16, #tpu.memory_space<vmem>>, vector<1x8x8xbf16>
    %41 = vector.shape_cast %40 : vector<1x8x8xbf16> to vector<8x8xbf16>
    %cst_40 = arith.constant dense<0.000000e+00> : vector<8x80xf32>
    %42 = tpu.matmul %41, %39, %cst_40 {dimension_numbers = #tpu.dot_dimension_numbers<[1], [0], [0], [1], [0, 0, 1, 1], [], []>} : vector<8x8xbf16>, vector<8x80xbf16>, vector<8x80xf32> -> vector<8x80xf32>
    %43 = arith.addf %38, %42 : vector<8x80xf32>
    %c0_41 = arith.constant 0 : index
    %c20 = arith.constant 20 : index
    %44 = vector.load %arg18[%c0_41, %c20] : memref<8x110xbf16, #tpu.memory_space<vmem>>, vector<8x80xbf16>
    %c6 = arith.constant 6 : index
    %c0_42 = arith.constant 0 : index
    %c0_43 = arith.constant 0 : index
    %45 = vector.load %arg4[%c6, %c0_42, %c0_43] : memref<9x8x8xbf16, #tpu.memory_space<vmem>>, vector<1x8x8xbf16>
    %46 = vector.shape_cast %45 : vector<1x8x8xbf16> to vector<8x8xbf16>
    %cst_44 = arith.constant dense<0.000000e+00> : vector<8x80xf32>
    %47 = tpu.matmul %46, %44, %cst_44 {dimension_numbers = #tpu.dot_dimension_numbers<[1], [0], [0], [1], [0, 0, 1, 1], [], []>} : vector<8x8xbf16>, vector<8x80xbf16>, vector<8x80xf32> -> vector<8x80xf32>
    %48 = arith.addf %43, %47 : vector<8x80xf32>
    %c0_45 = arith.constant 0 : index
    %c21 = arith.constant 21 : index
    %49 = vector.load %arg18[%c0_45, %c21] : memref<8x110xbf16, #tpu.memory_space<vmem>>, vector<8x80xbf16>
    %c7 = arith.constant 7 : index
    %c0_46 = arith.constant 0 : index
    %c0_47 = arith.constant 0 : index
    %50 = vector.load %arg4[%c7, %c0_46, %c0_47] : memref<9x8x8xbf16, #tpu.memory_space<vmem>>, vector<1x8x8xbf16>
    %51 = vector.shape_cast %50 : vector<1x8x8xbf16> to vector<8x8xbf16>
    %cst_48 = arith.constant dense<0.000000e+00> : vector<8x80xf32>
    %52 = tpu.matmul %51, %49, %cst_48 {dimension_numbers = #tpu.dot_dimension_numbers<[1], [0], [0], [1], [0, 0, 1, 1], [], []>} : vector<8x8xbf16>, vector<8x80xbf16>, vector<8x80xf32> -> vector<8x80xf32>
    %53 = arith.addf %48, %52 : vector<8x80xf32>
    %c0_49 = arith.constant 0 : index
    %c22 = arith.constant 22 : index
    %54 = vector.load %arg18[%c0_49, %c22] : memref<8x110xbf16, #tpu.memory_space<vmem>>, vector<8x80xbf16>
    %c8 = arith.constant 8 : index
    %c0_50 = arith.constant 0 : index
    %c0_51 = arith.constant 0 : index
    %55 = vector.load %arg4[%c8, %c0_50, %c0_51] : memref<9x8x8xbf16, #tpu.memory_space<vmem>>, vector<1x8x8xbf16>
    %56 = vector.shape_cast %55 : vector<1x8x8xbf16> to vector<8x8xbf16>
    %cst_52 = arith.constant dense<0.000000e+00> : vector<8x80xf32>
    %57 = tpu.matmul %56, %54, %cst_52 {dimension_numbers = #tpu.dot_dimension_numbers<[1], [0], [0], [1], [0, 0, 1, 1], [], []>} : vector<8x8xbf16>, vector<8x80xbf16>, vector<8x80xf32> -> vector<8x80xf32>
    %58 = arith.addf %53, %57 : vector<8x80xf32>
    %59 = vector.broadcast %0 : vector<1x80xf32> to vector<8x80xf32>
    %60 = arith.mulf %58, %59 : vector<8x80xf32>
    %cst_53 = arith.constant dense<0.000000e+00> : vector<8xf32>
    %61 = vector.multi_reduction <add>, %60, %cst_53 [1] : vector<8x80xf32> to vector<8xf32>
    %62 = vector.shape_cast %61 : vector<8xf32> to vector<8x1xf32>
    %cst_54 = arith.constant 1.562500e-02 : f32
    %63 = vector.broadcast %cst_54 : f32 to vector<8x1xf32>
    %64 = arith.mulf %62, %63 : vector<8x1xf32>
    %65 = vector.broadcast %64 : vector<8x1xf32> to vector<8x80xf32>
    %66 = arith.subf %58, %65 : vector<8x80xf32>
    %67 = arith.mulf %66, %66 : vector<8x80xf32>
    %68 = vector.broadcast %0 : vector<1x80xf32> to vector<8x80xf32>
    %69 = arith.mulf %67, %68 : vector<8x80xf32>
    %cst_55 = arith.constant dense<0.000000e+00> : vector<8xf32>
    %70 = vector.multi_reduction <add>, %69, %cst_55 [1] : vector<8x80xf32> to vector<8xf32>
    %71 = vector.shape_cast %70 : vector<8xf32> to vector<8x1xf32>
    %cst_56 = arith.constant 1.562500e-02 : f32
    %72 = vector.broadcast %cst_56 : f32 to vector<8x1xf32>
    %73 = arith.mulf %71, %72 : vector<8x1xf32>
    %cst_57 = arith.constant 9.99999974E-6 : f32
    %74 = vector.broadcast %cst_57 : f32 to vector<8x1xf32>
    %75 = arith.addf %73, %74 : vector<8x1xf32>
    %76 = math.rsqrt %75 : vector<8x1xf32>
    %77 = vector.broadcast %76 : vector<8x1xf32> to vector<8x80xf32>
    %78 = arith.mulf %66, %77 : vector<8x80xf32>
    %c0_58 = arith.constant 0 : index
    %c0_59 = arith.constant 0 : index
    %79 = vector.load %arg5[%c0_58, %c0_59] : memref<8x1xf32, #tpu.memory_space<vmem>>, vector<8x1xf32>
    %80 = vector.broadcast %79 : vector<8x1xf32> to vector<8x80xf32>
    %81 = arith.mulf %78, %80 : vector<8x80xf32>
    %c0_60 = arith.constant 0 : index
    %c0_61 = arith.constant 0 : index
    %82 = vector.load %arg6[%c0_60, %c0_61] : memref<8x1xf32, #tpu.memory_space<vmem>>, vector<8x1xf32>
    %83 = vector.broadcast %82 : vector<8x1xf32> to vector<8x80xf32>
    %84 = arith.addf %81, %83 : vector<8x80xf32>
    %cst_62 = arith.constant 0.000000e+00 : f32
    %85 = vector.broadcast %cst_62 : f32 to vector<8x80xf32>
    %86 = arith.maximumf %84, %85 : vector<8x80xf32>
    %87 = arith.addf %86, %4 : vector<8x80xf32>
    %cst_63 = arith.constant 0.000000e+00 : bf16
    %88 = vector.broadcast %cst_63 : bf16 to vector<8x11xbf16>
    %c0_64 = arith.constant 0 : index
    %c0_65 = arith.constant 0 : index
    %89 = vector.load %arg18[%c0_64, %c0_65] : memref<8x110xbf16, #tpu.memory_space<vmem>>, vector<8x11xbf16>
    tpu.vector_store %arg18[%c0_64, %c0_65], %88 {strides = array<i32>} : memref<8x110xbf16, #tpu.memory_space<vmem>>, vector<8x11xbf16>,
    %90 = vector.broadcast %0 : vector<1x80xf32> to vector<8x80xf32>
    %91 = arith.mulf %87, %90 : vector<8x80xf32>
    %92 = arith.truncf %91 : vector<8x80xf32> to vector<8x80xbf16>
    %c0_66 = arith.constant 0 : index
    %c11_67 = arith.constant 11 : index
    %93 = vector.load %arg18[%c0_66, %c11_67] : memref<8x110xbf16, #tpu.memory_space<vmem>>, vector<8x80xbf16>
    tpu.vector_store %arg18[%c0_66, %c11_67], %92 {strides = array<i32>} : memref<8x110xbf16, #tpu.memory_space<vmem>>, vector<8x80xbf16>,
    %cst_68 = arith.constant 0.000000e+00 : bf16
    %94 = vector.broadcast %cst_68 : bf16 to vector<8x19xbf16>
    %c0_69 = arith.constant 0 : index
    %c91_70 = arith.constant 91 : index
    %95 = vector.load %arg18[%c0_69, %c91_70] : memref<8x110xbf16, #tpu.memory_space<vmem>>, vector<8x19xbf16>
    tpu.vector_store %arg18[%c0_69, %c91_70], %94 {strides = array<i32>} : memref<8x110xbf16, #tpu.memory_space<vmem>>, vector<8x19xbf16>,
    %cst_71 = arith.constant 0.000000e+00 : f32
    %96 = vector.broadcast %cst_71 : f32 to vector<8x80xf32>
    %c0_72 = arith.constant 0 : index
    %c0_73 = arith.constant 0 : index
    %97 = vector.load %arg18[%c0_72, %c0_73] : memref<8x110xbf16, #tpu.memory_space<vmem>>, vector<8x80xbf16>
    %c0_74 = arith.constant 0 : index
    %c0_75 = arith.constant 0 : index
    %c0_76 = arith.constant 0 : index
    %98 = vector.load %arg7[%c0_74, %c0_75, %c0_76] : memref<9x8x8xbf16, #tpu.memory_space<vmem>>, vector<1x8x8xbf16>
    %99 = vector.shape_cast %98 : vector<1x8x8xbf16> to vector<8x8xbf16>
    %cst_77 = arith.constant dense<0.000000e+00> : vector<8x80xf32>
    %100 = tpu.matmul %99, %97, %cst_77 {dimension_numbers = #tpu.dot_dimension_numbers<[1], [0], [0], [1], [0, 0, 1, 1], [], []>} : vector<8x8xbf16>, vector<8x80xbf16>, vector<8x80xf32> -> vector<8x80xf32>
    %101 = arith.addf %96, %100 : vector<8x80xf32>
    %c0_78 = arith.constant 0 : index
    %c1_79 = arith.constant 1 : index
    %102 = vector.load %arg18[%c0_78, %c1_79] : memref<8x110xbf16, #tpu.memory_space<vmem>>, vector<8x80xbf16>
    %c1_80 = arith.constant 1 : index
    %c0_81 = arith.constant 0 : index
    %c0_82 = arith.constant 0 : index
    %103 = vector.load %arg7[%c1_80, %c0_81, %c0_82] : memref<9x8x8xbf16, #tpu.memory_space<vmem>>, vector<1x8x8xbf16>
    %104 = vector.shape_cast %103 : vector<1x8x8xbf16> to vector<8x8xbf16>
    %cst_83 = arith.constant dense<0.000000e+00> : vector<8x80xf32>
    %105 = tpu.matmul %104, %102, %cst_83 {dimension_numbers = #tpu.dot_dimension_numbers<[1], [0], [0], [1], [0, 0, 1, 1], [], []>} : vector<8x8xbf16>, vector<8x80xbf16>, vector<8x80xf32> -> vector<8x80xf32>
    %106 = arith.addf %101, %105 : vector<8x80xf32>
    %c0_84 = arith.constant 0 : index
    %c2_85 = arith.constant 2 : index
    %107 = vector.load %arg18[%c0_84, %c2_85] : memref<8x110xbf16, #tpu.memory_space<vmem>>, vector<8x80xbf16>
    %c2_86 = arith.constant 2 : index
    %c0_87 = arith.constant 0 : index
    %c0_88 = arith.constant 0 : index
    %108 = vector.load %arg7[%c2_86, %c0_87, %c0_88] : memref<9x8x8xbf16, #tpu.memory_space<vmem>>, vector<1x8x8xbf16>
    %109 = vector.shape_cast %108 : vector<1x8x8xbf16> to vector<8x8xbf16>
    %cst_89 = arith.constant dense<0.000000e+00> : vector<8x80xf32>
    %110 = tpu.matmul %109, %107, %cst_89 {dimension_numbers = #tpu.dot_dimension_numbers<[1], [0], [0], [1], [0, 0, 1, 1], [], []>} : vector<8x8xbf16>, vector<8x80xbf16>, vector<8x80xf32> -> vector<8x80xf32>
    %111 = arith.addf %106, %110 : vector<8x80xf32>
    %c0_90 = arith.constant 0 : index
    %c10_91 = arith.constant 10 : index
    %112 = vector.load %arg18[%c0_90, %c10_91] : memref<8x110xbf16, #tpu.memory_space<vmem>>, vector<8x80xbf16>
    %c3_92 = arith.constant 3 : index
    %c0_93 = arith.constant 0 : index
    %c0_94 = arith.constant 0 : index
    %113 = vector.load %arg7[%c3_92, %c0_93, %c0_94] : memref<9x8x8xbf16, #tpu.memory_space<vmem>>, vector<1x8x8xbf16>
    %114 = vector.shape_cast %113 : vector<1x8x8xbf16> to vector<8x8xbf16>
    %cst_95 = arith.constant dense<0.000000e+00> : vector<8x80xf32>
    %115 = tpu.matmul %114, %112, %cst_95 {dimension_numbers = #tpu.dot_dimension_numbers<[1], [0], [0], [1], [0, 0, 1, 1], [], []>} : vector<8x8xbf16>, vector<8x80xbf16>, vector<8x80xf32> -> vector<8x80xf32>
    %116 = arith.addf %111, %115 : vector<8x80xf32>
    %c0_96 = arith.constant 0 : index
    %c11_97 = arith.constant 11 : index
    %117 = vector.load %arg18[%c0_96, %c11_97] : memref<8x110xbf16, #tpu.memory_space<vmem>>, vector<8x80xbf16>
    %c4_98 = arith.constant 4 : index
    %c0_99 = arith.constant 0 : index
    %c0_100 = arith.constant 0 : index
    %118 = vector.load %arg7[%c4_98, %c0_99, %c0_100] : memref<9x8x8xbf16, #tpu.memory_space<vmem>>, vector<1x8x8xbf16>
    %119 = vector.shape_cast %118 : vector<1x8x8xbf16> to vector<8x8xbf16>
    %cst_101 = arith.constant dense<0.000000e+00> : vector<8x80xf32>
    %120 = tpu.matmul %119, %117, %cst_101 {dimension_numbers = #tpu.dot_dimension_numbers<[1], [0], [0], [1], [0, 0, 1, 1], [], []>} : vector<8x8xbf16>, vector<8x80xbf16>, vector<8x80xf32> -> vector<8x80xf32>
    %121 = arith.addf %116, %120 : vector<8x80xf32>
    %c0_102 = arith.constant 0 : index
    %c12_103 = arith.constant 12 : index
    %122 = vector.load %arg18[%c0_102, %c12_103] : memref<8x110xbf16, #tpu.memory_space<vmem>>, vector<8x80xbf16>
    %c5_104 = arith.constant 5 : index
    %c0_105 = arith.constant 0 : index
    %c0_106 = arith.constant 0 : index
    %123 = vector.load %arg7[%c5_104, %c0_105, %c0_106] : memref<9x8x8xbf16, #tpu.memory_space<vmem>>, vector<1x8x8xbf16>
    %124 = vector.shape_cast %123 : vector<1x8x8xbf16> to vector<8x8xbf16>
    %cst_107 = arith.constant dense<0.000000e+00> : vector<8x80xf32>
    %125 = tpu.matmul %124, %122, %cst_107 {dimension_numbers = #tpu.dot_dimension_numbers<[1], [0], [0], [1], [0, 0, 1, 1], [], []>} : vector<8x8xbf16>, vector<8x80xbf16>, vector<8x80xf32> -> vector<8x80xf32>
    %126 = arith.addf %121, %125 : vector<8x80xf32>
    %c0_108 = arith.constant 0 : index
    %c20_109 = arith.constant 20 : index
    %127 = vector.load %arg18[%c0_108, %c20_109] : memref<8x110xbf16, #tpu.memory_space<vmem>>, vector<8x80xbf16>
    %c6_110 = arith.constant 6 : index
    %c0_111 = arith.constant 0 : index
    %c0_112 = arith.constant 0 : index
    %128 = vector.load %arg7[%c6_110, %c0_111, %c0_112] : memref<9x8x8xbf16, #tpu.memory_space<vmem>>, vector<1x8x8xbf16>
    %129 = vector.shape_cast %128 : vector<1x8x8xbf16> to vector<8x8xbf16>
    %cst_113 = arith.constant dense<0.000000e+00> : vector<8x80xf32>
    %130 = tpu.matmul %129, %127, %cst_113 {dimension_numbers = #tpu.dot_dimension_numbers<[1], [0], [0], [1], [0, 0, 1, 1], [], []>} : vector<8x8xbf16>, vector<8x80xbf16>, vector<8x80xf32> -> vector<8x80xf32>
    %131 = arith.addf %126, %130 : vector<8x80xf32>
    %c0_114 = arith.constant 0 : index
    %c21_115 = arith.constant 21 : index
    %132 = vector.load %arg18[%c0_114, %c21_115] : memref<8x110xbf16, #tpu.memory_space<vmem>>, vector<8x80xbf16>
    %c7_116 = arith.constant 7 : index
    %c0_117 = arith.constant 0 : index
    %c0_118 = arith.constant 0 : index
    %133 = vector.load %arg7[%c7_116, %c0_117, %c0_118] : memref<9x8x8xbf16, #tpu.memory_space<vmem>>, vector<1x8x8xbf16>
    %134 = vector.shape_cast %133 : vector<1x8x8xbf16> to vector<8x8xbf16>
    %cst_119 = arith.constant dense<0.000000e+00> : vector<8x80xf32>
    %135 = tpu.matmul %134, %132, %cst_119 {dimension_numbers = #tpu.dot_dimension_numbers<[1], [0], [0], [1], [0, 0, 1, 1], [], []>} : vector<8x8xbf16>, vector<8x80xbf16>, vector<8x80xf32> -> vector<8x80xf32>
    %136 = arith.addf %131, %135 : vector<8x80xf32>
    %c0_120 = arith.constant 0 : index
    %c22_121 = arith.constant 22 : index
    %137 = vector.load %arg18[%c0_120, %c22_121] : memref<8x110xbf16, #tpu.memory_space<vmem>>, vector<8x80xbf16>
    %c8_122 = arith.constant 8 : index
    %c0_123 = arith.constant 0 : index
    %c0_124 = arith.constant 0 : index
    %138 = vector.load %arg7[%c8_122, %c0_123, %c0_124] : memref<9x8x8xbf16, #tpu.memory_space<vmem>>, vector<1x8x8xbf16>
    %139 = vector.shape_cast %138 : vector<1x8x8xbf16> to vector<8x8xbf16>
    %cst_125 = arith.constant dense<0.000000e+00> : vector<8x80xf32>
    %140 = tpu.matmul %139, %137, %cst_125 {dimension_numbers = #tpu.dot_dimension_numbers<[1], [0], [0], [1], [0, 0, 1, 1], [], []>} : vector<8x8xbf16>, vector<8x80xbf16>, vector<8x80xf32> -> vector<8x80xf32>
    %141 = arith.addf %136, %140 : vector<8x80xf32>
    %142 = vector.broadcast %0 : vector<1x80xf32> to vector<8x80xf32>
    %143 = arith.mulf %141, %142 : vector<8x80xf32>
    %cst_126 = arith.constant dense<0.000000e+00> : vector<8xf32>
    %144 = vector.multi_reduction <add>, %143, %cst_126 [1] : vector<8x80xf32> to vector<8xf32>
    %145 = vector.shape_cast %144 : vector<8xf32> to vector<8x1xf32>
    %cst_127 = arith.constant 1.562500e-02 : f32
    %146 = vector.broadcast %cst_127 : f32 to vector<8x1xf32>
    %147 = arith.mulf %145, %146 : vector<8x1xf32>
    %148 = vector.broadcast %147 : vector<8x1xf32> to vector<8x80xf32>
    %149 = arith.subf %141, %148 : vector<8x80xf32>
    %150 = arith.mulf %149, %149 : vector<8x80xf32>
    %151 = vector.broadcast %0 : vector<1x80xf32> to vector<8x80xf32>
    %152 = arith.mulf %150, %151 : vector<8x80xf32>
    %cst_128 = arith.constant dense<0.000000e+00> : vector<8xf32>
    %153 = vector.multi_reduction <add>, %152, %cst_128 [1] : vector<8x80xf32> to vector<8xf32>
    %154 = vector.shape_cast %153 : vector<8xf32> to vector<8x1xf32>
    %cst_129 = arith.constant 1.562500e-02 : f32
    %155 = vector.broadcast %cst_129 : f32 to vector<8x1xf32>
    %156 = arith.mulf %154, %155 : vector<8x1xf32>
    %cst_130 = arith.constant 9.99999974E-6 : f32
    %157 = vector.broadcast %cst_130 : f32 to vector<8x1xf32>
    %158 = arith.addf %156, %157 : vector<8x1xf32>
    %159 = math.rsqrt %158 : vector<8x1xf32>
    %160 = vector.broadcast %159 : vector<8x1xf32> to vector<8x80xf32>
    %161 = arith.mulf %149, %160 : vector<8x80xf32>
    %c0_131 = arith.constant 0 : index
    %c0_132 = arith.constant 0 : index
    %162 = vector.load %arg8[%c0_131, %c0_132] : memref<8x1xf32, #tpu.memory_space<vmem>>, vector<8x1xf32>
    %163 = vector.broadcast %162 : vector<8x1xf32> to vector<8x80xf32>
    %164 = arith.mulf %161, %163 : vector<8x80xf32>
    %c0_133 = arith.constant 0 : index
    %c0_134 = arith.constant 0 : index
    %165 = vector.load %arg9[%c0_133, %c0_134] : memref<8x1xf32, #tpu.memory_space<vmem>>, vector<8x1xf32>
    %166 = vector.broadcast %165 : vector<8x1xf32> to vector<8x80xf32>
    %167 = arith.addf %164, %166 : vector<8x80xf32>
    %cst_135 = arith.constant 0.000000e+00 : f32
    %168 = vector.broadcast %cst_135 : f32 to vector<8x80xf32>
    %169 = arith.maximumf %167, %168 : vector<8x80xf32>
    %170 = arith.addf %169, %87 : vector<8x80xf32>
    %c0_136 = arith.constant 0 : index
    %c0_137 = arith.constant 0 : index
    %171 = vector.load %arg10[%c0_136, %c0_137] : memref<16x8xbf16, #tpu.memory_space<vmem>>, vector<16x8xbf16>
    %172 = arith.truncf %170 : vector<8x80xf32> to vector<8x80xbf16>
    %cst_138 = arith.constant dense<0.000000e+00> : vector<16x80xf32>
    %173 = tpu.matmul %171, %172, %cst_138 {dimension_numbers = #tpu.dot_dimension_numbers<[1], [0], [0], [1], [0, 0, 1, 1], [], []>} : vector<16x8xbf16>, vector<8x80xbf16>, vector<16x80xf32> -> vector<16x80xf32>
    %cst_139 = arith.constant 0.000000e+00 : f32
    %174 = vector.broadcast %cst_139 : f32 to vector<16x80xf32>
    %c0_140 = arith.constant 0 : index
    %c0_141 = arith.constant 0 : index
    %c0_142 = arith.constant 0 : index
    %175 = vector.load %arg1[%c0_140, %c0_141, %c0_142] : memref<1x64x100xbf16, #tpu.memory_space<vmem>>, vector<1x16x80xbf16>
    %176 = vector.shape_cast %175 : vector<1x16x80xbf16> to vector<16x80xbf16>
    %c0_143 = arith.constant 0 : index
    %c0_144 = arith.constant 0 : index
    %c0_145 = arith.constant 0 : index
    %177 = vector.load %arg11[%c0_143, %c0_144, %c0_145] : memref<9x16x16xbf16, #tpu.memory_space<vmem>>, vector<1x16x16xbf16>
    %178 = vector.shape_cast %177 : vector<1x16x16xbf16> to vector<16x16xbf16>
    %cst_146 = arith.constant dense<0.000000e+00> : vector<16x80xf32>
    %179 = tpu.matmul %178, %176, %cst_146 {dimension_numbers = #tpu.dot_dimension_numbers<[1], [0], [0], [1], [0, 0, 1, 1], [], []>} : vector<16x16xbf16>, vector<16x80xbf16>, vector<16x80xf32> -> vector<16x80xf32>
    %180 = arith.addf %174, %179 : vector<16x80xf32>
    %c0_147 = arith.constant 0 : index
    %c16 = arith.constant 16 : index
    %c0_148 = arith.constant 0 : index
    %181 = vector.load %arg1[%c0_147, %c16, %c0_148] : memref<1x64x100xbf16, #tpu.memory_space<vmem>>, vector<1x16x80xbf16>
    %182 = vector.shape_cast %181 : vector<1x16x80xbf16> to vector<16x80xbf16>
    %c1_149 = arith.constant 1 : index
    %c0_150 = arith.constant 0 : index
    %c0_151 = arith.constant 0 : index
    %183 = vector.load %arg11[%c1_149, %c0_150, %c0_151] : memref<9x16x16xbf16, #tpu.memory_space<vmem>>, vector<1x16x16xbf16>
    %184 = vector.shape_cast %183 : vector<1x16x16xbf16> to vector<16x16xbf16>
    %cst_152 = arith.constant dense<0.000000e+00> : vector<16x80xf32>
    %185 = tpu.matmul %184, %182, %cst_152 {dimension_numbers = #tpu.dot_dimension_numbers<[1], [0], [0], [1], [0, 0, 1, 1], [], []>} : vector<16x16xbf16>, vector<16x80xbf16>, vector<16x80xf32> -> vector<16x80xf32>
    %186 = arith.addf %180, %185 : vector<16x80xf32>
    %c0_153 = arith.constant 0 : index
    %c0_154 = arith.constant 0 : index
    %c1_155 = arith.constant 1 : index
    %187 = vector.load %arg1[%c0_153, %c0_154, %c1_155] : memref<1x64x100xbf16, #tpu.memory_space<vmem>>, vector<1x16x80xbf16>
    %188 = vector.shape_cast %187 : vector<1x16x80xbf16> to vector<16x80xbf16>
    %c2_156 = arith.constant 2 : index
    %c0_157 = arith.constant 0 : index
    %c0_158 = arith.constant 0 : index
    %189 = vector.load %arg11[%c2_156, %c0_157, %c0_158] : memref<9x16x16xbf16, #tpu.memory_space<vmem>>, vector<1x16x16xbf16>
    %190 = vector.shape_cast %189 : vector<1x16x16xbf16> to vector<16x16xbf16>
    %cst_159 = arith.constant dense<0.000000e+00> : vector<16x80xf32>
    %191 = tpu.matmul %190, %188, %cst_159 {dimension_numbers = #tpu.dot_dimension_numbers<[1], [0], [0], [1], [0, 0, 1, 1], [], []>} : vector<16x16xbf16>, vector<16x80xbf16>, vector<16x80xf32> -> vector<16x80xf32>
    %192 = arith.addf %186, %191 : vector<16x80xf32>
    %c0_160 = arith.constant 0 : index
    %c32 = arith.constant 32 : index
    %c0_161 = arith.constant 0 : index
    %193 = vector.load %arg1[%c0_160, %c32, %c0_161] : memref<1x64x100xbf16, #tpu.memory_space<vmem>>, vector<1x16x80xbf16>
    %194 = vector.shape_cast %193 : vector<1x16x80xbf16> to vector<16x80xbf16>
    %c3_162 = arith.constant 3 : index
    %c0_163 = arith.constant 0 : index
    %c0_164 = arith.constant 0 : index
    %195 = vector.load %arg11[%c3_162, %c0_163, %c0_164] : memref<9x16x16xbf16, #tpu.memory_space<vmem>>, vector<1x16x16xbf16>
    %196 = vector.shape_cast %195 : vector<1x16x16xbf16> to vector<16x16xbf16>
    %cst_165 = arith.constant dense<0.000000e+00> : vector<16x80xf32>
    %197 = tpu.matmul %196, %194, %cst_165 {dimension_numbers = #tpu.dot_dimension_numbers<[1], [0], [0], [1], [0, 0, 1, 1], [], []>} : vector<16x16xbf16>, vector<16x80xbf16>, vector<16x80xf32> -> vector<16x80xf32>
    %198 = arith.addf %192, %197 : vector<16x80xf32>
    %c0_166 = arith.constant 0 : index
    %c48_167 = arith.constant 48 : index
    %c0_168 = arith.constant 0 : index
    %199 = vector.load %arg1[%c0_166, %c48_167, %c0_168] : memref<1x64x100xbf16, #tpu.memory_space<vmem>>, vector<1x16x80xbf16>
    %200 = vector.shape_cast %199 : vector<1x16x80xbf16> to vector<16x80xbf16>
    %c4_169 = arith.constant 4 : index
    %c0_170 = arith.constant 0 : index
    %c0_171 = arith.constant 0 : index
    %201 = vector.load %arg11[%c4_169, %c0_170, %c0_171] : memref<9x16x16xbf16, #tpu.memory_space<vmem>>, vector<1x16x16xbf16>
    %202 = vector.shape_cast %201 : vector<1x16x16xbf16> to vector<16x16xbf16>
    %cst_172 = arith.constant dense<0.000000e+00> : vector<16x80xf32>
    %203 = tpu.matmul %202, %200, %cst_172 {dimension_numbers = #tpu.dot_dimension_numbers<[1], [0], [0], [1], [0, 0, 1, 1], [], []>} : vector<16x16xbf16>, vector<16x80xbf16>, vector<16x80xf32> -> vector<16x80xf32>
    %204 = arith.addf %198, %203 : vector<16x80xf32>
    %c0_173 = arith.constant 0 : index
    %c32_174 = arith.constant 32 : index
    %c1_175 = arith.constant 1 : index
    %205 = vector.load %arg1[%c0_173, %c32_174, %c1_175] : memref<1x64x100xbf16, #tpu.memory_space<vmem>>, vector<1x16x80xbf16>
    %206 = vector.shape_cast %205 : vector<1x16x80xbf16> to vector<16x80xbf16>
    %c5_176 = arith.constant 5 : index
    %c0_177 = arith.constant 0 : index
    %c0_178 = arith.constant 0 : index
    %207 = vector.load %arg11[%c5_176, %c0_177, %c0_178] : memref<9x16x16xbf16, #tpu.memory_space<vmem>>, vector<1x16x16xbf16>
    %208 = vector.shape_cast %207 : vector<1x16x16xbf16> to vector<16x16xbf16>
    %cst_179 = arith.constant dense<0.000000e+00> : vector<16x80xf32>
    %209 = tpu.matmul %208, %206, %cst_179 {dimension_numbers = #tpu.dot_dimension_numbers<[1], [0], [0], [1], [0, 0, 1, 1], [], []>} : vector<16x16xbf16>, vector<16x80xbf16>, vector<16x80xf32> -> vector<16x80xf32>
    %210 = arith.addf %204, %209 : vector<16x80xf32>
    %c0_180 = arith.constant 0 : index
    %c0_181 = arith.constant 0 : index
    %c10_182 = arith.constant 10 : index
    %211 = vector.load %arg1[%c0_180, %c0_181, %c10_182] : memref<1x64x100xbf16, #tpu.memory_space<vmem>>, vector<1x16x80xbf16>
    %212 = vector.shape_cast %211 : vector<1x16x80xbf16> to vector<16x80xbf16>
    %c6_183 = arith.constant 6 : index
    %c0_184 = arith.constant 0 : index
    %c0_185 = arith.constant 0 : index
    %213 = vector.load %arg11[%c6_183, %c0_184, %c0_185] : memref<9x16x16xbf16, #tpu.memory_space<vmem>>, vector<1x16x16xbf16>
    %214 = vector.shape_cast %213 : vector<1x16x16xbf16> to vector<16x16xbf16>
    %cst_186 = arith.constant dense<0.000000e+00> : vector<16x80xf32>
    %215 = tpu.matmul %214, %212, %cst_186 {dimension_numbers = #tpu.dot_dimension_numbers<[1], [0], [0], [1], [0, 0, 1, 1], [], []>} : vector<16x16xbf16>, vector<16x80xbf16>, vector<16x80xf32> -> vector<16x80xf32>
    %216 = arith.addf %210, %215 : vector<16x80xf32>
    %c0_187 = arith.constant 0 : index
    %c16_188 = arith.constant 16 : index
    %c10_189 = arith.constant 10 : index
    %217 = vector.load %arg1[%c0_187, %c16_188, %c10_189] : memref<1x64x100xbf16, #tpu.memory_space<vmem>>, vector<1x16x80xbf16>
    %218 = vector.shape_cast %217 : vector<1x16x80xbf16> to vector<16x80xbf16>
    %c7_190 = arith.constant 7 : index
    %c0_191 = arith.constant 0 : index
    %c0_192 = arith.constant 0 : index
    %219 = vector.load %arg11[%c7_190, %c0_191, %c0_192] : memref<9x16x16xbf16, #tpu.memory_space<vmem>>, vector<1x16x16xbf16>
    %220 = vector.shape_cast %219 : vector<1x16x16xbf16> to vector<16x16xbf16>
    %cst_193 = arith.constant dense<0.000000e+00> : vector<16x80xf32>
    %221 = tpu.matmul %220, %218, %cst_193 {dimension_numbers = #tpu.dot_dimension_numbers<[1], [0], [0], [1], [0, 0, 1, 1], [], []>} : vector<16x16xbf16>, vector<16x80xbf16>, vector<16x80xf32> -> vector<16x80xf32>
    %222 = arith.addf %216, %221 : vector<16x80xf32>
    %c0_194 = arith.constant 0 : index
    %c0_195 = arith.constant 0 : index
    %c11_196 = arith.constant 11 : index
    %223 = vector.load %arg1[%c0_194, %c0_195, %c11_196] : memref<1x64x100xbf16, #tpu.memory_space<vmem>>, vector<1x16x80xbf16>
    %224 = vector.shape_cast %223 : vector<1x16x80xbf16> to vector<16x80xbf16>
    %c8_197 = arith.constant 8 : index
    %c0_198 = arith.constant 0 : index
    %c0_199 = arith.constant 0 : index
    %225 = vector.load %arg11[%c8_197, %c0_198, %c0_199] : memref<9x16x16xbf16, #tpu.memory_space<vmem>>, vector<1x16x16xbf16>
    %226 = vector.shape_cast %225 : vector<1x16x16xbf16> to vector<16x16xbf16>
    %cst_200 = arith.constant dense<0.000000e+00> : vector<16x80xf32>
    %227 = tpu.matmul %226, %224, %cst_200 {dimension_numbers = #tpu.dot_dimension_numbers<[1], [0], [0], [1], [0, 0, 1, 1], [], []>} : vector<16x16xbf16>, vector<16x80xbf16>, vector<16x80xf32> -> vector<16x80xf32>
    %228 = arith.addf %222, %227 : vector<16x80xf32>
    %229 = vector.broadcast %0 : vector<1x80xf32> to vector<16x80xf32>
    %230 = arith.mulf %228, %229 : vector<16x80xf32>
    %cst_201 = arith.constant dense<0.000000e+00> : vector<16xf32>
    %231 = vector.multi_reduction <add>, %230, %cst_201 [1] : vector<16x80xf32> to vector<16xf32>
    %232 = vector.shape_cast %231 : vector<16xf32> to vector<16x1xf32>
    %cst_202 = arith.constant 1.562500e-02 : f32
    %233 = vector.broadcast %cst_202 : f32 to vector<16x1xf32>
    %234 = arith.mulf %232, %233 : vector<16x1xf32>
    %235 = vector.broadcast %234 : vector<16x1xf32> to vector<16x80xf32>
    %236 = arith.subf %228, %235 : vector<16x80xf32>
    %237 = arith.mulf %236, %236 : vector<16x80xf32>
    %238 = vector.broadcast %0 : vector<1x80xf32> to vector<16x80xf32>
    %239 = arith.mulf %237, %238 : vector<16x80xf32>
    %cst_203 = arith.constant dense<0.000000e+00> : vector<16xf32>
    %240 = vector.multi_reduction <add>, %239, %cst_203 [1] : vector<16x80xf32> to vector<16xf32>
    %241 = vector.shape_cast %240 : vector<16xf32> to vector<16x1xf32>
    %cst_204 = arith.constant 1.562500e-02 : f32
    %242 = vector.broadcast %cst_204 : f32 to vector<16x1xf32>
    %243 = arith.mulf %241, %242 : vector<16x1xf32>
    %cst_205 = arith.constant 9.99999974E-6 : f32
    %244 = vector.broadcast %cst_205 : f32 to vector<16x1xf32>
    %245 = arith.addf %243, %244 : vector<16x1xf32>
    %246 = math.rsqrt %245 : vector<16x1xf32>
    %247 = vector.broadcast %246 : vector<16x1xf32> to vector<16x80xf32>
    %248 = arith.mulf %236, %247 : vector<16x80xf32>
    %c0_206 = arith.constant 0 : index
    %c0_207 = arith.constant 0 : index
    %249 = vector.load %arg12[%c0_206, %c0_207] : memref<16x1xf32, #tpu.memory_space<vmem>>, vector<16x1xf32>
    %250 = vector.broadcast %249 : vector<16x1xf32> to vector<16x80xf32>
    %251 = arith.mulf %248, %250 : vector<16x80xf32>
    %c0_208 = arith.constant 0 : index
    %c0_209 = arith.constant 0 : index
    %252 = vector.load %arg13[%c0_208, %c0_209] : memref<16x1xf32, #tpu.memory_space<vmem>>, vector<16x1xf32>
    %253 = vector.broadcast %252 : vector<16x1xf32> to vector<16x80xf32>
    %254 = arith.addf %251, %253 : vector<16x80xf32>
    %cst_210 = arith.constant 0.000000e+00 : f32
    %255 = vector.broadcast %cst_210 : f32 to vector<16x80xf32>
    %256 = arith.maximumf %254, %255 : vector<16x80xf32>
    %cst_211 = arith.constant 0.000000e+00 : bf16
    %257 = vector.broadcast %cst_211 : bf16 to vector<16x11xbf16>
    %c0_212 = arith.constant 0 : index
    %c0_213 = arith.constant 0 : index
    %258 = vector.load %arg19[%c0_212, %c0_213] : memref<16x110xbf16, #tpu.memory_space<vmem>>, vector<16x11xbf16>
    tpu.vector_store %arg19[%c0_212, %c0_213], %257 {strides = array<i32>} : memref<16x110xbf16, #tpu.memory_space<vmem>>, vector<16x11xbf16>,
    %259 = vector.broadcast %0 : vector<1x80xf32> to vector<16x80xf32>
    %260 = arith.mulf %256, %259 : vector<16x80xf32>
    %261 = arith.truncf %260 : vector<16x80xf32> to vector<16x80xbf16>
    %c0_214 = arith.constant 0 : index
    %c11_215 = arith.constant 11 : index
    %262 = vector.load %arg19[%c0_214, %c11_215] : memref<16x110xbf16, #tpu.memory_space<vmem>>, vector<16x80xbf16>
    tpu.vector_store %arg19[%c0_214, %c11_215], %261 {strides = array<i32>} : memref<16x110xbf16, #tpu.memory_space<vmem>>, vector<16x80xbf16>,
    %cst_216 = arith.constant 0.000000e+00 : bf16
    %263 = vector.broadcast %cst_216 : bf16 to vector<16x19xbf16>
    %c0_217 = arith.constant 0 : index
    %c91_218 = arith.constant 91 : index
    %264 = vector.load %arg19[%c0_217, %c91_218] : memref<16x110xbf16, #tpu.memory_space<vmem>>, vector<16x19xbf16>
    tpu.vector_store %arg19[%c0_217, %c91_218], %263 {strides = array<i32>} : memref<16x110xbf16, #tpu.memory_space<vmem>>, vector<16x19xbf16>,
    %cst_219 = arith.constant 0.000000e+00 : f32
    %265 = vector.broadcast %cst_219 : f32 to vector<16x80xf32>
    %c0_220 = arith.constant 0 : index
    %c0_221 = arith.constant 0 : index
    %266 = vector.load %arg19[%c0_220, %c0_221] : memref<16x110xbf16, #tpu.memory_space<vmem>>, vector<16x80xbf16>
    %c0_222 = arith.constant 0 : index
    %c0_223 = arith.constant 0 : index
    %c0_224 = arith.constant 0 : index
    %267 = vector.load %arg14[%c0_222, %c0_223, %c0_224] : memref<9x16x16xbf16, #tpu.memory_space<vmem>>, vector<1x16x16xbf16>
    %268 = vector.shape_cast %267 : vector<1x16x16xbf16> to vector<16x16xbf16>
    %cst_225 = arith.constant dense<0.000000e+00> : vector<16x80xf32>
    %269 = tpu.matmul %268, %266, %cst_225 {dimension_numbers = #tpu.dot_dimension_numbers<[1], [0], [0], [1], [0, 0, 1, 1], [], []>} : vector<16x16xbf16>, vector<16x80xbf16>, vector<16x80xf32> -> vector<16x80xf32>
    %270 = arith.addf %265, %269 : vector<16x80xf32>
    %c0_226 = arith.constant 0 : index
    %c1_227 = arith.constant 1 : index
    %271 = vector.load %arg19[%c0_226, %c1_227] : memref<16x110xbf16, #tpu.memory_space<vmem>>, vector<16x80xbf16>
    %c1_228 = arith.constant 1 : index
    %c0_229 = arith.constant 0 : index
    %c0_230 = arith.constant 0 : index
    %272 = vector.load %arg14[%c1_228, %c0_229, %c0_230] : memref<9x16x16xbf16, #tpu.memory_space<vmem>>, vector<1x16x16xbf16>
    %273 = vector.shape_cast %272 : vector<1x16x16xbf16> to vector<16x16xbf16>
    %cst_231 = arith.constant dense<0.000000e+00> : vector<16x80xf32>
    %274 = tpu.matmul %273, %271, %cst_231 {dimension_numbers = #tpu.dot_dimension_numbers<[1], [0], [0], [1], [0, 0, 1, 1], [], []>} : vector<16x16xbf16>, vector<16x80xbf16>, vector<16x80xf32> -> vector<16x80xf32>
    %275 = arith.addf %270, %274 : vector<16x80xf32>
    %c0_232 = arith.constant 0 : index
    %c2_233 = arith.constant 2 : index
    %276 = vector.load %arg19[%c0_232, %c2_233] : memref<16x110xbf16, #tpu.memory_space<vmem>>, vector<16x80xbf16>
    %c2_234 = arith.constant 2 : index
    %c0_235 = arith.constant 0 : index
    %c0_236 = arith.constant 0 : index
    %277 = vector.load %arg14[%c2_234, %c0_235, %c0_236] : memref<9x16x16xbf16, #tpu.memory_space<vmem>>, vector<1x16x16xbf16>
    %278 = vector.shape_cast %277 : vector<1x16x16xbf16> to vector<16x16xbf16>
    %cst_237 = arith.constant dense<0.000000e+00> : vector<16x80xf32>
    %279 = tpu.matmul %278, %276, %cst_237 {dimension_numbers = #tpu.dot_dimension_numbers<[1], [0], [0], [1], [0, 0, 1, 1], [], []>} : vector<16x16xbf16>, vector<16x80xbf16>, vector<16x80xf32> -> vector<16x80xf32>
    %280 = arith.addf %275, %279 : vector<16x80xf32>
    %c0_238 = arith.constant 0 : index
    %c10_239 = arith.constant 10 : index
    %281 = vector.load %arg19[%c0_238, %c10_239] : memref<16x110xbf16, #tpu.memory_space<vmem>>, vector<16x80xbf16>
    %c3_240 = arith.constant 3 : index
    %c0_241 = arith.constant 0 : index
    %c0_242 = arith.constant 0 : index
    %282 = vector.load %arg14[%c3_240, %c0_241, %c0_242] : memref<9x16x16xbf16, #tpu.memory_space<vmem>>, vector<1x16x16xbf16>
    %283 = vector.shape_cast %282 : vector<1x16x16xbf16> to vector<16x16xbf16>
    %cst_243 = arith.constant dense<0.000000e+00> : vector<16x80xf32>
    %284 = tpu.matmul %283, %281, %cst_243 {dimension_numbers = #tpu.dot_dimension_numbers<[1], [0], [0], [1], [0, 0, 1, 1], [], []>} : vector<16x16xbf16>, vector<16x80xbf16>, vector<16x80xf32> -> vector<16x80xf32>
    %285 = arith.addf %280, %284 : vector<16x80xf32>
    %c0_244 = arith.constant 0 : index
    %c11_245 = arith.constant 11 : index
    %286 = vector.load %arg19[%c0_244, %c11_245] : memref<16x110xbf16, #tpu.memory_space<vmem>>, vector<16x80xbf16>
    %c4_246 = arith.constant 4 : index
    %c0_247 = arith.constant 0 : index
    %c0_248 = arith.constant 0 : index
    %287 = vector.load %arg14[%c4_246, %c0_247, %c0_248] : memref<9x16x16xbf16, #tpu.memory_space<vmem>>, vector<1x16x16xbf16>
    %288 = vector.shape_cast %287 : vector<1x16x16xbf16> to vector<16x16xbf16>
    %cst_249 = arith.constant dense<0.000000e+00> : vector<16x80xf32>
    %289 = tpu.matmul %288, %286, %cst_249 {dimension_numbers = #tpu.dot_dimension_numbers<[1], [0], [0], [1], [0, 0, 1, 1], [], []>} : vector<16x16xbf16>, vector<16x80xbf16>, vector<16x80xf32> -> vector<16x80xf32>
    %290 = arith.addf %285, %289 : vector<16x80xf32>
    %c0_250 = arith.constant 0 : index
    %c12_251 = arith.constant 12 : index
    %291 = vector.load %arg19[%c0_250, %c12_251] : memref<16x110xbf16, #tpu.memory_space<vmem>>, vector<16x80xbf16>
    %c5_252 = arith.constant 5 : index
    %c0_253 = arith.constant 0 : index
    %c0_254 = arith.constant 0 : index
    %292 = vector.load %arg14[%c5_252, %c0_253, %c0_254] : memref<9x16x16xbf16, #tpu.memory_space<vmem>>, vector<1x16x16xbf16>
    %293 = vector.shape_cast %292 : vector<1x16x16xbf16> to vector<16x16xbf16>
    %cst_255 = arith.constant dense<0.000000e+00> : vector<16x80xf32>
    %294 = tpu.matmul %293, %291, %cst_255 {dimension_numbers = #tpu.dot_dimension_numbers<[1], [0], [0], [1], [0, 0, 1, 1], [], []>} : vector<16x16xbf16>, vector<16x80xbf16>, vector<16x80xf32> -> vector<16x80xf32>
    %295 = arith.addf %290, %294 : vector<16x80xf32>
    %c0_256 = arith.constant 0 : index
    %c20_257 = arith.constant 20 : index
    %296 = vector.load %arg19[%c0_256, %c20_257] : memref<16x110xbf16, #tpu.memory_space<vmem>>, vector<16x80xbf16>
    %c6_258 = arith.constant 6 : index
    %c0_259 = arith.constant 0 : index
    %c0_260 = arith.constant 0 : index
    %297 = vector.load %arg14[%c6_258, %c0_259, %c0_260] : memref<9x16x16xbf16, #tpu.memory_space<vmem>>, vector<1x16x16xbf16>
    %298 = vector.shape_cast %297 : vector<1x16x16xbf16> to vector<16x16xbf16>
    %cst_261 = arith.constant dense<0.000000e+00> : vector<16x80xf32>
    %299 = tpu.matmul %298, %296, %cst_261 {dimension_numbers = #tpu.dot_dimension_numbers<[1], [0], [0], [1], [0, 0, 1, 1], [], []>} : vector<16x16xbf16>, vector<16x80xbf16>, vector<16x80xf32> -> vector<16x80xf32>
    %300 = arith.addf %295, %299 : vector<16x80xf32>
    %c0_262 = arith.constant 0 : index
    %c21_263 = arith.constant 21 : index
    %301 = vector.load %arg19[%c0_262, %c21_263] : memref<16x110xbf16, #tpu.memory_space<vmem>>, vector<16x80xbf16>
    %c7_264 = arith.constant 7 : index
    %c0_265 = arith.constant 0 : index
    %c0_266 = arith.constant 0 : index
    %302 = vector.load %arg14[%c7_264, %c0_265, %c0_266] : memref<9x16x16xbf16, #tpu.memory_space<vmem>>, vector<1x16x16xbf16>
    %303 = vector.shape_cast %302 : vector<1x16x16xbf16> to vector<16x16xbf16>
    %cst_267 = arith.constant dense<0.000000e+00> : vector<16x80xf32>
    %304 = tpu.matmul %303, %301, %cst_267 {dimension_numbers = #tpu.dot_dimension_numbers<[1], [0], [0], [1], [0, 0, 1, 1], [], []>} : vector<16x16xbf16>, vector<16x80xbf16>, vector<16x80xf32> -> vector<16x80xf32>
    %305 = arith.addf %300, %304 : vector<16x80xf32>
    %c0_268 = arith.constant 0 : index
    %c22_269 = arith.constant 22 : index
    %306 = vector.load %arg19[%c0_268, %c22_269] : memref<16x110xbf16, #tpu.memory_space<vmem>>, vector<16x80xbf16>
    %c8_270 = arith.constant 8 : index
    %c0_271 = arith.constant 0 : index
    %c0_272 = arith.constant 0 : index
    %307 = vector.load %arg14[%c8_270, %c0_271, %c0_272] : memref<9x16x16xbf16, #tpu.memory_space<vmem>>, vector<1x16x16xbf16>
    %308 = vector.shape_cast %307 : vector<1x16x16xbf16> to vector<16x16xbf16>
    %cst_273 = arith.constant dense<0.000000e+00> : vector<16x80xf32>
    %309 = tpu.matmul %308, %306, %cst_273 {dimension_numbers = #tpu.dot_dimension_numbers<[1], [0], [0], [1], [0, 0, 1, 1], [], []>} : vector<16x16xbf16>, vector<16x80xbf16>, vector<16x80xf32> -> vector<16x80xf32>
    %310 = arith.addf %305, %309 : vector<16x80xf32>
    %311 = vector.broadcast %0 : vector<1x80xf32> to vector<16x80xf32>
    %312 = arith.mulf %310, %311 : vector<16x80xf32>
    %cst_274 = arith.constant dense<0.000000e+00> : vector<16xf32>
    %313 = vector.multi_reduction <add>, %312, %cst_274 [1] : vector<16x80xf32> to vector<16xf32>
    %314 = vector.shape_cast %313 : vector<16xf32> to vector<16x1xf32>
    %cst_275 = arith.constant 1.562500e-02 : f32
    %315 = vector.broadcast %cst_275 : f32 to vector<16x1xf32>
    %316 = arith.mulf %314, %315 : vector<16x1xf32>
    %317 = vector.broadcast %316 : vector<16x1xf32> to vector<16x80xf32>
    %318 = arith.subf %310, %317 : vector<16x80xf32>
    %319 = arith.mulf %318, %318 : vector<16x80xf32>
    %320 = vector.broadcast %0 : vector<1x80xf32> to vector<16x80xf32>
    %321 = arith.mulf %319, %320 : vector<16x80xf32>
    %cst_276 = arith.constant dense<0.000000e+00> : vector<16xf32>
    %322 = vector.multi_reduction <add>, %321, %cst_276 [1] : vector<16x80xf32> to vector<16xf32>
    %323 = vector.shape_cast %322 : vector<16xf32> to vector<16x1xf32>
    %cst_277 = arith.constant 1.562500e-02 : f32
    %324 = vector.broadcast %cst_277 : f32 to vector<16x1xf32>
    %325 = arith.mulf %323, %324 : vector<16x1xf32>
    %cst_278 = arith.constant 9.99999974E-6 : f32
    %326 = vector.broadcast %cst_278 : f32 to vector<16x1xf32>
    %327 = arith.addf %325, %326 : vector<16x1xf32>
    %328 = math.rsqrt %327 : vector<16x1xf32>
    %329 = vector.broadcast %328 : vector<16x1xf32> to vector<16x80xf32>
    %330 = arith.mulf %318, %329 : vector<16x80xf32>
    %c0_279 = arith.constant 0 : index
    %c0_280 = arith.constant 0 : index
    %331 = vector.load %arg15[%c0_279, %c0_280] : memref<16x1xf32, #tpu.memory_space<vmem>>, vector<16x1xf32>
    %332 = vector.broadcast %331 : vector<16x1xf32> to vector<16x80xf32>
    %333 = arith.mulf %330, %332 : vector<16x80xf32>
    %c0_281 = arith.constant 0 : index
    %c0_282 = arith.constant 0 : index
    %334 = vector.load %arg16[%c0_281, %c0_282] : memref<16x1xf32, #tpu.memory_space<vmem>>, vector<16x1xf32>
    %335 = vector.broadcast %334 : vector<16x1xf32> to vector<16x80xf32>
    %336 = arith.addf %333, %335 : vector<16x80xf32>
    %cst_283 = arith.constant 0.000000e+00 : f32
    %337 = vector.broadcast %cst_283 : f32 to vector<16x80xf32>
    %338 = arith.maximumf %336, %337 : vector<16x80xf32>
    %339 = arith.mulf %173, %338 : vector<16x80xf32>
    %340 = arith.addf %339, %338 : vector<16x80xf32>
    %c0_284 = arith.constant 0 : index
    %c0_285 = arith.constant 0 : index
    %c0_286 = arith.constant 0 : index
    %341 = vector.load %arg17[%c0_284, %c0_285, %c0_286] : memref<1x16x80xf32, #tpu.memory_space<vmem>>, vector<1x16x80xf32>
    %342 = vector.shape_cast %341 : vector<1x16x80xf32> to vector<16x80xf32>
    %343 = vector.shape_cast %340 : vector<16x80xf32> to vector<1x16x80xf32>
    tpu.vector_store %arg17[%c0_284, %c0_285, %c0_286], %343 {strides = array<i32>} : memref<1x16x80xf32, #tpu.memory_space<vmem>>, vector<1x16x80xf32>,
    return
  }
  func.func @transform_0(%arg0: i32) -> (i32, i32, i32) {
    %c0_i32 = arith.constant 0 : i32
    %c0_i32_0 = arith.constant 0 : i32
    %c0_i32_1 = arith.constant 0 : i32
    return %arg0, %c0_i32, %c0_i32_0 : i32, i32, i32
  }
  func.func @transform_1(%arg0: i32) -> (i32, i32) {
    %c0_i32 = arith.constant 0 : i32
    %c0_i32_0 = arith.constant 0 : i32
    %c0_i32_1 = arith.constant 0 : i32
    return %c0_i32, %c0_i32_0 : i32, i32
  }
  func.func @transform_2(%arg0: i32) -> (i32, i32) {
    %c0_i32 = arith.constant 0 : i32
    %c0_i32_0 = arith.constant 0 : i32
    %c0_i32_1 = arith.constant 0 : i32
    return %c0_i32, %c0_i32_0 : i32, i32
  }
  func.func @transform_3(%arg0: i32) -> (i32, i32, i32) {
    %c0_i32 = arith.constant 0 : i32
    %c0_i32_0 = arith.constant 0 : i32
    %c0_i32_1 = arith.constant 0 : i32
    %c0_i32_2 = arith.constant 0 : i32
    return %c0_i32, %c0_i32_0, %c0_i32_1 : i32, i32, i32
  }
  func.func @transform_4(%arg0: i32) -> (i32, i32) {
    %c0_i32 = arith.constant 0 : i32
    %c0_i32_0 = arith.constant 0 : i32
    %c0_i32_1 = arith.constant 0 : i32
    return %c0_i32, %c0_i32_0 : i32, i32
  }
  func.func @transform_5(%arg0: i32) -> (i32, i32) {
    %c0_i32 = arith.constant 0 : i32
    %c0_i32_0 = arith.constant 0 : i32
    %c0_i32_1 = arith.constant 0 : i32
    return %c0_i32, %c0_i32_0 : i32, i32
  }
  func.func @transform_6(%arg0: i32) -> (i32, i32, i32) {
    %c0_i32 = arith.constant 0 : i32
    %c0_i32_0 = arith.constant 0 : i32
    %c0_i32_1 = arith.constant 0 : i32
    %c0_i32_2 = arith.constant 0 : i32
    return %c0_i32, %c0_i32_0, %c0_i32_1 : i32, i32, i32
  }
  func.func @transform_7(%arg0: i32) -> (i32, i32) {
    %c0_i32 = arith.constant 0 : i32
    %c0_i32_0 = arith.constant 0 : i32
    %c0_i32_1 = arith.constant 0 : i32
    return %c0_i32, %c0_i32_0 : i32, i32
  }
  func.func @transform_8(%arg0: i32) -> (i32, i32) {
    %c0_i32 = arith.constant 0 : i32
    %c0_i32_0 = arith.constant 0 : i32
    %c0_i32_1 = arith.constant 0 : i32
    return %c0_i32, %c0_i32_0 : i32, i32
  }
  func.func @transform_9(%arg0: i32) -> (i32, i32) {
    %c0_i32 = arith.constant 0 : i32
    %c0_i32_0 = arith.constant 0 : i32
    %c0_i32_1 = arith.constant 0 : i32
    return %c0_i32, %c0_i32_0 : i32, i32
  }
  func.func @transform_10(%arg0: i32) -> (i32, i32, i32) {
    %c0_i32 = arith.constant 0 : i32
    %c0_i32_0 = arith.constant 0 : i32
    %c0_i32_1 = arith.constant 0 : i32
    %c0_i32_2 = arith.constant 0 : i32
    return %c0_i32, %c0_i32_0, %c0_i32_1 : i32, i32, i32
  }
  func.func @transform_11(%arg0: i32) -> (i32, i32) {
    %c0_i32 = arith.constant 0 : i32
    %c0_i32_0 = arith.constant 0 : i32
    %c0_i32_1 = arith.constant 0 : i32
    return %c0_i32, %c0_i32_0 : i32, i32
  }
  func.func @transform_12(%arg0: i32) -> (i32, i32) {
    %c0_i32 = arith.constant 0 : i32
    %c0_i32_0 = arith.constant 0 : i32
    %c0_i32_1 = arith.constant 0 : i32
    return %c0_i32, %c0_i32_0 : i32, i32
  }
  func.func @transform_13(%arg0: i32) -> (i32, i32, i32) {
    %c0_i32 = arith.constant 0 : i32
    %c0_i32_0 = arith.constant 0 : i32
    %c0_i32_1 = arith.constant 0 : i32
    %c0_i32_2 = arith.constant 0 : i32
    return %c0_i32, %c0_i32_0, %c0_i32_1 : i32, i32, i32
  }
  func.func @transform_14(%arg0: i32) -> (i32, i32) {
    %c0_i32 = arith.constant 0 : i32
    %c0_i32_0 = arith.constant 0 : i32
    %c0_i32_1 = arith.constant 0 : i32
    return %c0_i32, %c0_i32_0 : i32, i32
  }
  func.func @transform_15(%arg0: i32) -> (i32, i32) {
    %c0_i32 = arith.constant 0 : i32
    %c0_i32_0 = arith.constant 0 : i32
    %c0_i32_1 = arith.constant 0 : i32
    return %c0_i32, %c0_i32_0 : i32, i32
  }
  func.func @transform_16(%arg0: i32) -> (i32, i32, i32) {
    %c0_i32 = arith.constant 0 : i32
    %c0_i32_0 = arith.constant 0 : i32
    %c0_i32_1 = arith.constant 0 : i32
    return %arg0, %c0_i32, %c0_i32_0 : i32, i32, i32
  }
}

</mosaic_0001>

<llo_original>
// kernel: tpu_custom_call.1
$region0: #{tpu_custom_call.1}
  #allocation0 [shape = 'u32[]', space=smem, size = 0x4, offset = 0x4, fixed_abs, tag = 'smem constant byte address 0x4 - core index']
  #allocation1 [shape = 'u32[144,128]{1,0:T(1,128)}', space=vmem, size = 0x12000, scoped, tag = 'internal scratch']
  #allocation2 [shape = 'bf16[8,110]{1,0:T(8,128)(2,1)}', space=vmem, size = 0x800, scoped, tag = 'scratch operand']
  #allocation3 [shape = 'bf16[16,110]{1,0:T(16,128)(2,1)}', space=vmem, size = 0x1000, scoped, tag = 'scratch operand']
  %s0 = inlined_call_operand.vmem [shape: bf16[2,64,100], index: 0, kind: input, shape index: {}]
  %s1 = inlined_call_operand.vmem [shape: f32[1,80], index: 1, kind: input, shape index: {}]
  %s2 = inlined_call_operand.hbm [shape: bf16[8,16], index: 2, kind: input, shape index: {}]
  %s3 = inlined_call_operand.vmem [shape: bf16[9,8,8], index: 3, kind: input, shape index: {}]
  %s4 = inlined_call_operand.vmem [shape: f32[8,1], index: 4, kind: input, shape index: {}]
  %s5 = inlined_call_operand.vmem [shape: f32[8,1], index: 5, kind: input, shape index: {}]
  %s6 = inlined_call_operand.vmem [shape: bf16[9,8,8], index: 6, kind: input, shape index: {}]
  %s7 = inlined_call_operand.vmem [shape: f32[8,1], index: 7, kind: input, shape index: {}]
  %s8 = inlined_call_operand.vmem [shape: f32[8,1], index: 8, kind: input, shape index: {}]
  %s9 = inlined_call_operand.vmem [shape: bf16[16,8], index: 9, kind: input, shape index: {}]
  %s10 = inlined_call_operand.vmem [shape: bf16[9,16,16], index: 10, kind: input, shape index: {}]
  %s11 = inlined_call_operand.vmem [shape: f32[16,1], index: 11, kind: input, shape index: {}]
  %s12 = inlined_call_operand.vmem [shape: f32[16,1], index: 12, kind: input, shape index: {}]
  %s13 = inlined_call_operand.vmem [shape: bf16[9,16,16], index: 13, kind: input, shape index: {}]
  %s14 = inlined_call_operand.vmem [shape: f32[16,1], index: 14, kind: input, shape index: {}]
  %s15 = inlined_call_operand.vmem [shape: f32[16,1], index: 15, kind: input, shape index: {}]
  %s16 = inlined_call_operand.hbm [shape: f32[2,16,80], index: 16, kind: output, shape index: {}]
  %s17 = sld [smem:[#allocation0]]
  $region101: #{tpu_custom_call.1} parent=0
    _
  %s19 = ssub.s32 1, %s17
  %s20 = scalar_select 0, %s19, %s17
  $region1: #{tpu_custom_call.1} parent=0
    #allocation4 [shape = 'u8[2048]{0}', space=vmem, size = 0x800, scoped, tag = 'input window, operand 2, single buffered']
    #allocation5 [shape = 's32[2]{0}', space=sflag, size = 0x8, scoped, tag = 'scoped memory for tpu_custom_call.1']
    #allocation6 [shape = 's32[2]{0}', space=sflag, size = 0x8, scoped, tag = 'scoped memory for tpu_custom_call.1']
    #allocation7 [shape = 'u8[16384]{0}', space=vmem, size = 0x4000, scoped, tag = 'output window, operand 0']
    %21 = vsyncpa [#allocation5], 0
    %22 = vsyncpa [#allocation6], 0
    %s23 = scalar_lea.sflag [#allocation6], 1
    %24 = vsyncpa %s23, 0
    loop: start=0, step=1, limit=4
    $region2: #{tpu_custom_call.1} parent=1 // loop_pre_header
      _
    $region3: #{tpu_custom_call.1} parent=1 // loop_header
      %s26 = sphi 0, %s30
      %p27 = scmp.ge.s32.totalorder %s26, 4
      %s36 = sphi 0, %s38
      %s39 = sphi 0, %s36
      %s40 = sphi 0, %s39
      %s56 = sphi 0, %s40
      %s60 = sphi 0, %s60
      %s62 = sphi 0, %s60
      %s63 = sphi 0, %s62
      %s77 = sphi 0, %s63
      %s81 = sphi 0, %s81
      %s83 = sphi 0, %s81
      %s84 = sphi 0, %s83
      %s98 = sphi 0, %s84
      %s102 = sphi 0, %s102
      %s104 = sphi 0, %s102
      %s105 = sphi 0, %s104
      %s119 = sphi 0, %s105
      %s123 = sphi 0, %s123
      %s125 = sphi 0, %s123
      %s126 = sphi 0, %s125
      %s140 = sphi 0, %s126
      %s144 = sphi 0, %s144
      %s146 = sphi 0, %s144
      %s147 = sphi 0, %s146
      %s161 = sphi 0, %s147
      %s165 = sphi 0, %s165
      %s167 = sphi 0, %s165
      %s168 = sphi 0, %s167
      %s182 = sphi 0, %s168
      %s186 = sphi 0, %s186
      %s188 = sphi 0, %s186
      %s189 = sphi 0, %s188
      %s203 = sphi 0, %s189
      %s207 = sphi 0, %s207
      %s209 = sphi 0, %s207
      %s210 = sphi 0, %s209
      %s224 = sphi 0, %s210
      %s228 = sphi 0, %s228
      %s230 = sphi 0, %s228
      %s231 = sphi 0, %s230
      %s245 = sphi 0, %s231
      %s249 = sphi 0, %s249
      %s251 = sphi 0, %s249
      %s252 = sphi 0, %s251
      %s266 = sphi 0, %s252
      %s270 = sphi 0, %s270
      %s272 = sphi 0, %s270
      %s273 = sphi 0, %s272
      %s287 = sphi 0, %s273
      %s291 = sphi 0, %s291
      %s293 = sphi 0, %s291
      %s294 = sphi 0, %s293
      %s308 = sphi 0, %s294
      %s312 = sphi 0, %s312
      %s314 = sphi 0, %s312
      %s315 = sphi 0, %s314
      %s329 = sphi 0, %s315
      %s333 = sphi 0, %s333
      %s335 = sphi 0, %s333
      %s336 = sphi 0, %s335
      %s350 = sphi 0, %s336
      %s354 = sphi 0, %s354
      %s356 = sphi 0, %s354
      %s357 = sphi 0, %s356
      %s371 = sphi 0, %s357
      %s377 = sphi 0, %s379
      %s380 = sphi 0, %s377
      %s381 = sphi 0, %s380
      %s397 = sphi 0, %s381
    $region4: #{tpu_custom_call.1} parent=1 // loop_header_branch
      %29 = sbr.rel (%p27) target = $region8
    $region5: #{tpu_custom_call.1} parent=1 // loop_body
      %s31 = ssub.s32 %s26, 1
      %s32 = ssub.s32 %s26, 2
      %s33 = sadd.s32 %s26, 1
      %s34 = ssub.s32 %s26, %s33
      %p35 = scmp.eq.s32.totalorder %s34, 0
      %s37 = sadd.s32 %s36, 1
      %s38 = scalar_select %p35, %s36, %s37
      %p41 = pneg %p35
      %p42 = scmp.eq.s32.totalorder %s26, 1
      %p43 = por %p41, %p42
      %p44 = scmp.ne.s32.totalorder %s36, %s39
      %p45 = scmp.eq.s32.totalorder %s26, 0
      %p46 = por %p44, %p45
      %p47 = scmp.ne.s32.totalorder %s36, %s39
      %p48 = scmp.eq.s32.totalorder %s31, 1
      %p49 = por %p47, %p48
      %p50 = scmp.ne.s32.totalorder %s39, %s40
      %p51 = scmp.eq.s32.totalorder %s31, 0
      %p52 = por %p50, %p51
      %p53 = scmp.ne.s32.totalorder %s39, %s40
      %p54 = scmp.eq.s32.totalorder %s32, 1
      %p55 = por %p53, %p54
      %p57 = scmp.ne.s32.totalorder %s40, %s56
      %p58 = scmp.eq.s32.totalorder %s32, 0
      %p59 = por %p57, %p58
      %s61 = sadd.s32 %s60, 1
      %p64 = scmp.eq.s32.totalorder %s26, 1
      %p65 = scmp.ne.s32.totalorder %s60, %s62
      %p66 = scmp.eq.s32.totalorder %s26, 0
      %p67 = por %p65, %p66
      %p68 = scmp.ne.s32.totalorder %s60, %s62
      %p69 = scmp.eq.s32.totalorder %s31, 1
      %p70 = por %p68, %p69
      %p71 = scmp.ne.s32.totalorder %s62, %s63
      %p72 = scmp.eq.s32.totalorder %s31, 0
      %p73 = por %p71, %p72
      %p74 = scmp.ne.s32.totalorder %s62, %s63
      %p75 = scmp.eq.s32.totalorder %s32, 1
      %p76 = por %p74, %p75
      %p78 = scmp.ne.s32.totalorder %s63, %s77
      %p79 = scmp.eq.s32.totalorder %s32, 0
      %p80 = por %p78, %p79
      %s82 = sadd.s32 %s81, 1
      %p85 = scmp.eq.s32.totalorder %s26, 1
      %p86 = scmp.ne.s32.totalorder %s81, %s83
      %p87 = scmp.eq.s32.totalorder %s26, 0
      %p88 = por %p86, %p87
      %p89 = scmp.ne.s32.totalorder %s81, %s83
      %p90 = scmp.eq.s32.totalorder %s31, 1
      %p91 = por %p89, %p90
      %p92 = scmp.ne.s32.totalorder %s83, %s84
      %p93 = scmp.eq.s32.totalorder %s31, 0
      %p94 = por %p92, %p93
      %p95 = scmp.ne.s32.totalorder %s83, %s84
      %p96 = scmp.eq.s32.totalorder %s32, 1
      %p97 = por %p95, %p96
      %p99 = scmp.ne.s32.totalorder %s84, %s98
      %p100 = scmp.eq.s32.totalorder %s32, 0
      %p101 = por %p99, %p100
      %s103 = sadd.s32 %s102, 1
      %p106 = scmp.eq.s32.totalorder %s26, 1
      %p107 = scmp.ne.s32.totalorder %s102, %s104
      %p108 = scmp.eq.s32.totalorder %s26, 0
      %p109 = por %p107, %p108
      %p110 = scmp.ne.s32.totalorder %s102, %s104
      %p111 = scmp.eq.s32.totalorder %s31, 1
      %p112 = por %p110, %p111
      %p113 = scmp.ne.s32.totalorder %s104, %s105
      %p114 = scmp.eq.s32.totalorder %s31, 0
      %p115 = por %p113, %p114
      %p116 = scmp.ne.s32.totalorder %s104, %s105
      %p117 = scmp.eq.s32.totalorder %s32, 1
      %p118 = por %p116, %p117
      %p120 = scmp.ne.s32.totalorder %s105, %s119
      %p121 = scmp.eq.s32.totalorder %s32, 0
      %p122 = por %p120, %p121
      %s124 = sadd.s32 %s123, 1
      %p127 = scmp.eq.s32.totalorder %s26, 1
      %p128 = scmp.ne.s32.totalorder %s123, %s125
      %p129 = scmp.eq.s32.totalorder %s26, 0
      %p130 = por %p128, %p129
      %p131 = scmp.ne.s32.totalorder %s123, %s125
      %p132 = scmp.eq.s32.totalorder %s31, 1
      %p133 = por %p131, %p132
      %p134 = scmp.ne.s32.totalorder %s125, %s126
      %p135 = scmp.eq.s32.totalorder %s31, 0
      %p136 = por %p134, %p135
      %p137 = scmp.ne.s32.totalorder %s125, %s126
      %p138 = scmp.eq.s32.totalorder %s32, 1
      %p139 = por %p137, %p138
      %p141 = scmp.ne.s32.totalorder %s126, %s140
      %p142 = scmp.eq.s32.totalorder %s32, 0
      %p143 = por %p141, %p142
      %s145 = sadd.s32 %s144, 1
      %p148 = scmp.eq.s32.totalorder %s26, 1
      %p149 = scmp.ne.s32.totalorder %s144, %s146
      %p150 = scmp.eq.s32.totalorder %s26, 0
      %p151 = por %p149, %p150
      %p152 = scmp.ne.s32.totalorder %s144, %s146
      %p153 = scmp.eq.s32.totalorder %s31, 1
      %p154 = por %p152, %p153
      %p155 = scmp.ne.s32.totalorder %s146, %s147
      %p156 = scmp.eq.s32.totalorder %s31, 0
      %p157 = por %p155, %p156
      %p158 = scmp.ne.s32.totalorder %s146, %s147
      %p159 = scmp.eq.s32.totalorder %s32, 1
      %p160 = por %p158, %p159
      %p162 = scmp.ne.s32.totalorder %s147, %s161
      %p163 = scmp.eq.s32.totalorder %s32, 0
      %p164 = por %p162, %p163
      %s166 = sadd.s32 %s165, 1
      %p169 = scmp.eq.s32.totalorder %s26, 1
      %p170 = scmp.ne.s32.totalorder %s165, %s167
      %p171 = scmp.eq.s32.totalorder %s26, 0
      %p172 = por %p170, %p171
      %p173 = scmp.ne.s32.totalorder %s165, %s167
      %p174 = scmp.eq.s32.totalorder %s31, 1
      %p175 = por %p173, %p174
      %p176 = scmp.ne.s32.totalorder %s167, %s168
      %p177 = scmp.eq.s32.totalorder %s31, 0
      %p178 = por %p176, %p177
      %p179 = scmp.ne.s32.totalorder %s167, %s168
      %p180 = scmp.eq.s32.totalorder %s32, 1
      %p181 = por %p179, %p180
      %p183 = scmp.ne.s32.totalorder %s168, %s182
      %p184 = scmp.eq.s32.totalorder %s32, 0
      %p185 = por %p183, %p184
      %s187 = sadd.s32 %s186, 1
      %p190 = scmp.eq.s32.totalorder %s26, 1
      %p191 = scmp.ne.s32.totalorder %s186, %s188
      %p192 = scmp.eq.s32.totalorder %s26, 0
      %p193 = por %p191, %p192
      %p194 = scmp.ne.s32.totalorder %s186, %s188
      %p195 = scmp.eq.s32.totalorder %s31, 1
      %p196 = por %p194, %p195
      %p197 = scmp.ne.s32.totalorder %s188, %s189
      %p198 = scmp.eq.s32.totalorder %s31, 0
      %p199 = por %p197, %p198
      %p200 = scmp.ne.s32.totalorder %s188, %s189
      %p201 = scmp.eq.s32.totalorder %s32, 1
      %p202 = por %p200, %p201
      %p204 = scmp.ne.s32.totalorder %s189, %s203
      %p205 = scmp.eq.s32.totalorder %s32, 0
      %p206 = por %p204, %p205
      %s208 = sadd.s32 %s207, 1
      %p211 = scmp.eq.s32.totalorder %s26, 1
      %p212 = scmp.ne.s32.totalorder %s207, %s209
      %p213 = scmp.eq.s32.totalorder %s26, 0
      %p214 = por %p212, %p213
      %p215 = scmp.ne.s32.totalorder %s207, %s209
      %p216 = scmp.eq.s32.totalorder %s31, 1
      %p217 = por %p215, %p216
      %p218 = scmp.ne.s32.totalorder %s209, %s210
      %p219 = scmp.eq.s32.totalorder %s31, 0
      %p220 = por %p218, %p219
      %p221 = scmp.ne.s32.totalorder %s209, %s210
      %p222 = scmp.eq.s32.totalorder %s32, 1
      %p223 = por %p221, %p222
      %p225 = scmp.ne.s32.totalorder %s210, %s224
      %p226 = scmp.eq.s32.totalorder %s32, 0
      %p227 = por %p225, %p226
      %s229 = sadd.s32 %s228, 1
      %p232 = scmp.eq.s32.totalorder %s26, 1
      %p233 = scmp.ne.s32.totalorder %s228, %s230
      %p234 = scmp.eq.s32.totalorder %s26, 0
      %p235 = por %p233, %p234
      %p236 = scmp.ne.s32.totalorder %s228, %s230
      %p237 = scmp.eq.s32.totalorder %s31, 1
      %p238 = por %p236, %p237
      %p239 = scmp.ne.s32.totalorder %s230, %s231
      %p240 = scmp.eq.s32.totalorder %s31, 0
      %p241 = por %p239, %p240
      %p242 = scmp.ne.s32.totalorder %s230, %s231
      %p243 = scmp.eq.s32.totalorder %s32, 1
      %p244 = por %p242, %p243
      %p246 = scmp.ne.s32.totalorder %s231, %s245
      %p247 = scmp.eq.s32.totalorder %s32, 0
      %p248 = por %p246, %p247
      %s250 = sadd.s32 %s249, 1
      %p253 = scmp.eq.s32.totalorder %s26, 1
      %p254 = scmp.ne.s32.totalorder %s249, %s251
      %p255 = scmp.eq.s32.totalorder %s26, 0
      %p256 = por %p254, %p255
      %p257 = scmp.ne.s32.totalorder %s249, %s251
      %p258 = scmp.eq.s32.totalorder %s31, 1
      %p259 = por %p257, %p258
      %p260 = scmp.ne.s32.totalorder %s251, %s252
      %p261 = scmp.eq.s32.totalorder %s31, 0
      %p262 = por %p260, %p261
      %p263 = scmp.ne.s32.totalorder %s251, %s252
      %p264 = scmp.eq.s32.totalorder %s32, 1
      %p265 = por %p263, %p264
      %p267 = scmp.ne.s32.totalorder %s252, %s266
      %p268 = scmp.eq.s32.totalorder %s32, 0
      %p269 = por %p267, %p268
      %s271 = sadd.s32 %s270, 1
      %p274 = scmp.eq.s32.totalorder %s26, 1
      %p275 = scmp.ne.s32.totalorder %s270, %s272
      %p276 = scmp.eq.s32.totalorder %s26, 0
      %p277 = por %p275, %p276
      %p278 = scmp.ne.s32.totalorder %s270, %s272
      %p279 = scmp.eq.s32.totalorder %s31, 1
      %p280 = por %p278, %p279
      %p281 = scmp.ne.s32.totalorder %s272, %s273
      %p282 = scmp.eq.s32.totalorder %s31, 0
      %p283 = por %p281, %p282
      %p284 = scmp.ne.s32.totalorder %s272, %s273
      %p285 = scmp.eq.s32.totalorder %s32, 1
      %p286 = por %p284, %p285
      %p288 = scmp.ne.s32.totalorder %s273, %s287
      %p289 = scmp.eq.s32.totalorder %s32, 0
      %p290 = por %p288, %p289
      %s292 = sadd.s32 %s291, 1
      %p295 = scmp.eq.s32.totalorder %s26, 1
      %p296 = scmp.ne.s32.totalorder %s291, %s293
      %p297 = scmp.eq.s32.totalorder %s26, 0
      %p298 = por %p296, %p297
      %p299 = scmp.ne.s32.totalorder %s291, %s293
      %p300 = scmp.eq.s32.totalorder %s31, 1
      %p301 = por %p299, %p300
      %p302 = scmp.ne.s32.totalorder %s293, %s294
      %p303 = scmp.eq.s32.totalorder %s31, 0
      %p304 = por %p302, %p303
      %p305 = scmp.ne.s32.totalorder %s293, %s294
      %p306 = scmp.eq.s32.totalorder %s32, 1
      %p307 = por %p305, %p306
      %p309 = scmp.ne.s32.totalorder %s294, %s308
      %p310 = scmp.eq.s32.totalorder %s32, 0
      %p311 = por %p309, %p310
      %s313 = sadd.s32 %s312, 1
      %p316 = scmp.eq.s32.totalorder %s26, 1
      %p317 = scmp.ne.s32.totalorder %s312, %s314
      %p318 = scmp.eq.s32.totalorder %s26, 0
      %p319 = por %p317, %p318
      %p320 = scmp.ne.s32.totalorder %s312, %s314
      %p321 = scmp.eq.s32.totalorder %s31, 1
      %p322 = por %p320, %p321
      %p323 = scmp.ne.s32.totalorder %s314, %s315
      %p324 = scmp.eq.s32.totalorder %s31, 0
      %p325 = por %p323, %p324
      %p326 = scmp.ne.s32.totalorder %s314, %s315
      %p327 = scmp.eq.s32.totalorder %s32, 1
      %p328 = por %p326, %p327
      %p330 = scmp.ne.s32.totalorder %s315, %s329
      %p331 = scmp.eq.s32.totalorder %s32, 0
      %p332 = por %p330, %p331
      %s334 = sadd.s32 %s333, 1
      %p337 = scmp.eq.s32.totalorder %s26, 1
      %p338 = scmp.ne.s32.totalorder %s333, %s335
      %p339 = scmp.eq.s32.totalorder %s26, 0
      %p340 = por %p338, %p339
      %p341 = scmp.ne.s32.totalorder %s333, %s335
      %p342 = scmp.eq.s32.totalorder %s31, 1
      %p343 = por %p341, %p342
      %p344 = scmp.ne.s32.totalorder %s335, %s336
      %p345 = scmp.eq.s32.totalorder %s31, 0
      %p346 = por %p344, %p345
      %p347 = scmp.ne.s32.totalorder %s335, %s336
      %p348 = scmp.eq.s32.totalorder %s32, 1
      %p349 = por %p347, %p348
      %p351 = scmp.ne.s32.totalorder %s336, %s350
      %p352 = scmp.eq.s32.totalorder %s32, 0
      %p353 = por %p351, %p352
      %s355 = sadd.s32 %s354, 1
      %p358 = scmp.eq.s32.totalorder %s26, 1
      %p359 = scmp.ne.s32.totalorder %s354, %s356
      %p360 = scmp.eq.s32.totalorder %s26, 0
      %p361 = por %p359, %p360
      %p362 = scmp.ne.s32.totalorder %s354, %s356
      %p363 = scmp.eq.s32.totalorder %s31, 1
      %p364 = por %p362, %p363
      %p365 = scmp.ne.s32.totalorder %s356, %s357
      %p366 = scmp.eq.s32.totalorder %s31, 0
      %p367 = por %p365, %p366
      %p368 = scmp.ne.s32.totalorder %s356, %s357
      %p369 = scmp.eq.s32.totalorder %s32, 1
      %p370 = por %p368, %p369
      %p372 = scmp.ne.s32.totalorder %s357, %s371
      %p373 = scmp.eq.s32.totalorder %s32, 0
      %p374 = por %p372, %p373
      %s375 = ssub.s32 %s26, %s33
      %p376 = scmp.eq.s32.totalorder %s375, 0
      %s378 = sadd.s32 %s377, 1
      %s379 = scalar_select %p376, %s377, %s378
      %p382 = pneg %p376
      %p383 = scmp.eq.s32.totalorder %s26, 1
      %p384 = por %p382, %p383
      %p385 = scmp.ne.s32.totalorder %s377, %s380
      %p386 = scmp.eq.s32.totalorder %s26, 0
      %p387 = por %p385, %p386
      %p388 = scmp.ne.s32.totalorder %s377, %s380
      %p389 = scmp.eq.s32.totalorder %s31, 1
      %p390 = por %p388, %p389
      %p391 = scmp.ne.s32.totalorder %s380, %s381
      %p392 = scmp.eq.s32.totalorder %s31, 0
      %p393 = por %p391, %p392
      %p394 = scmp.ne.s32.totalorder %s380, %s381
      %p395 = scmp.eq.s32.totalorder %s32, 1
      %p396 = por %p394, %p395
      %p398 = scmp.ne.s32.totalorder %s381, %s397
      %p399 = scmp.eq.s32.totalorder %s32, 0
      %p400 = por %p398, %p399
      %p401 = scmp.le.s32.totalorder 1, %s26
      %p402 = scmp.lt.s32.totalorder %s26, 3
      %p403 = pnand %p401, %p402
      %p404 = pneg %p403
      // Predicated region
      $region9: #{tpu_custom_call.1} parent=5 // pred_check
        _
      $region10: #{tpu_custom_call.1} parent=5 // pred_check_branch
        %406 = sbr.rel (%p403) target = $region12
      $region11: #{tpu_custom_call.1} parent=5 // pred_region
        %s407 = ssub.s32 %s26, 1
        // Predicated region
        $region13: #{tpu_custom_call.1} parent=11 // pred_check
          %p408 = pneg %p73
        $region14: #{tpu_custom_call.1} parent=11 // pred_check_branch
          %410 = sbr.rel (%p408) target = $region16
        $region15: #{tpu_custom_call.1} parent=11 // pred_region
          _
        $region16: #{tpu_custom_call.1} parent=11 // pred_fallthru
          _
        // Predicated region
        $region17: #{tpu_custom_call.1} parent=11 // pred_check
          %p411 = pneg %p94
        $region18: #{tpu_custom_call.1} parent=11 // pred_check_branch
          %413 = sbr.rel (%p411) target = $region20
        $region19: #{tpu_custom_call.1} parent=11 // pred_region
          %s415 = ssub.s32 64, 64
          %416 = vsyncadd [#allocation5], %s415
          %s418 = sshll.u32 [#allocation4], 4
          %s419 = int_to_ptr.vmem [resolvable:$true] %s418
          %421 = dma.hbm_to_vmem [thread:$0]  %s2, 64, %s419, [#allocation5]
        $region20: #{tpu_custom_call.1} parent=11 // pred_fallthru
          _
        // Predicated region
        $region21: #{tpu_custom_call.1} parent=11 // pred_check
          %p422 = pneg %p115
        $region22: #{tpu_custom_call.1} parent=11 // pred_check_branch
          %424 = sbr.rel (%p422) target = $region24
        $region23: #{tpu_custom_call.1} parent=11 // pred_region
          _
        $region24: #{tpu_custom_call.1} parent=11 // pred_fallthru
          _
        // Predicated region
        $region25: #{tpu_custom_call.1} parent=11 // pred_check
          %p425 = pneg %p136
        $region26: #{tpu_custom_call.1} parent=11 // pred_check_branch
          %427 = sbr.rel (%p425) target = $region28
        $region27: #{tpu_custom_call.1} parent=11 // pred_region
          _
        $region28: #{tpu_custom_call.1} parent=11 // pred_fallthru
          _
        // Predicated region
        $region29: #{tpu_custom_call.1} parent=11 // pred_check
          %p428 = pneg %p157
        $region30: #{tpu_custom_call.1} parent=11 // pred_check_branch
          %430 = sbr.rel (%p428) target = $region32
        $region31: #{tpu_custom_call.1} parent=11 // pred_region
          _
        $region32: #{tpu_custom_call.1} parent=11 // pred_fallthru
          _
        // Predicated region
        $region33: #{tpu_custom_call.1} parent=11 // pred_check
          %p431 = pneg %p178
        $region34: #{tpu_custom_call.1} parent=11 // pred_check_branch
          %433 = sbr.rel (%p431) target = $region36
        $region35: #{tpu_custom_call.1} parent=11 // pred_region
          _
        $region36: #{tpu_custom_call.1} parent=11 // pred_fallthru
          _
        // Predicated region
        $region37: #{tpu_custom_call.1} parent=11 // pred_check
          %p434 = pneg %p199
        $region38: #{tpu_custom_call.1} parent=11 // pred_check_branch
          %436 = sbr.rel (%p434) target = $region40
        $region39: #{tpu_custom_call.1} parent=11 // pred_region
          _
        $region40: #{tpu_custom_call.1} parent=11 // pred_fallthru
          _
        // Predicated region
        $region41: #{tpu_custom_call.1} parent=11 // pred_check
          %p437 = pneg %p220
        $region42: #{tpu_custom_call.1} parent=11 // pred_check_branch
          %439 = sbr.rel (%p437) target = $region44
        $region43: #{tpu_custom_call.1} parent=11 // pred_region
          _
        $region44: #{tpu_custom_call.1} parent=11 // pred_fallthru
          _
        // Predicated region
        $region45: #{tpu_custom_call.1} parent=11 // pred_check
          %p440 = pneg %p241
        $region46: #{tpu_custom_call.1} parent=11 // pred_check_branch
          %442 = sbr.rel (%p440) target = $region48
        $region47: #{tpu_custom_call.1} parent=11 // pred_region
          _
        $region48: #{tpu_custom_call.1} parent=11 // pred_fallthru
          _
        // Predicated region
        $region49: #{tpu_custom_call.1} parent=11 // pred_check
          %p443 = pneg %p262
        $region50: #{tpu_custom_call.1} parent=11 // pred_check_branch
          %445 = sbr.rel (%p443) target = $region52
        $region51: #{tpu_custom_call.1} parent=11 // pred_region
          _
        $region52: #{tpu_custom_call.1} parent=11 // pred_fallthru
          _
        // Predicated region
        $region53: #{tpu_custom_call.1} parent=11 // pred_check
          %p446 = pneg %p283
        $region54: #{tpu_custom_call.1} parent=11 // pred_check_branch
          %448 = sbr.rel (%p446) target = $region56
        $region55: #{tpu_custom_call.1} parent=11 // pred_region
          _
        $region56: #{tpu_custom_call.1} parent=11 // pred_fallthru
          _
        // Predicated region
        $region57: #{tpu_custom_call.1} parent=11 // pred_check
          %p449 = pneg %p304
        $region58: #{tpu_custom_call.1} parent=11 // pred_check_branch
          %451 = sbr.rel (%p449) target = $region60
        $region59: #{tpu_custom_call.1} parent=11 // pred_region
          _
        $region60: #{tpu_custom_call.1} parent=11 // pred_fallthru
          _
        // Predicated region
        $region61: #{tpu_custom_call.1} parent=11 // pred_check
          %p452 = pneg %p325
        $region62: #{tpu_custom_call.1} parent=11 // pred_check_branch
          %454 = sbr.rel (%p452) target = $region64
        $region63: #{tpu_custom_call.1} parent=11 // pred_region
          _
        $region64: #{tpu_custom_call.1} parent=11 // pred_fallthru
          _
        // Predicated region
        $region65: #{tpu_custom_call.1} parent=11 // pred_check
          %p455 = pneg %p346
        $region66: #{tpu_custom_call.1} parent=11 // pred_check_branch
          %457 = sbr.rel (%p455) target = $region68
        $region67: #{tpu_custom_call.1} parent=11 // pred_region
          _
        $region68: #{tpu_custom_call.1} parent=11 // pred_fallthru
          _
        // Predicated region
        $region69: #{tpu_custom_call.1} parent=11 // pred_check
          %p458 = pneg %p367
        $region70: #{tpu_custom_call.1} parent=11 // pred_check_branch
          %460 = sbr.rel (%p458) target = $region72
        $region71: #{tpu_custom_call.1} parent=11 // pred_region
          _
        $region72: #{tpu_custom_call.1} parent=11 // pred_fallthru
          _
      $region12: #{tpu_custom_call.1} parent=5 // pred_fallthru
        _
      %p461 = scmp.lt.s32.totalorder %s26, 2
      // Predicated region
      $region73: #{tpu_custom_call.1} parent=5 // pred_check
        %p462 = pneg %p461
      $region74: #{tpu_custom_call.1} parent=5 // pred_check_branch
        %464 = sbr.rel (%p462) target = $region76
      $region75: #{tpu_custom_call.1} parent=5 // pred_region
        // Predicated region
        $region77: #{tpu_custom_call.1} parent=75 // pred_check
          %p465 = pneg %p46
        $region78: #{tpu_custom_call.1} parent=75 // pred_check_branch
          %467 = sbr.rel (%p465) target = $region80
        $region79: #{tpu_custom_call.1} parent=75 // pred_region
          %p468 = scmp.lt.s32.totalorder %s26, 1
          %s469 = scalar_select %p468, %s26, 1
          %s470 = smul.addr %s469, 8
          %s471 = smul.addr %s470, 4
          %s472 = scalar_lea.vmem %s0, %s471
        $region80: #{tpu_custom_call.1} parent=75 // pred_fallthru
          _
      $region76: #{tpu_custom_call.1} parent=5 // pred_fallthru
        _
      %p473 = scmp.le.s32.totalorder 1, %s26
      %p474 = scmp.lt.s32.totalorder %s26, 3
      %p475 = pnand %p473, %p474
      %p476 = pneg %p475
      // Predicated region
      $region81: #{tpu_custom_call.1} parent=5 // pred_check
        _
      $region82: #{tpu_custom_call.1} parent=5 // pred_check_branch
        %478 = sbr.rel (%p475) target = $region84
      $region83: #{tpu_custom_call.1} parent=5 // pred_region
        %s479 = ssub.s32 %s26, 1
        // Predicated region
        $region85: #{tpu_custom_call.1} parent=83 // pred_check
          %p480 = pneg %p94
        $region86: #{tpu_custom_call.1} parent=83 // pred_check_branch
          %482 = sbr.rel (%p480) target = $region88
        $region87: #{tpu_custom_call.1} parent=83 // pred_region
          %483 = dma.done [#allocation5], 64
        $region88: #{tpu_custom_call.1} parent=83 // pred_fallthru
          _
        %p484 = scmp.lt.s32.totalorder %s31, 1
        %s485 = scalar_select %p484, %s31, 1
        %s486 = smul.addr %s485, 8
        %s487 = smul.addr %s486, 4
        %s488 = scalar_lea.vmem %s0, %s487
        %p489 = pneg %p52
        %p490 = pneg %p49
        %p491 = pneg %p73
        %p492 = pneg %p70
        %p493 = pneg %p94
        %p494 = pneg %p91
        %p495 = pneg %p115
        %p496 = pneg %p112
        %p497 = pneg %p136
        %p498 = pneg %p133
        %p499 = pneg %p157
        %p500 = pneg %p154
        %p501 = pneg %p178
        %p502 = pneg %p175
        %p503 = pneg %p199
        %p504 = pneg %p196
        %p505 = pneg %p220
        %p506 = pneg %p217
        %p507 = pneg %p241
        %p508 = pneg %p238
        %p509 = pneg %p262
        %p510 = pneg %p259
        %p511 = pneg %p283
        %p512 = pneg %p280
        %p513 = pneg %p304
        %p514 = pneg %p301
        %p515 = pneg %p325
        %p516 = pneg %p322
        %p517 = pneg %p346
        %p518 = pneg %p343
        %p519 = pneg %p367
        %p520 = pneg %p364
        %p521 = pneg %p393
        %p522 = pneg %p390
        %s523 = sand.u32 %s380, 1
        %s524 = scalar_lea.sflag [#allocation6], %s523
        %s525 = sand.u32 %s380, 1
        %s526 = smul.addr %s525, 16
        %s527 = scalar_lea.vmem [#allocation7], %s526
        %p528 = scmp.lt.s32.totalorder %s31, 1
        %s529 = scalar_select %p528, %s31, 1
        %s530 = smul.addr %s529, 8
        %s531 = smul.addr %s530, 4
        %s532 = scalar_lea.vmem %s0, %s531
        %v534 = vld [vmem:[%s1] sm:$0x1]
        %v535 = vld [vmem:[%s532 + $0x18] sm:$0xf]
        %v536 = vld [vmem:[%s532 + $0x1c] sm:$0xf]
        %v537 = vld [vmem:[#allocation4] sm:$0xf]
        %v540 = vunpack.c.l.b16 %v535
        %v541 = vunpack.c.l.b16 %v536
        %v542 = vpack.c.b16 %v541, %v540
        %vm544 = vcmask 130048
        %v546 = vsel %vm544, %v537, 0
        %548 = vmatprep.subr.bf16.mxu0 0
        %549 = vmatpush1.bf16.msra.mxu0 %v542
        %550 = vmatprep.subr.bf16.mxu0 0
        %551 = vmatpush1.bf16.msra.mxu0 0
        %552 = vmatprep.subr.bf16.mxu0 0
        %553 = vmatpush1.bf16.msra.mxu0 0
        %554 = vmatprep.subr.bf16.mxu0 0
        %555 = vmatpush1.bf16.msra.mxu0 0
        %556 = vmatprep.subr.bf16.mxu0 0
        %557 = vmatpush1.bf16.msra.mxu0 0
        %558 = vmatprep.subr.bf16.mxu0 0
        %559 = vmatpush1.bf16.msra.mxu0 0
        %560 = vmatprep.subr.bf16.mxu0 0
        %561 = vmatpush1.bf16.msra.mxu0 0
        %562 = vmatprep.subr.bf16.mxu0 0
        %563 = vmatpush1.bf16.msra.mxu0 0
        %564 = vmatprep.subr.bf16.mxu0 0
        %565 = vmatpush1.bf16.msra.mxu0 0
        %566 = vmatprep.subr.bf16.mxu0 0
        %567 = vmatpush1.bf16.msra.mxu0 0
        %568 = vmatprep.subr.bf16.mxu0 0
        %569 = vmatpush1.bf16.msra.mxu0 0
        %570 = vmatprep.subr.bf16.mxu0 0
        %571 = vmatpush1.bf16.msra.mxu0 0
        %572 = vmatprep.subr.bf16.mxu0 0
        %573 = vmatpush1.bf16.msra.mxu0 0
        %574 = vmatprep.subr.bf16.mxu0 0
        %575 = vmatpush1.bf16.msra.mxu0 0
        %576 = vmatprep.subr.bf16.mxu0 0
        %577 = vmatpush1.bf16.msra.mxu0 0
        %578 = vmatprep.subr.bf16.mxu0 0
        %579 = vmatpush1.bf16.msra.mxu0 0
        %580 = vmatprep.mubr.bf16.mxu0 0
        %581 = vmatmul.mubr.bf16.gmra.mrb[0].mxu0 %v546
        %v582 = vpop.f32.mrb[0].mxu0
        %v583 = vadd.f32 0.0, %v582
        %v584 = vpop.f32.mrb[0].mxu0
        %v585 = vpop.f32.mrb[0].mxu0
        %v586 = vpop.f32.mrb[0].mxu0
        %587 = vdwg.mxu0
        %vm588 = vcmask 84992
        %589 = vst.msk [vmem:[#allocation2] sm:$0xf] %vm588, 0
        %v591 = vlaneseq
        %v592 = vshrl.u32 %v591, 7
        %v593 = vsub.s32 0, %v592
        %v594 = vrot.slane %v534, %v593
        %v596 = vmul.f32 %v583, %v594
        %v597 = vpack.c.bf16 %v596, %v596
        %v599 = vunpack.c.l.b16 %v597
        %v600 = vpack.c.b16 %v599, %v599
        %601 = vrot.lane.b32.xlu0 %v600, 11
        %v602 = vpop.permute.xlu0 %601
        %vm604 = vcmask 740440
        %605 = vst.msk [vmem:[#allocation2] sm:$0xf] %vm604, %v602
        %vm606 = vcmask 896728
        %607 = vst.msk [vmem:[#allocation2] sm:$0xf] %vm606, 0
        %v608 = vld [vmem:[#allocation2] sm:$0xf]
        %v609 = vld [vmem:[%s3] sm:$0xf]
        %s610 = scalar_lea.vmem %s3, 4
        %v611 = vld [vmem:[%s610] sm:$0xf]
        %v613 = vunpack.c.l.b16 %v608
        %v614 = vpack.c.b16 %v613, %v613
        %615 = vrot.lane.b32.xlu0 %v614, 127
        %v616 = vpop.permute.xlu0 %615
        %vm617 = vcmask 64512
        %v619 = vsel %vm617, %v611, 0
        %vm621 = vcmask 1043456
        %v623 = vsel %vm621, %v616, 0
        %625 = vmatprep.subr.bf16.mxu0 0
        %626 = vmatpush1.bf16.msra.mxu0 %v623
        %627 = vmatprep.subr.bf16.mxu0 0
        %628 = vmatpush1.bf16.msra.mxu0 0
        %629 = vmatprep.subr.bf16.mxu0 0
        %630 = vmatpush1.bf16.msra.mxu0 0
        %631 = vmatprep.subr.bf16.mxu0 0
        %632 = vmatpush1.bf16.msra.mxu0 0
        %633 = vmatprep.subr.bf16.mxu0 0
        %634 = vmatpush1.bf16.msra.mxu0 0
        %635 = vmatprep.subr.bf16.mxu0 0
        %636 = vmatpush1.bf16.msra.mxu0 0
        %637 = vmatprep.subr.bf16.mxu0 0
        %638 = vmatpush1.bf16.msra.mxu0 0
        %639 = vmatprep.subr.bf16.mxu0 0
        %640 = vmatpush1.bf16.msra.mxu0 0
        %641 = vmatprep.subr.bf16.mxu0 0
        %642 = vmatpush1.bf16.msra.mxu0 0
        %643 = vmatprep.subr.bf16.mxu0 0
        %644 = vmatpush1.bf16.msra.mxu0 0
        %645 = vmatprep.subr.bf16.mxu0 0
        %646 = vmatpush1.bf16.msra.mxu0 0
        %647 = vmatprep.subr.bf16.mxu0 0
        %648 = vmatpush1.bf16.msra.mxu0 0
        %649 = vmatprep.subr.bf16.mxu0 0
        %650 = vmatpush1.bf16.msra.mxu0 0
        %651 = vmatprep.subr.bf16.mxu0 0
        %652 = vmatpush1.bf16.msra.mxu0 0
        %653 = vmatprep.subr.bf16.mxu0 0
        %654 = vmatpush1.bf16.msra.mxu0 0
        %655 = vmatprep.subr.bf16.mxu0 0
        %656 = vmatpush1.bf16.msra.mxu0 0
        %657 = vmatprep.mubr.bf16.mxu0 0
        %658 = vmatmul.mubr.bf16.gmra.mrb[0].mxu0 %v619
        %v659 = vpop.f32.mrb[0].mxu0
        %v660 = vadd.f32 0.0, %v659
        %v661 = vpop.f32.mrb[0].mxu0
        %v662 = vpop.f32.mrb[0].mxu0
        %v663 = vpop.f32.mrb[0].mxu0
        %664 = vdwg.mxu0
        %v666 = vsel %vm617, %v609, 0
        %v669 = vsel %vm621, %v608, 0
        %671 = vmatprep.subr.bf16.mxu0 0
        %672 = vmatpush1.bf16.msra.mxu0 %v669
        %673 = vmatprep.subr.bf16.mxu0 0
        %674 = vmatpush1.bf16.msra.mxu0 0
        %675 = vmatprep.subr.bf16.mxu0 0
        %676 = vmatpush1.bf16.msra.mxu0 0
        %677 = vmatprep.subr.bf16.mxu0 0
        %678 = vmatpush1.bf16.msra.mxu0 0
        %679 = vmatprep.subr.bf16.mxu0 0
        %680 = vmatpush1.bf16.msra.mxu0 0
        %681 = vmatprep.subr.bf16.mxu0 0
        %682 = vmatpush1.bf16.msra.mxu0 0
        %683 = vmatprep.subr.bf16.mxu0 0
        %684 = vmatpush1.bf16.msra.mxu0 0
        %685 = vmatprep.subr.bf16.mxu0 0
        %686 = vmatpush1.bf16.msra.mxu0 0
        %687 = vmatprep.subr.bf16.mxu0 0
        %688 = vmatpush1.bf16.msra.mxu0 0
        %689 = vmatprep.subr.bf16.mxu0 0
        %690 = vmatpush1.bf16.msra.mxu0 0
        %691 = vmatprep.subr.bf16.mxu0 0
        %692 = vmatpush1.bf16.msra.mxu0 0
        %693 = vmatprep.subr.bf16.mxu0 0
        %694 = vmatpush1.bf16.msra.mxu0 0
        %695 = vmatprep.subr.bf16.mxu0 0
        %696 = vmatpush1.bf16.msra.mxu0 0
        %697 = vmatprep.subr.bf16.mxu0 0
        %698 = vmatpush1.bf16.msra.mxu0 0
        %699 = vmatprep.subr.bf16.mxu0 0
        %700 = vmatpush1.bf16.msra.mxu0 0
        %701 = vmatprep.subr.bf16.mxu0 0
        %702 = vmatpush1.bf16.msra.mxu0 0
        %703 = vmatprep.mubr.bf16.mxu0 0
        %704 = vmatmul.mubr.bf16.gmra.mrb[0].mxu0 %v666
        %v705 = vpop.f32.mrb[0].mxu0
        %v706 = vadd.f32 %v660, %v705
        %v707 = vpop.f32.mrb[0].mxu0
        %v708 = vpop.f32.mrb[0].mxu0
        %v709 = vpop.f32.mrb[0].mxu0
        %710 = vdwg.mxu0
        %s711 = scalar_lea.vmem %s3, 8
        %v712 = vld [vmem:[%s711] sm:$0xf]
        %713 = vrot.lane.b32.xlu0 %v614, 126
        %v714 = vpop.permute.xlu0 %713
        %v716 = vsel %vm617, %v712, 0
        %v719 = vsel %vm621, %v714, 0
        %721 = vmatprep.subr.bf16.mxu0 0
        %722 = vmatpush1.bf16.msra.mxu0 %v719
        %723 = vmatprep.subr.bf16.mxu0 0
        %724 = vmatpush1.bf16.msra.mxu0 0
        %725 = vmatprep.subr.bf16.mxu0 0
        %726 = vmatpush1.bf16.msra.mxu0 0
        %727 = vmatprep.subr.bf16.mxu0 0
        %728 = vmatpush1.bf16.msra.mxu0 0
        %729 = vmatprep.subr.bf16.mxu0 0
        %730 = vmatpush1.bf16.msra.mxu0 0
        %731 = vmatprep.subr.bf16.mxu0 0
        %732 = vmatpush1.bf16.msra.mxu0 0
        %733 = vmatprep.subr.bf16.mxu0 0
        %734 = vmatpush1.bf16.msra.mxu0 0
        %735 = vmatprep.subr.bf16.mxu0 0
        %736 = vmatpush1.bf16.msra.mxu0 0
        %737 = vmatprep.subr.bf16.mxu0 0
        %738 = vmatpush1.bf16.msra.mxu0 0
        %739 = vmatprep.subr.bf16.mxu0 0
        %740 = vmatpush1.bf16.msra.mxu0 0
        %741 = vmatprep.subr.bf16.mxu0 0
        %742 = vmatpush1.bf16.msra.mxu0 0
        %743 = vmatprep.subr.bf16.mxu0 0
        %744 = vmatpush1.bf16.msra.mxu0 0
        %745 = vmatprep.subr.bf16.mxu0 0
        %746 = vmatpush1.bf16.msra.mxu0 0
        %747 = vmatprep.subr.bf16.mxu0 0
        %748 = vmatpush1.bf16.msra.mxu0 0
        %749 = vmatprep.subr.bf16.mxu0 0
        %750 = vmatpush1.bf16.msra.mxu0 0
        %751 = vmatprep.subr.bf16.mxu0 0
        %752 = vmatpush1.bf16.msra.mxu0 0
        %753 = vmatprep.mubr.bf16.mxu0 0
        %754 = vmatmul.mubr.bf16.gmra.mrb[0].mxu0 %v716
        %v755 = vpop.f32.mrb[0].mxu0
        %v756 = vadd.f32 0.0, %v755
        %v757 = vpop.f32.mrb[0].mxu0
        %v758 = vpop.f32.mrb[0].mxu0
        %v759 = vpop.f32.mrb[0].mxu0
        %760 = vdwg.mxu0
        %v761 = vadd.f32 %v706, %v756
        %s762 = scalar_lea.vmem %s3, 12
        %v763 = vld [vmem:[%s762] sm:$0xf]
        %764 = vrot.lane.b32.xlu0 %v614, 118
        %v765 = vpop.permute.xlu0 %764
        %v767 = vsel %vm617, %v763, 0
        %v770 = vsel %vm621, %v765, 0
        %772 = vmatprep.subr.bf16.mxu0 0
        %773 = vmatpush1.bf16.msra.mxu0 %v770
        %774 = vmatprep.subr.bf16.mxu0 0
        %775 = vmatpush1.bf16.msra.mxu0 0
        %776 = vmatprep.subr.bf16.mxu0 0
        %777 = vmatpush1.bf16.msra.mxu0 0
        %778 = vmatprep.subr.bf16.mxu0 0
        %779 = vmatpush1.bf16.msra.mxu0 0
        %780 = vmatprep.subr.bf16.mxu0 0
        %781 = vmatpush1.bf16.msra.mxu0 0
        %782 = vmatprep.subr.bf16.mxu0 0
        %783 = vmatpush1.bf16.msra.mxu0 0
        %784 = vmatprep.subr.bf16.mxu0 0
        %785 = vmatpush1.bf16.msra.mxu0 0
        %786 = vmatprep.subr.bf16.mxu0 0
        %787 = vmatpush1.bf16.msra.mxu0 0
        %788 = vmatprep.subr.bf16.mxu0 0
        %789 = vmatpush1.bf16.msra.mxu0 0
        %790 = vmatprep.subr.bf16.mxu0 0
        %791 = vmatpush1.bf16.msra.mxu0 0
        %792 = vmatprep.subr.bf16.mxu0 0
        %793 = vmatpush1.bf16.msra.mxu0 0
        %794 = vmatprep.subr.bf16.mxu0 0
        %795 = vmatpush1.bf16.msra.mxu0 0
        %796 = vmatprep.subr.bf16.mxu0 0
        %797 = vmatpush1.bf16.msra.mxu0 0
        %798 = vmatprep.subr.bf16.mxu0 0
        %799 = vmatpush1.bf16.msra.mxu0 0
        %800 = vmatprep.subr.bf16.mxu0 0
        %801 = vmatpush1.bf16.msra.mxu0 0
        %802 = vmatprep.subr.bf16.mxu0 0
        %803 = vmatpush1.bf16.msra.mxu0 0
        %804 = vmatprep.mubr.bf16.mxu0 0
        %805 = vmatmul.mubr.bf16.gmra.mrb[0].mxu0 %v767
        %v806 = vpop.f32.mrb[0].mxu0
        %v807 = vadd.f32 0.0, %v806
        %v808 = vpop.f32.mrb[0].mxu0
        %v809 = vpop.f32.mrb[0].mxu0
        %v810 = vpop.f32.mrb[0].mxu0
        %811 = vdwg.mxu0
        %v812 = vadd.f32 %v761, %v807
        %s813 = scalar_lea.vmem %s3, 16
        %v814 = vld [vmem:[%s813] sm:$0xf]
        %815 = vrot.lane.b32.xlu0 %v614, 117
        %v816 = vpop.permute.xlu0 %815
        %v818 = vsel %vm617, %v814, 0
        %v821 = vsel %vm621, %v816, 0
        %823 = vmatprep.subr.bf16.mxu0 0
        %824 = vmatpush1.bf16.msra.mxu0 %v821
        %825 = vmatprep.subr.bf16.mxu0 0
        %826 = vmatpush1.bf16.msra.mxu0 0
        %827 = vmatprep.subr.bf16.mxu0 0
        %828 = vmatpush1.bf16.msra.mxu0 0
        %829 = vmatprep.subr.bf16.mxu0 0
        %830 = vmatpush1.bf16.msra.mxu0 0
        %831 = vmatprep.subr.bf16.mxu0 0
        %832 = vmatpush1.bf16.msra.mxu0 0
        %833 = vmatprep.subr.bf16.mxu0 0
        %834 = vmatpush1.bf16.msra.mxu0 0
        %835 = vmatprep.subr.bf16.mxu0 0
        %836 = vmatpush1.bf16.msra.mxu0 0
        %837 = vmatprep.subr.bf16.mxu0 0
        %838 = vmatpush1.bf16.msra.mxu0 0
        %839 = vmatprep.subr.bf16.mxu0 0
        %840 = vmatpush1.bf16.msra.mxu0 0
        %841 = vmatprep.subr.bf16.mxu0 0
        %842 = vmatpush1.bf16.msra.mxu0 0
        %843 = vmatprep.subr.bf16.mxu0 0
        %844 = vmatpush1.bf16.msra.mxu0 0
        %845 = vmatprep.subr.bf16.mxu0 0
        %846 = vmatpush1.bf16.msra.mxu0 0
        %847 = vmatprep.subr.bf16.mxu0 0
        %848 = vmatpush1.bf16.msra.mxu0 0
        %849 = vmatprep.subr.bf16.mxu0 0
        %850 = vmatpush1.bf16.msra.mxu0 0
        %851 = vmatprep.subr.bf16.mxu0 0
        %852 = vmatpush1.bf16.msra.mxu0 0
        %853 = vmatprep.subr.bf16.mxu0 0
        %854 = vmatpush1.bf16.msra.mxu0 0
        %855 = vmatprep.mubr.bf16.mxu0 0
        %856 = vmatmul.mubr.bf16.gmra.mrb[0].mxu0 %v818
        %v857 = vpop.f32.mrb[0].mxu0
        %v858 = vadd.f32 0.0, %v857
        %v859 = vpop.f32.mrb[0].mxu0
        %v860 = vpop.f32.mrb[0].mxu0
        %v861 = vpop.f32.mrb[0].mxu0
        %862 = vdwg.mxu0
        %v863 = vadd.f32 %v812, %v858
        %s864 = scalar_lea.vmem %s3, 20
        %v865 = vld [vmem:[%s864] sm:$0xf]
        %866 = vrot.lane.b32.xlu0 %v614, 116
        %v867 = vpop.permute.xlu0 %866
        %v869 = vsel %vm617, %v865, 0
        %v872 = vsel %vm621, %v867, 0
        %874 = vmatprep.subr.bf16.mxu0 0
        %875 = vmatpush1.bf16.msra.mxu0 %v872
        %876 = vmatprep.subr.bf16.mxu0 0
        %877 = vmatpush1.bf16.msra.mxu0 0
        %878 = vmatprep.subr.bf16.mxu0 0
        %879 = vmatpush1.bf16.msra.mxu0 0
        %880 = vmatprep.subr.bf16.mxu0 0
        %881 = vmatpush1.bf16.msra.mxu0 0
        %882 = vmatprep.subr.bf16.mxu0 0
        %883 = vmatpush1.bf16.msra.mxu0 0
        %884 = vmatprep.subr.bf16.mxu0 0
        %885 = vmatpush1.bf16.msra.mxu0 0
        %886 = vmatprep.subr.bf16.mxu0 0
        %887 = vmatpush1.bf16.msra.mxu0 0
        %888 = vmatprep.subr.bf16.mxu0 0
        %889 = vmatpush1.bf16.msra.mxu0 0
        %890 = vmatprep.subr.bf16.mxu0 0
        %891 = vmatpush1.bf16.msra.mxu0 0
        %892 = vmatprep.subr.bf16.mxu0 0
        %893 = vmatpush1.bf16.msra.mxu0 0
        %894 = vmatprep.subr.bf16.mxu0 0
        %895 = vmatpush1.bf16.msra.mxu0 0
        %896 = vmatprep.subr.bf16.mxu0 0
        %897 = vmatpush1.bf16.msra.mxu0 0
        %898 = vmatprep.subr.bf16.mxu0 0
        %899 = vmatpush1.bf16.msra.mxu0 0
        %900 = vmatprep.subr.bf16.mxu0 0
        %901 = vmatpush1.bf16.msra.mxu0 0
        %902 = vmatprep.subr.bf16.mxu0 0
        %903 = vmatpush1.bf16.msra.mxu0 0
        %904 = vmatprep.subr.bf16.mxu0 0
        %905 = vmatpush1.bf16.msra.mxu0 0
        %906 = vmatprep.mubr.bf16.mxu0 0
        %907 = vmatmul.mubr.bf16.gmra.mrb[0].mxu0 %v869
        %v908 = vpop.f32.mrb[0].mxu0
        %v909 = vadd.f32 0.0, %v908
        %v910 = vpop.f32.mrb[0].mxu0
        %v911 = vpop.f32.mrb[0].mxu0
        %v912 = vpop.f32.mrb[0].mxu0
        %913 = vdwg.mxu0
        %v914 = vadd.f32 %v863, %v909
        %s915 = scalar_lea.vmem %s3, 24
        %v916 = vld [vmem:[%s915] sm:$0xf]
        %917 = vrot.lane.b32.xlu0 %v614, 108
        %v918 = vpop.permute.xlu0 %917
        %v920 = vsel %vm617, %v916, 0
        %v923 = vsel %vm621, %v918, 0
        %925 = vmatprep.subr.bf16.mxu0 0
        %926 = vmatpush1.bf16.msra.mxu0 %v923
        %927 = vmatprep.subr.bf16.mxu0 0
        %928 = vmatpush1.bf16.msra.mxu0 0
        %929 = vmatprep.subr.bf16.mxu0 0
        %930 = vmatpush1.bf16.msra.mxu0 0
        %931 = vmatprep.subr.bf16.mxu0 0
        %932 = vmatpush1.bf16.msra.mxu0 0
        %933 = vmatprep.subr.bf16.mxu0 0
        %934 = vmatpush1.bf16.msra.mxu0 0
        %935 = vmatprep.subr.bf16.mxu0 0
        %936 = vmatpush1.bf16.msra.mxu0 0
        %937 = vmatprep.subr.bf16.mxu0 0
        %938 = vmatpush1.bf16.msra.mxu0 0
        %939 = vmatprep.subr.bf16.mxu0 0
        %940 = vmatpush1.bf16.msra.mxu0 0
        %941 = vmatprep.subr.bf16.mxu0 0
        %942 = vmatpush1.bf16.msra.mxu0 0
        %943 = vmatprep.subr.bf16.mxu0 0
        %944 = vmatpush1.bf16.msra.mxu0 0
        %945 = vmatprep.subr.bf16.mxu0 0
        %946 = vmatpush1.bf16.msra.mxu0 0
        %947 = vmatprep.subr.bf16.mxu0 0
        %948 = vmatpush1.bf16.msra.mxu0 0
        %949 = vmatprep.subr.bf16.mxu0 0
        %950 = vmatpush1.bf16.msra.mxu0 0
        %951 = vmatprep.subr.bf16.mxu0 0
        %952 = vmatpush1.bf16.msra.mxu0 0
        %953 = vmatprep.subr.bf16.mxu0 0
        %954 = vmatpush1.bf16.msra.mxu0 0
        %955 = vmatprep.subr.bf16.mxu0 0
        %956 = vmatpush1.bf16.msra.mxu0 0
        %957 = vmatprep.mubr.bf16.mxu0 0
        %958 = vmatmul.mubr.bf16.gmra.mrb[0].mxu0 %v920
        %v959 = vpop.f32.mrb[0].mxu0
        %v960 = vadd.f32 0.0, %v959
        %v961 = vpop.f32.mrb[0].mxu0
        %v962 = vpop.f32.mrb[0].mxu0
        %v963 = vpop.f32.mrb[0].mxu0
        %964 = vdwg.mxu0
        %v965 = vadd.f32 %v914, %v960
        %s966 = scalar_lea.vmem %s3, 28
        %v967 = vld [vmem:[%s966] sm:$0xf]
        %968 = vrot.lane.b32.xlu0 %v614, 107
        %v969 = vpop.permute.xlu0 %968
        %v971 = vsel %vm617, %v967, 0
        %v974 = vsel %vm621, %v969, 0
        %976 = vmatprep.subr.bf16.mxu0 0
        %977 = vmatpush1.bf16.msra.mxu0 %v974
        %978 = vmatprep.subr.bf16.mxu0 0
        %979 = vmatpush1.bf16.msra.mxu0 0
        %980 = vmatprep.subr.bf16.mxu0 0
        %981 = vmatpush1.bf16.msra.mxu0 0
        %982 = vmatprep.subr.bf16.mxu0 0
        %983 = vmatpush1.bf16.msra.mxu0 0
        %984 = vmatprep.subr.bf16.mxu0 0
        %985 = vmatpush1.bf16.msra.mxu0 0
        %986 = vmatprep.subr.bf16.mxu0 0
        %987 = vmatpush1.bf16.msra.mxu0 0
        %988 = vmatprep.subr.bf16.mxu0 0
        %989 = vmatpush1.bf16.msra.mxu0 0
        %990 = vmatprep.subr.bf16.mxu0 0
        %991 = vmatpush1.bf16.msra.mxu0 0
        %992 = vmatprep.subr.bf16.mxu0 0
        %993 = vmatpush1.bf16.msra.mxu0 0
        %994 = vmatprep.subr.bf16.mxu0 0
        %995 = vmatpush1.bf16.msra.mxu0 0
        %996 = vmatprep.subr.bf16.mxu0 0
        %997 = vmatpush1.bf16.msra.mxu0 0
        %998 = vmatprep.subr.bf16.mxu0 0
        %999 = vmatpush1.bf16.msra.mxu0 0
        %1000 = vmatprep.subr.bf16.mxu0 0
        %1001 = vmatpush1.bf16.msra.mxu0 0
        %1002 = vmatprep.subr.bf16.mxu0 0
        %1003 = vmatpush1.bf16.msra.mxu0 0
        %1004 = vmatprep.subr.bf16.mxu0 0
        %1005 = vmatpush1.bf16.msra.mxu0 0
        %1006 = vmatprep.subr.bf16.mxu0 0
        %1007 = vmatpush1.bf16.msra.mxu0 0
        %1008 = vmatprep.mubr.bf16.mxu0 0
        %1009 = vmatmul.mubr.bf16.gmra.mrb[0].mxu0 %v971
        %v1010 = vpop.f32.mrb[0].mxu0
        %v1011 = vadd.f32 0.0, %v1010
        %v1012 = vpop.f32.mrb[0].mxu0
        %v1013 = vpop.f32.mrb[0].mxu0
        %v1014 = vpop.f32.mrb[0].mxu0
        %1015 = vdwg.mxu0
        %v1016 = vadd.f32 %v965, %v1011
        %s1017 = scalar_lea.vmem %s3, 32
        %v1018 = vld [vmem:[%s1017] sm:$0xf]
        %1019 = vrot.lane.b32.xlu0 %v614, 106
        %v1020 = vpop.permute.xlu0 %1019
        %v1022 = vsel %vm617, %v1018, 0
        %v1025 = vsel %vm621, %v1020, 0
        %1027 = vmatprep.subr.bf16.mxu0 0
        %1028 = vmatpush1.bf16.msra.mxu0 %v1025
        %1029 = vmatprep.subr.bf16.mxu0 0
        %1030 = vmatpush1.bf16.msra.mxu0 0
        %1031 = vmatprep.subr.bf16.mxu0 0
        %1032 = vmatpush1.bf16.msra.mxu0 0
        %1033 = vmatprep.subr.bf16.mxu0 0
        %1034 = vmatpush1.bf16.msra.mxu0 0
        %1035 = vmatprep.subr.bf16.mxu0 0
        %1036 = vmatpush1.bf16.msra.mxu0 0
        %1037 = vmatprep.subr.bf16.mxu0 0
        %1038 = vmatpush1.bf16.msra.mxu0 0
        %1039 = vmatprep.subr.bf16.mxu0 0
        %1040 = vmatpush1.bf16.msra.mxu0 0
        %1041 = vmatprep.subr.bf16.mxu0 0
        %1042 = vmatpush1.bf16.msra.mxu0 0
        %1043 = vmatprep.subr.bf16.mxu0 0
        %1044 = vmatpush1.bf16.msra.mxu0 0
        %1045 = vmatprep.subr.bf16.mxu0 0
        %1046 = vmatpush1.bf16.msra.mxu0 0
        %1047 = vmatprep.subr.bf16.mxu0 0
        %1048 = vmatpush1.bf16.msra.mxu0 0
        %1049 = vmatprep.subr.bf16.mxu0 0
        %1050 = vmatpush1.bf16.msra.mxu0 0
        %1051 = vmatprep.subr.bf16.mxu0 0
        %1052 = vmatpush1.bf16.msra.mxu0 0
        %1053 = vmatprep.subr.bf16.mxu0 0
        %1054 = vmatpush1.bf16.msra.mxu0 0
        %1055 = vmatprep.subr.bf16.mxu0 0
        %1056 = vmatpush1.bf16.msra.mxu0 0
        %1057 = vmatprep.subr.bf16.mxu0 0
        %1058 = vmatpush1.bf16.msra.mxu0 0
        %1059 = vmatprep.mubr.bf16.mxu0 0
        %1060 = vmatmul.mubr.bf16.gmra.mrb[0].mxu0 %v1022
        %v1061 = vpop.f32.mrb[0].mxu0
        %v1062 = vadd.f32 0.0, %v1061
        %v1063 = vpop.f32.mrb[0].mxu0
        %v1064 = vpop.f32.mrb[0].mxu0
        %v1065 = vpop.f32.mrb[0].mxu0
        %1066 = vdwg.mxu0
        %v1067 = vadd.f32 %v1016, %v1062
        %v1068 = vmul.f32 %v1067, %v594
        %vm1069 = vcmask 654336
        %v1070 = vsel %vm1069, %v1068, 0.0
        %1071 = vadd.xlane.f32.xlu0 %v1070
        %v1072 = vpop.xlane.xlu0 %1071
        %v1073 = vmul.f32 %v1072, 0.015625
        %v1074 = vsub.f32 %v1067, %v1073
        %v1075 = vmul.f32 %v1074, %v1074
        %v1076 = vmul.f32 %v1075, %v594
        %v1077 = vsel %vm1069, %v1076, 0.0
        %1078 = vadd.xlane.f32.xlu0 %v1077
        %v1079 = vpop.xlane.xlu0 %1078
        %v1080 = vmul.f32 %v1079, 0.015625
        %v1081 = vadd.f32 %v1080, 1e-05
        %v1082 = vrsqrt.pop %v1081
        %v1083 = vmul.f32 %v1074, %v1082
        %v1084 = vld [vmem:[%s4] sm:$0xff]
        %1086 = vset.pattern.permute.xlu0 0
        %1087 = vperm.xlu0 %1086, %v1084
        %v1088 = vpop.permute.xlu0 %1087
        %v1090 = vmul.f32 %v1083, %v1088
        %v1091 = vld [vmem:[%s5] sm:$0xff]
        %1093 = vset.pattern.permute.xlu0 0
        %1094 = vperm.xlu0 %1093, %v1091
        %v1095 = vpop.permute.xlu0 %1094
        %v1097 = vadd.f32 %v1090, %v1095
        %v1098 = vmax.f32 %v1097, 0.0
        %v1099 = vadd.f32 %v1098, %v583
        %1100 = vst.msk [vmem:[#allocation2] sm:$0xf] %vm588, 0
        %v1101 = vmul.f32 %v1099, %v594
        %v1102 = vpack.c.bf16 %v1101, %v1101
        %v1104 = vunpack.c.l.b16 %v1102
        %v1105 = vpack.c.b16 %v1104, %v1104
        %1106 = vrot.lane.b32.xlu0 %v1105, 11
        %v1107 = vpop.permute.xlu0 %1106
        %1109 = vst.msk [vmem:[#allocation2] sm:$0xf] %vm604, %v1107
        %1110 = vst.msk [vmem:[#allocation2] sm:$0xf] %vm606, 0
        %v1111 = vld [vmem:[#allocation2] sm:$0xf]
        %v1112 = vld [vmem:[%s6] sm:$0xf]
        %s1113 = scalar_lea.vmem %s6, 4
        %v1114 = vld [vmem:[%s1113] sm:$0xf]
        %v1116 = vunpack.c.l.b16 %v1111
        %v1117 = vpack.c.b16 %v1116, %v1116
        %1118 = vrot.lane.b32.xlu0 %v1117, 127
        %v1119 = vpop.permute.xlu0 %1118
        %v1121 = vsel %vm617, %v1114, 0
        %v1124 = vsel %vm621, %v1119, 0
        %1126 = vmatprep.subr.bf16.mxu0 0
        %1127 = vmatpush1.bf16.msra.mxu0 %v1124
        %1128 = vmatprep.subr.bf16.mxu0 0
        %1129 = vmatpush1.bf16.msra.mxu0 0
        %1130 = vmatprep.subr.bf16.mxu0 0
        %1131 = vmatpush1.bf16.msra.mxu0 0
        %1132 = vmatprep.subr.bf16.mxu0 0
        %1133 = vmatpush1.bf16.msra.mxu0 0
        %1134 = vmatprep.subr.bf16.mxu0 0
        %1135 = vmatpush1.bf16.msra.mxu0 0
        %1136 = vmatprep.subr.bf16.mxu0 0
        %1137 = vmatpush1.bf16.msra.mxu0 0
        %1138 = vmatprep.subr.bf16.mxu0 0
        %1139 = vmatpush1.bf16.msra.mxu0 0
        %1140 = vmatprep.subr.bf16.mxu0 0
        %1141 = vmatpush1.bf16.msra.mxu0 0
        %1142 = vmatprep.subr.bf16.mxu0 0
        %1143 = vmatpush1.bf16.msra.mxu0 0
        %1144 = vmatprep.subr.bf16.mxu0 0
        %1145 = vmatpush1.bf16.msra.mxu0 0
        %1146 = vmatprep.subr.bf16.mxu0 0
        %1147 = vmatpush1.bf16.msra.mxu0 0
        %1148 = vmatprep.subr.bf16.mxu0 0
        %1149 = vmatpush1.bf16.msra.mxu0 0
        %1150 = vmatprep.subr.bf16.mxu0 0
        %1151 = vmatpush1.bf16.msra.mxu0 0
        %1152 = vmatprep.subr.bf16.mxu0 0
        %1153 = vmatpush1.bf16.msra.mxu0 0
        %1154 = vmatprep.subr.bf16.mxu0 0
        %1155 = vmatpush1.bf16.msra.mxu0 0
        %1156 = vmatprep.subr.bf16.mxu0 0
        %1157 = vmatpush1.bf16.msra.mxu0 0
        %1158 = vmatprep.mubr.bf16.mxu0 0
        %1159 = vmatmul.mubr.bf16.gmra.mrb[0].mxu0 %v1121
        %v1160 = vpop.f32.mrb[0].mxu0
        %v1161 = vadd.f32 0.0, %v1160
        %v1162 = vpop.f32.mrb[0].mxu0
        %v1163 = vpop.f32.mrb[0].mxu0
        %v1164 = vpop.f32.mrb[0].mxu0
        %1165 = vdwg.mxu0
        %v1167 = vsel %vm617, %v1112, 0
        %v1170 = vsel %vm621, %v1111, 0
        %1172 = vmatprep.subr.bf16.mxu0 0
        %1173 = vmatpush1.bf16.msra.mxu0 %v1170
        %1174 = vmatprep.subr.bf16.mxu0 0
        %1175 = vmatpush1.bf16.msra.mxu0 0
        %1176 = vmatprep.subr.bf16.mxu0 0
        %1177 = vmatpush1.bf16.msra.mxu0 0
        %1178 = vmatprep.subr.bf16.mxu0 0
        %1179 = vmatpush1.bf16.msra.mxu0 0
        %1180 = vmatprep.subr.bf16.mxu0 0
        %1181 = vmatpush1.bf16.msra.mxu0 0
        %1182 = vmatprep.subr.bf16.mxu0 0
        %1183 = vmatpush1.bf16.msra.mxu0 0
        %1184 = vmatprep.subr.bf16.mxu0 0
        %1185 = vmatpush1.bf16.msra.mxu0 0
        %1186 = vmatprep.subr.bf16.mxu0 0
        %1187 = vmatpush1.bf16.msra.mxu0 0
        %1188 = vmatprep.subr.bf16.mxu0 0
        %1189 = vmatpush1.bf16.msra.mxu0 0
        %1190 = vmatprep.subr.bf16.mxu0 0
        %1191 = vmatpush1.bf16.msra.mxu0 0
        %1192 = vmatprep.subr.bf16.mxu0 0
        %1193 = vmatpush1.bf16.msra.mxu0 0
        %1194 = vmatprep.subr.bf16.mxu0 0
        %1195 = vmatpush1.bf16.msra.mxu0 0
        %1196 = vmatprep.subr.bf16.mxu0 0
        %1197 = vmatpush1.bf16.msra.mxu0 0
        %1198 = vmatprep.subr.bf16.mxu0 0
        %1199 = vmatpush1.bf16.msra.mxu0 0
        %1200 = vmatprep.subr.bf16.mxu0 0
        %1201 = vmatpush1.bf16.msra.mxu0 0
        %1202 = vmatprep.subr.bf16.mxu0 0
        %1203 = vmatpush1.bf16.msra.mxu0 0
        %1204 = vmatprep.mubr.bf16.mxu0 0
        %1205 = vmatmul.mubr.bf16.gmra.mrb[0].mxu0 %v1167
        %v1206 = vpop.f32.mrb[0].mxu0
        %v1207 = vadd.f32 %v1161, %v1206
        %v1208 = vpop.f32.mrb[0].mxu0
        %v1209 = vpop.f32.mrb[0].mxu0
        %v1210 = vpop.f32.mrb[0].mxu0
        %1211 = vdwg.mxu0
        %s1212 = scalar_lea.vmem %s6, 8
        %v1213 = vld [vmem:[%s1212] sm:$0xf]
        %1214 = vrot.lane.b32.xlu0 %v1117, 126
        %v1215 = vpop.permute.xlu0 %1214
        %v1217 = vsel %vm617, %v1213, 0
        %v1220 = vsel %vm621, %v1215, 0
        %1222 = vmatprep.subr.bf16.mxu0 0
        %1223 = vmatpush1.bf16.msra.mxu0 %v1220
        %1224 = vmatprep.subr.bf16.mxu0 0
        %1225 = vmatpush1.bf16.msra.mxu0 0
        %1226 = vmatprep.subr.bf16.mxu0 0
        %1227 = vmatpush1.bf16.msra.mxu0 0
        %1228 = vmatprep.subr.bf16.mxu0 0
        %1229 = vmatpush1.bf16.msra.mxu0 0
        %1230 = vmatprep.subr.bf16.mxu0 0
        %1231 = vmatpush1.bf16.msra.mxu0 0
        %1232 = vmatprep.subr.bf16.mxu0 0
        %1233 = vmatpush1.bf16.msra.mxu0 0
        %1234 = vmatprep.subr.bf16.mxu0 0
        %1235 = vmatpush1.bf16.msra.mxu0 0
        %1236 = vmatprep.subr.bf16.mxu0 0
        %1237 = vmatpush1.bf16.msra.mxu0 0
        %1238 = vmatprep.subr.bf16.mxu0 0
        %1239 = vmatpush1.bf16.msra.mxu0 0
        %1240 = vmatprep.subr.bf16.mxu0 0
        %1241 = vmatpush1.bf16.msra.mxu0 0
        %1242 = vmatprep.subr.bf16.mxu0 0
        %1243 = vmatpush1.bf16.msra.mxu0 0
        %1244 = vmatprep.subr.bf16.mxu0 0
        %1245 = vmatpush1.bf16.msra.mxu0 0
        %1246 = vmatprep.subr.bf16.mxu0 0
        %1247 = vmatpush1.bf16.msra.mxu0 0
        %1248 = vmatprep.subr.bf16.mxu0 0
        %1249 = vmatpush1.bf16.msra.mxu0 0
        %1250 = vmatprep.subr.bf16.mxu0 0
        %1251 = vmatpush1.bf16.msra.mxu0 0
        %1252 = vmatprep.subr.bf16.mxu0 0
        %1253 = vmatpush1.bf16.msra.mxu0 0
        %1254 = vmatprep.mubr.bf16.mxu0 0
        %1255 = vmatmul.mubr.bf16.gmra.mrb[0].mxu0 %v1217
        %v1256 = vpop.f32.mrb[0].mxu0
        %v1257 = vadd.f32 0.0, %v1256
        %v1258 = vpop.f32.mrb[0].mxu0
        %v1259 = vpop.f32.mrb[0].mxu0
        %v1260 = vpop.f32.mrb[0].mxu0
        %1261 = vdwg.mxu0
        %v1262 = vadd.f32 %v1207, %v1257
        %s1263 = scalar_lea.vmem %s6, 12
        %v1264 = vld [vmem:[%s1263] sm:$0xf]
        %1265 = vrot.lane.b32.xlu0 %v1117, 118
        %v1266 = vpop.permute.xlu0 %1265
        %v1268 = vsel %vm617, %v1264, 0
        %v1271 = vsel %vm621, %v1266, 0
        %1273 = vmatprep.subr.bf16.mxu0 0
        %1274 = vmatpush1.bf16.msra.mxu0 %v1271
        %1275 = vmatprep.subr.bf16.mxu0 0
        %1276 = vmatpush1.bf16.msra.mxu0 0
        %1277 = vmatprep.subr.bf16.mxu0 0
        %1278 = vmatpush1.bf16.msra.mxu0 0
        %1279 = vmatprep.subr.bf16.mxu0 0
        %1280 = vmatpush1.bf16.msra.mxu0 0
        %1281 = vmatprep.subr.bf16.mxu0 0
        %1282 = vmatpush1.bf16.msra.mxu0 0
        %1283 = vmatprep.subr.bf16.mxu0 0
        %1284 = vmatpush1.bf16.msra.mxu0 0
        %1285 = vmatprep.subr.bf16.mxu0 0
        %1286 = vmatpush1.bf16.msra.mxu0 0
        %1287 = vmatprep.subr.bf16.mxu0 0
        %1288 = vmatpush1.bf16.msra.mxu0 0
        %1289 = vmatprep.subr.bf16.mxu0 0
        %1290 = vmatpush1.bf16.msra.mxu0 0
        %1291 = vmatprep.subr.bf16.mxu0 0
        %1292 = vmatpush1.bf16.msra.mxu0 0
        %1293 = vmatprep.subr.bf16.mxu0 0
        %1294 = vmatpush1.bf16.msra.mxu0 0
        %1295 = vmatprep.subr.bf16.mxu0 0
        %1296 = vmatpush1.bf16.msra.mxu0 0
        %1297 = vmatprep.subr.bf16.mxu0 0
        %1298 = vmatpush1.bf16.msra.mxu0 0
        %1299 = vmatprep.subr.bf16.mxu0 0
        %1300 = vmatpush1.bf16.msra.mxu0 0
        %1301 = vmatprep.subr.bf16.mxu0 0
        %1302 = vmatpush1.bf16.msra.mxu0 0
        %1303 = vmatprep.subr.bf16.mxu0 0
        %1304 = vmatpush1.bf16.msra.mxu0 0
        %1305 = vmatprep.mubr.bf16.mxu0 0
        %1306 = vmatmul.mubr.bf16.gmra.mrb[0].mxu0 %v1268
        %v1307 = vpop.f32.mrb[0].mxu0
        %v1308 = vadd.f32 0.0, %v1307
        %v1309 = vpop.f32.mrb[0].mxu0
        %v1310 = vpop.f32.mrb[0].mxu0
        %v1311 = vpop.f32.mrb[0].mxu0
        %1312 = vdwg.mxu0
        %v1313 = vadd.f32 %v1262, %v1308
        %s1314 = scalar_lea.vmem %s6, 16
        %v1315 = vld [vmem:[%s1314] sm:$0xf]
        %1316 = vrot.lane.b32.xlu0 %v1117, 117
        %v1317 = vpop.permute.xlu0 %1316
        %v1319 = vsel %vm617, %v1315, 0
        %v1322 = vsel %vm621, %v1317, 0
        %1324 = vmatprep.subr.bf16.mxu0 0
        %1325 = vmatpush1.bf16.msra.mxu0 %v1322
        %1326 = vmatprep.subr.bf16.mxu0 0
        %1327 = vmatpush1.bf16.msra.mxu0 0
        %1328 = vmatprep.subr.bf16.mxu0 0
        %1329 = vmatpush1.bf16.msra.mxu0 0
        %1330 = vmatprep.subr.bf16.mxu0 0
        %1331 = vmatpush1.bf16.msra.mxu0 0
        %1332 = vmatprep.subr.bf16.mxu0 0
        %1333 = vmatpush1.bf16.msra.mxu0 0
        %1334 = vmatprep.subr.bf16.mxu0 0
        %1335 = vmatpush1.bf16.msra.mxu0 0
        %1336 = vmatprep.subr.bf16.mxu0 0
        %1337 = vmatpush1.bf16.msra.mxu0 0
        %1338 = vmatprep.subr.bf16.mxu0 0
        %1339 = vmatpush1.bf16.msra.mxu0 0
        %1340 = vmatprep.subr.bf16.mxu0 0
        %1341 = vmatpush1.bf16.msra.mxu0 0
        %1342 = vmatprep.subr.bf16.mxu0 0
        %1343 = vmatpush1.bf16.msra.mxu0 0
        %1344 = vmatprep.subr.bf16.mxu0 0
        %1345 = vmatpush1.bf16.msra.mxu0 0
        %1346 = vmatprep.subr.bf16.mxu0 0
        %1347 = vmatpush1.bf16.msra.mxu0 0
        %1348 = vmatprep.subr.bf16.mxu0 0
        %1349 = vmatpush1.bf16.msra.mxu0 0
        %1350 = vmatprep.subr.bf16.mxu0 0
        %1351 = vmatpush1.bf16.msra.mxu0 0
        %1352 = vmatprep.subr.bf16.mxu0 0
        %1353 = vmatpush1.bf16.msra.mxu0 0
        %1354 = vmatprep.subr.bf16.mxu0 0
        %1355 = vmatpush1.bf16.msra.mxu0 0
        %1356 = vmatprep.mubr.bf16.mxu0 0
        %1357 = vmatmul.mubr.bf16.gmra.mrb[0].mxu0 %v1319
        %v1358 = vpop.f32.mrb[0].mxu0
        %v1359 = vadd.f32 0.0, %v1358
        %v1360 = vpop.f32.mrb[0].mxu0
        %v1361 = vpop.f32.mrb[0].mxu0
        %v1362 = vpop.f32.mrb[0].mxu0
        %1363 = vdwg.mxu0
        %v1364 = vadd.f32 %v1313, %v1359
        %s1365 = scalar_lea.vmem %s6, 20
        %v1366 = vld [vmem:[%s1365] sm:$0xf]
        %1367 = vrot.lane.b32.xlu0 %v1117, 116
        %v1368 = vpop.permute.xlu0 %1367
        %v1370 = vsel %vm617, %v1366, 0
        %v1373 = vsel %vm621, %v1368, 0
        %1375 = vmatprep.subr.bf16.mxu0 0
        %1376 = vmatpush1.bf16.msra.mxu0 %v1373
        %1377 = vmatprep.subr.bf16.mxu0 0
        %1378 = vmatpush1.bf16.msra.mxu0 0
        %1379 = vmatprep.subr.bf16.mxu0 0
        %1380 = vmatpush1.bf16.msra.mxu0 0
        %1381 = vmatprep.subr.bf16.mxu0 0
        %1382 = vmatpush1.bf16.msra.mxu0 0
        %1383 = vmatprep.subr.bf16.mxu0 0
        %1384 = vmatpush1.bf16.msra.mxu0 0
        %1385 = vmatprep.subr.bf16.mxu0 0
        %1386 = vmatpush1.bf16.msra.mxu0 0
        %1387 = vmatprep.subr.bf16.mxu0 0
        %1388 = vmatpush1.bf16.msra.mxu0 0
        %1389 = vmatprep.subr.bf16.mxu0 0
        %1390 = vmatpush1.bf16.msra.mxu0 0
        %1391 = vmatprep.subr.bf16.mxu0 0
        %1392 = vmatpush1.bf16.msra.mxu0 0
        %1393 = vmatprep.subr.bf16.mxu0 0
        %1394 = vmatpush1.bf16.msra.mxu0 0
        %1395 = vmatprep.subr.bf16.mxu0 0
        %1396 = vmatpush1.bf16.msra.mxu0 0
        %1397 = vmatprep.subr.bf16.mxu0 0
        %1398 = vmatpush1.bf16.msra.mxu0 0
        %1399 = vmatprep.subr.bf16.mxu0 0
        %1400 = vmatpush1.bf16.msra.mxu0 0
        %1401 = vmatprep.subr.bf16.mxu0 0
        %1402 = vmatpush1.bf16.msra.mxu0 0
        %1403 = vmatprep.subr.bf16.mxu0 0
        %1404 = vmatpush1.bf16.msra.mxu0 0
        %1405 = vmatprep.subr.bf16.mxu0 0
        %1406 = vmatpush1.bf16.msra.mxu0 0
        %1407 = vmatprep.mubr.bf16.mxu0 0
        %1408 = vmatmul.mubr.bf16.gmra.mrb[0].mxu0 %v1370
        %v1409 = vpop.f32.mrb[0].mxu0
        %v1410 = vadd.f32 0.0, %v1409
        %v1411 = vpop.f32.mrb[0].mxu0
        %v1412 = vpop.f32.mrb[0].mxu0
        %v1413 = vpop.f32.mrb[0].mxu0
        %1414 = vdwg.mxu0
        %v1415 = vadd.f32 %v1364, %v1410
        %s1416 = scalar_lea.vmem %s6, 24
        %v1417 = vld [vmem:[%s1416] sm:$0xf]
        %1418 = vrot.lane.b32.xlu0 %v1117, 108
        %v1419 = vpop.permute.xlu0 %1418
        %v1421 = vsel %vm617, %v1417, 0
        %v1424 = vsel %vm621, %v1419, 0
        %1426 = vmatprep.subr.bf16.mxu0 0
        %1427 = vmatpush1.bf16.msra.mxu0 %v1424
        %1428 = vmatprep.subr.bf16.mxu0 0
        %1429 = vmatpush1.bf16.msra.mxu0 0
        %1430 = vmatprep.subr.bf16.mxu0 0
        %1431 = vmatpush1.bf16.msra.mxu0 0
        %1432 = vmatprep.subr.bf16.mxu0 0
        %1433 = vmatpush1.bf16.msra.mxu0 0
        %1434 = vmatprep.subr.bf16.mxu0 0
        %1435 = vmatpush1.bf16.msra.mxu0 0
        %1436 = vmatprep.subr.bf16.mxu0 0
        %1437 = vmatpush1.bf16.msra.mxu0 0
        %1438 = vmatprep.subr.bf16.mxu0 0
        %1439 = vmatpush1.bf16.msra.mxu0 0
        %1440 = vmatprep.subr.bf16.mxu0 0
        %1441 = vmatpush1.bf16.msra.mxu0 0
        %1442 = vmatprep.subr.bf16.mxu0 0
        %1443 = vmatpush1.bf16.msra.mxu0 0
        %1444 = vmatprep.subr.bf16.mxu0 0
        %1445 = vmatpush1.bf16.msra.mxu0 0
        %1446 = vmatprep.subr.bf16.mxu0 0
        %1447 = vmatpush1.bf16.msra.mxu0 0
        %1448 = vmatprep.subr.bf16.mxu0 0
        %1449 = vmatpush1.bf16.msra.mxu0 0
        %1450 = vmatprep.subr.bf16.mxu0 0
        %1451 = vmatpush1.bf16.msra.mxu0 0
        %1452 = vmatprep.subr.bf16.mxu0 0
        %1453 = vmatpush1.bf16.msra.mxu0 0
        %1454 = vmatprep.subr.bf16.mxu0 0
        %1455 = vmatpush1.bf16.msra.mxu0 0
        %1456 = vmatprep.subr.bf16.mxu0 0
        %1457 = vmatpush1.bf16.msra.mxu0 0
        %1458 = vmatprep.mubr.bf16.mxu0 0
        %1459 = vmatmul.mubr.bf16.gmra.mrb[0].mxu0 %v1421
        %v1460 = vpop.f32.mrb[0].mxu0
        %v1461 = vadd.f32 0.0, %v1460
        %v1462 = vpop.f32.mrb[0].mxu0
        %v1463 = vpop.f32.mrb[0].mxu0
        %v1464 = vpop.f32.mrb[0].mxu0
        %1465 = vdwg.mxu0
        %v1466 = vadd.f32 %v1415, %v1461
        %s1467 = scalar_lea.vmem %s6, 28
        %v1468 = vld [vmem:[%s1467] sm:$0xf]
        %1469 = vrot.lane.b32.xlu0 %v1117, 107
        %v1470 = vpop.permute.xlu0 %1469
        %v1472 = vsel %vm617, %v1468, 0
        %v1475 = vsel %vm621, %v1470, 0
        %1477 = vmatprep.subr.bf16.mxu0 0
        %1478 = vmatpush1.bf16.msra.mxu0 %v1475
        %1479 = vmatprep.subr.bf16.mxu0 0
        %1480 = vmatpush1.bf16.msra.mxu0 0
        %1481 = vmatprep.subr.bf16.mxu0 0
        %1482 = vmatpush1.bf16.msra.mxu0 0
        %1483 = vmatprep.subr.bf16.mxu0 0
        %1484 = vmatpush1.bf16.msra.mxu0 0
        %1485 = vmatprep.subr.bf16.mxu0 0
        %1486 = vmatpush1.bf16.msra.mxu0 0
        %1487 = vmatprep.subr.bf16.mxu0 0
        %1488 = vmatpush1.bf16.msra.mxu0 0
        %1489 = vmatprep.subr.bf16.mxu0 0
        %1490 = vmatpush1.bf16.msra.mxu0 0
        %1491 = vmatprep.subr.bf16.mxu0 0
        %1492 = vmatpush1.bf16.msra.mxu0 0
        %1493 = vmatprep.subr.bf16.mxu0 0
        %1494 = vmatpush1.bf16.msra.mxu0 0
        %1495 = vmatprep.subr.bf16.mxu0 0
        %1496 = vmatpush1.bf16.msra.mxu0 0
        %1497 = vmatprep.subr.bf16.mxu0 0
        %1498 = vmatpush1.bf16.msra.mxu0 0
        %1499 = vmatprep.subr.bf16.mxu0 0
        %1500 = vmatpush1.bf16.msra.mxu0 0
        %1501 = vmatprep.subr.bf16.mxu0 0
        %1502 = vmatpush1.bf16.msra.mxu0 0
        %1503 = vmatprep.subr.bf16.mxu0 0
        %1504 = vmatpush1.bf16.msra.mxu0 0
        %1505 = vmatprep.subr.bf16.mxu0 0
        %1506 = vmatpush1.bf16.msra.mxu0 0
        %1507 = vmatprep.subr.bf16.mxu0 0
        %1508 = vmatpush1.bf16.msra.mxu0 0
        %1509 = vmatprep.mubr.bf16.mxu0 0
        %1510 = vmatmul.mubr.bf16.gmra.mrb[0].mxu0 %v1472
        %v1511 = vpop.f32.mrb[0].mxu0
        %v1512 = vadd.f32 0.0, %v1511
        %v1513 = vpop.f32.mrb[0].mxu0
        %v1514 = vpop.f32.mrb[0].mxu0
        %v1515 = vpop.f32.mrb[0].mxu0
        %1516 = vdwg.mxu0
        %v1517 = vadd.f32 %v1466, %v1512
        %s1518 = scalar_lea.vmem %s6, 32
        %v1519 = vld [vmem:[%s1518] sm:$0xf]
        %1520 = vrot.lane.b32.xlu0 %v1117, 106
        %v1521 = vpop.permute.xlu0 %1520
        %v1523 = vsel %vm617, %v1519, 0
        %v1526 = vsel %vm621, %v1521, 0
        %1528 = vmatprep.subr.bf16.mxu0 0
        %1529 = vmatpush1.bf16.msra.mxu0 %v1526
        %1530 = vmatprep.subr.bf16.mxu0 0
        %1531 = vmatpush1.bf16.msra.mxu0 0
        %1532 = vmatprep.subr.bf16.mxu0 0
        %1533 = vmatpush1.bf16.msra.mxu0 0
        %1534 = vmatprep.subr.bf16.mxu0 0
        %1535 = vmatpush1.bf16.msra.mxu0 0
        %1536 = vmatprep.subr.bf16.mxu0 0
        %1537 = vmatpush1.bf16.msra.mxu0 0
        %1538 = vmatprep.subr.bf16.mxu0 0
        %1539 = vmatpush1.bf16.msra.mxu0 0
        %1540 = vmatprep.subr.bf16.mxu0 0
        %1541 = vmatpush1.bf16.msra.mxu0 0
        %1542 = vmatprep.subr.bf16.mxu0 0
        %1543 = vmatpush1.bf16.msra.mxu0 0
        %1544 = vmatprep.subr.bf16.mxu0 0
        %1545 = vmatpush1.bf16.msra.mxu0 0
        %1546 = vmatprep.subr.bf16.mxu0 0
        %1547 = vmatpush1.bf16.msra.mxu0 0
        %1548 = vmatprep.subr.bf16.mxu0 0
        %1549 = vmatpush1.bf16.msra.mxu0 0
        %1550 = vmatprep.subr.bf16.mxu0 0
        %1551 = vmatpush1.bf16.msra.mxu0 0
        %1552 = vmatprep.subr.bf16.mxu0 0
        %1553 = vmatpush1.bf16.msra.mxu0 0
        %1554 = vmatprep.subr.bf16.mxu0 0
        %1555 = vmatpush1.bf16.msra.mxu0 0
        %1556 = vmatprep.subr.bf16.mxu0 0
        %1557 = vmatpush1.bf16.msra.mxu0 0
        %1558 = vmatprep.subr.bf16.mxu0 0
        %1559 = vmatpush1.bf16.msra.mxu0 0
        %1560 = vmatprep.mubr.bf16.mxu0 0
        %1561 = vmatmul.mubr.bf16.gmra.mrb[0].mxu0 %v1523
        %v1562 = vpop.f32.mrb[0].mxu0
        %v1563 = vadd.f32 0.0, %v1562
        %v1564 = vpop.f32.mrb[0].mxu0
        %v1565 = vpop.f32.mrb[0].mxu0
        %v1566 = vpop.f32.mrb[0].mxu0
        %1567 = vdwg.mxu0
        %v1568 = vadd.f32 %v1517, %v1563
        %v1569 = vmul.f32 %v1568, %v594
        %v1570 = vsel %vm1069, %v1569, 0.0
        %1571 = vadd.xlane.f32.xlu0 %v1570
        %v1572 = vpop.xlane.xlu0 %1571
        %v1573 = vmul.f32 %v1572, 0.015625
        %v1574 = vsub.f32 %v1568, %v1573
        %v1575 = vmul.f32 %v1574, %v1574
        %v1576 = vmul.f32 %v1575, %v594
        %v1577 = vsel %vm1069, %v1576, 0.0
        %1578 = vadd.xlane.f32.xlu0 %v1577
        %v1579 = vpop.xlane.xlu0 %1578
        %v1580 = vmul.f32 %v1579, 0.015625
        %v1581 = vadd.f32 %v1580, 1e-05
        %v1582 = vrsqrt.pop %v1581
        %v1583 = vmul.f32 %v1574, %v1582
        %v1584 = vld [vmem:[%s7] sm:$0xff]
        %1586 = vset.pattern.permute.xlu0 0
        %1587 = vperm.xlu0 %1586, %v1584
        %v1588 = vpop.permute.xlu0 %1587
        %v1590 = vmul.f32 %v1583, %v1588
        %v1591 = vld [vmem:[%s8] sm:$0xff]
        %1593 = vset.pattern.permute.xlu0 0
        %1594 = vperm.xlu0 %1593, %v1591
        %v1595 = vpop.permute.xlu0 %1594
        %v1597 = vadd.f32 %v1590, %v1595
        %v1598 = vmax.f32 %v1597, 0.0
        %v1599 = vadd.f32 %v1598, %v1099
        %v1600 = vld [vmem:[%s9] sm:$0xf]
        %v1601 = vld [vmem:[%s9 + $0x4] sm:$0xf]
        %v1602 = vpack.c.bf16 %v1599, %v1599
        %v1605 = vunpack.c.l.b16 %v1600
        %v1606 = vunpack.c.l.b16 %v1601
        %v1607 = vpack.c.b16 %v1606, %v1605
        %v1609 = vsel %vm617, %v1607, 0
        %v1612 = vsel %vm621, %v1602, 0
        %1614 = vmatprep.subr.bf16.mxu0 0
        %1615 = vmatpush1.bf16.msra.mxu0 %v1612
        %1616 = vmatprep.subr.bf16.mxu0 0
        %1617 = vmatpush1.bf16.msra.mxu0 0
        %1618 = vmatprep.subr.bf16.mxu0 0
        %1619 = vmatpush1.bf16.msra.mxu0 0
        %1620 = vmatprep.subr.bf16.mxu0 0
        %1621 = vmatpush1.bf16.msra.mxu0 0
        %1622 = vmatprep.subr.bf16.mxu0 0
        %1623 = vmatpush1.bf16.msra.mxu0 0
        %1624 = vmatprep.subr.bf16.mxu0 0
        %1625 = vmatpush1.bf16.msra.mxu0 0
        %1626 = vmatprep.subr.bf16.mxu0 0
        %1627 = vmatpush1.bf16.msra.mxu0 0
        %1628 = vmatprep.subr.bf16.mxu0 0
        %1629 = vmatpush1.bf16.msra.mxu0 0
        %1630 = vmatprep.subr.bf16.mxu0 0
        %1631 = vmatpush1.bf16.msra.mxu0 0
        %1632 = vmatprep.subr.bf16.mxu0 0
        %1633 = vmatpush1.bf16.msra.mxu0 0
        %1634 = vmatprep.subr.bf16.mxu0 0
        %1635 = vmatpush1.bf16.msra.mxu0 0
        %1636 = vmatprep.subr.bf16.mxu0 0
        %1637 = vmatpush1.bf16.msra.mxu0 0
        %1638 = vmatprep.subr.bf16.mxu0 0
        %1639 = vmatpush1.bf16.msra.mxu0 0
        %1640 = vmatprep.subr.bf16.mxu0 0
        %1641 = vmatpush1.bf16.msra.mxu0 0
        %1642 = vmatprep.subr.bf16.mxu0 0
        %1643 = vmatpush1.bf16.msra.mxu0 0
        %1644 = vmatprep.subr.bf16.mxu0 0
        %1645 = vmatpush1.bf16.msra.mxu0 0
        %1646 = vmatprep.mubr.bf16.mxu0 0
        %1647 = vmatmul.mubr.bf16.gmra.mrb[0].mxu0 %v1609
        %v1648 = vpop.f32.mrb[0].mxu0
        %v1649 = vadd.f32 0.0, %v1648
        %v1650 = vpop.f32.mrb[0].mxu0
        %v1651 = vpop.f32.mrb[0].mxu0
        %v1652 = vadd.f32 0.0, %v1651
        %v1653 = vpop.f32.mrb[0].mxu0
        %1654 = vdwg.mxu0
        %v1655 = vld [vmem:[%s532] sm:$0xf]
        %v1656 = vld [vmem:[%s532 + $0x4] sm:$0xf]
        %v1657 = vld [vmem:[%s10] sm:$0xf]
        %v1658 = vld [vmem:[%s10 + $0x4] sm:$0xf]
        %v1659 = vld [vmem:[%s532 + $0x8] sm:$0xf]
        %v1660 = vld [vmem:[%s532 + $0xc] sm:$0xf]
        %s1661 = scalar_lea.vmem %s10, 8
        %v1662 = vld [vmem:[%s1661] sm:$0xf]
        %v1663 = vld [vmem:[%s1661 + $0x4] sm:$0xf]
        %v1666 = vunpack.c.l.b16 %v1662
        %v1667 = vunpack.c.l.b16 %v1663
        %v1668 = vpack.c.b16 %v1667, %v1666
        %v1671 = vunpack.c.l.b16 %v1659
        %v1672 = vunpack.c.l.b16 %v1660
        %v1673 = vpack.c.b16 %v1672, %v1671
        %v1676 = vsel %vm544, %v1668, 0
        %1678 = vmatprep.subr.bf16.mxu0 0
        %1679 = vmatpush1.bf16.msra.mxu0 %v1673
        %1680 = vmatprep.subr.bf16.mxu0 0
        %1681 = vmatpush1.bf16.msra.mxu0 0
        %1682 = vmatprep.subr.bf16.mxu0 0
        %1683 = vmatpush1.bf16.msra.mxu0 0
        %1684 = vmatprep.subr.bf16.mxu0 0
        %1685 = vmatpush1.bf16.msra.mxu0 0
        %1686 = vmatprep.subr.bf16.mxu0 0
        %1687 = vmatpush1.bf16.msra.mxu0 0
        %1688 = vmatprep.subr.bf16.mxu0 0
        %1689 = vmatpush1.bf16.msra.mxu0 0
        %1690 = vmatprep.subr.bf16.mxu0 0
        %1691 = vmatpush1.bf16.msra.mxu0 0
        %1692 = vmatprep.subr.bf16.mxu0 0
        %1693 = vmatpush1.bf16.msra.mxu0 0
        %1694 = vmatprep.subr.bf16.mxu0 0
        %1695 = vmatpush1.bf16.msra.mxu0 0
        %1696 = vmatprep.subr.bf16.mxu0 0
        %1697 = vmatpush1.bf16.msra.mxu0 0
        %1698 = vmatprep.subr.bf16.mxu0 0
        %1699 = vmatpush1.bf16.msra.mxu0 0
        %1700 = vmatprep.subr.bf16.mxu0 0
        %1701 = vmatpush1.bf16.msra.mxu0 0
        %1702 = vmatprep.subr.bf16.mxu0 0
        %1703 = vmatpush1.bf16.msra.mxu0 0
        %1704 = vmatprep.subr.bf16.mxu0 0
        %1705 = vmatpush1.bf16.msra.mxu0 0
        %1706 = vmatprep.subr.bf16.mxu0 0
        %1707 = vmatpush1.bf16.msra.mxu0 0
        %1708 = vmatprep.subr.bf16.mxu0 0
        %1709 = vmatpush1.bf16.msra.mxu0 0
        %1710 = vmatprep.mubr.bf16.mxu0 0
        %1711 = vmatmul.mubr.bf16.gmra.mrb[0].mxu0 %v1676
        %v1712 = vpop.f32.mrb[0].mxu0
        %v1713 = vadd.f32 0.0, %v1712
        %v1714 = vpop.f32.mrb[0].mxu0
        %v1715 = vpop.f32.mrb[0].mxu0
        %v1716 = vadd.f32 0.0, %v1715
        %v1717 = vpop.f32.mrb[0].mxu0
        %1718 = vdwg.mxu0
        %v1721 = vunpack.c.l.b16 %v1657
        %v1722 = vunpack.c.l.b16 %v1658
        %v1723 = vpack.c.b16 %v1722, %v1721
        %v1726 = vunpack.c.l.b16 %v1655
        %v1727 = vunpack.c.l.b16 %v1656
        %v1728 = vpack.c.b16 %v1727, %v1726
        %v1731 = vsel %vm544, %v1723, 0
        %1733 = vmatprep.subr.bf16.mxu0 0
        %1734 = vmatpush1.bf16.msra.mxu0 %v1728
        %1735 = vmatprep.subr.bf16.mxu0 0
        %1736 = vmatpush1.bf16.msra.mxu0 0
        %1737 = vmatprep.subr.bf16.mxu0 0
        %1738 = vmatpush1.bf16.msra.mxu0 0
        %1739 = vmatprep.subr.bf16.mxu0 0
        %1740 = vmatpush1.bf16.msra.mxu0 0
        %1741 = vmatprep.subr.bf16.mxu0 0
        %1742 = vmatpush1.bf16.msra.mxu0 0
        %1743 = vmatprep.subr.bf16.mxu0 0
        %1744 = vmatpush1.bf16.msra.mxu0 0
        %1745 = vmatprep.subr.bf16.mxu0 0
        %1746 = vmatpush1.bf16.msra.mxu0 0
        %1747 = vmatprep.subr.bf16.mxu0 0
        %1748 = vmatpush1.bf16.msra.mxu0 0
        %1749 = vmatprep.subr.bf16.mxu0 0
        %1750 = vmatpush1.bf16.msra.mxu0 0
        %1751 = vmatprep.subr.bf16.mxu0 0
        %1752 = vmatpush1.bf16.msra.mxu0 0
        %1753 = vmatprep.subr.bf16.mxu0 0
        %1754 = vmatpush1.bf16.msra.mxu0 0
        %1755 = vmatprep.subr.bf16.mxu0 0
        %1756 = vmatpush1.bf16.msra.mxu0 0
        %1757 = vmatprep.subr.bf16.mxu0 0
        %1758 = vmatpush1.bf16.msra.mxu0 0
        %1759 = vmatprep.subr.bf16.mxu0 0
        %1760 = vmatpush1.bf16.msra.mxu0 0
        %1761 = vmatprep.subr.bf16.mxu0 0
        %1762 = vmatpush1.bf16.msra.mxu0 0
        %1763 = vmatprep.subr.bf16.mxu0 0
        %1764 = vmatpush1.bf16.msra.mxu0 0
        %1765 = vmatprep.mubr.bf16.mxu0 0
        %1766 = vmatmul.mubr.bf16.gmra.mrb[0].mxu0 %v1731
        %v1767 = vpop.f32.mrb[0].mxu0
        %v1768 = vadd.f32 %v1713, %v1767
        %v1769 = vpop.f32.mrb[0].mxu0
        %v1770 = vpop.f32.mrb[0].mxu0
        %v1771 = vadd.f32 %v1716, %v1770
        %v1772 = vpop.f32.mrb[0].mxu0
        %1773 = vdwg.mxu0
        %s1774 = scalar_lea.vmem %s10, 16
        %v1775 = vld [vmem:[%s1774] sm:$0xf]
        %v1776 = vld [vmem:[%s1774 + $0x4] sm:$0xf]
        %v1779 = vunpack.c.l.b16 %v1775
        %v1780 = vunpack.c.l.b16 %v1776
        %v1781 = vpack.c.b16 %v1780, %v1779
        %1782 = vrot.lane.b32.xlu0 %v1728, 127
        %v1783 = vpop.permute.xlu0 %1782
        %v1786 = vsel %vm544, %v1781, 0
        %1788 = vmatprep.subr.bf16.mxu0 0
        %1789 = vmatpush1.bf16.msra.mxu0 %v1783
        %1790 = vmatprep.subr.bf16.mxu0 0
        %1791 = vmatpush1.bf16.msra.mxu0 0
        %1792 = vmatprep.subr.bf16.mxu0 0
        %1793 = vmatpush1.bf16.msra.mxu0 0
        %1794 = vmatprep.subr.bf16.mxu0 0
        %1795 = vmatpush1.bf16.msra.mxu0 0
        %1796 = vmatprep.subr.bf16.mxu0 0
        %1797 = vmatpush1.bf16.msra.mxu0 0
        %1798 = vmatprep.subr.bf16.mxu0 0
        %1799 = vmatpush1.bf16.msra.mxu0 0
        %1800 = vmatprep.subr.bf16.mxu0 0
        %1801 = vmatpush1.bf16.msra.mxu0 0
        %1802 = vmatprep.subr.bf16.mxu0 0
        %1803 = vmatpush1.bf16.msra.mxu0 0
        %1804 = vmatprep.subr.bf16.mxu0 0
        %1805 = vmatpush1.bf16.msra.mxu0 0
        %1806 = vmatprep.subr.bf16.mxu0 0
        %1807 = vmatpush1.bf16.msra.mxu0 0
        %1808 = vmatprep.subr.bf16.mxu0 0
        %1809 = vmatpush1.bf16.msra.mxu0 0
        %1810 = vmatprep.subr.bf16.mxu0 0
        %1811 = vmatpush1.bf16.msra.mxu0 0
        %1812 = vmatprep.subr.bf16.mxu0 0
        %1813 = vmatpush1.bf16.msra.mxu0 0
        %1814 = vmatprep.subr.bf16.mxu0 0
        %1815 = vmatpush1.bf16.msra.mxu0 0
        %1816 = vmatprep.subr.bf16.mxu0 0
        %1817 = vmatpush1.bf16.msra.mxu0 0
        %1818 = vmatprep.subr.bf16.mxu0 0
        %1819 = vmatpush1.bf16.msra.mxu0 0
        %1820 = vmatprep.mubr.bf16.mxu0 0
        %1821 = vmatmul.mubr.bf16.gmra.mrb[0].mxu0 %v1786
        %v1822 = vpop.f32.mrb[0].mxu0
        %v1823 = vadd.f32 0.0, %v1822
        %v1824 = vpop.f32.mrb[0].mxu0
        %v1825 = vpop.f32.mrb[0].mxu0
        %v1826 = vadd.f32 0.0, %v1825
        %v1827 = vpop.f32.mrb[0].mxu0
        %1828 = vdwg.mxu0
        %v1829 = vadd.f32 %v1768, %v1823
        %v1830 = vadd.f32 %v1771, %v1826
        %v1831 = vld [vmem:[%s532 + $0x10] sm:$0xf]
        %v1832 = vld [vmem:[%s532 + $0x14] sm:$0xf]
        %s1833 = scalar_lea.vmem %s10, 24
        %v1834 = vld [vmem:[%s1833] sm:$0xf]
        %v1835 = vld [vmem:[%s1833 + $0x4] sm:$0xf]
        %v1838 = vunpack.c.l.b16 %v1834
        %v1839 = vunpack.c.l.b16 %v1835
        %v1840 = vpack.c.b16 %v1839, %v1838
        %v1843 = vunpack.c.l.b16 %v1831
        %v1844 = vunpack.c.l.b16 %v1832
        %v1845 = vpack.c.b16 %v1844, %v1843
        %v1848 = vsel %vm544, %v1840, 0
        %1850 = vmatprep.subr.bf16.mxu0 0
        %1851 = vmatpush1.bf16.msra.mxu0 %v1845
        %1852 = vmatprep.subr.bf16.mxu0 0
        %1853 = vmatpush1.bf16.msra.mxu0 0
        %1854 = vmatprep.subr.bf16.mxu0 0
        %1855 = vmatpush1.bf16.msra.mxu0 0
        %1856 = vmatprep.subr.bf16.mxu0 0
        %1857 = vmatpush1.bf16.msra.mxu0 0
        %1858 = vmatprep.subr.bf16.mxu0 0
        %1859 = vmatpush1.bf16.msra.mxu0 0
        %1860 = vmatprep.subr.bf16.mxu0 0
        %1861 = vmatpush1.bf16.msra.mxu0 0
        %1862 = vmatprep.subr.bf16.mxu0 0
        %1863 = vmatpush1.bf16.msra.mxu0 0
        %1864 = vmatprep.subr.bf16.mxu0 0
        %1865 = vmatpush1.bf16.msra.mxu0 0
        %1866 = vmatprep.subr.bf16.mxu0 0
        %1867 = vmatpush1.bf16.msra.mxu0 0
        %1868 = vmatprep.subr.bf16.mxu0 0
        %1869 = vmatpush1.bf16.msra.mxu0 0
        %1870 = vmatprep.subr.bf16.mxu0 0
        %1871 = vmatpush1.bf16.msra.mxu0 0
        %1872 = vmatprep.subr.bf16.mxu0 0
        %1873 = vmatpush1.bf16.msra.mxu0 0
        %1874 = vmatprep.subr.bf16.mxu0 0
        %1875 = vmatpush1.bf16.msra.mxu0 0
        %1876 = vmatprep.subr.bf16.mxu0 0
        %1877 = vmatpush1.bf16.msra.mxu0 0
        %1878 = vmatprep.subr.bf16.mxu0 0
        %1879 = vmatpush1.bf16.msra.mxu0 0
        %1880 = vmatprep.subr.bf16.mxu0 0
        %1881 = vmatpush1.bf16.msra.mxu0 0
        %1882 = vmatprep.mubr.bf16.mxu0 0
        %1883 = vmatmul.mubr.bf16.gmra.mrb[0].mxu0 %v1848
        %v1884 = vpop.f32.mrb[0].mxu0
        %v1885 = vadd.f32 0.0, %v1884
        %v1886 = vpop.f32.mrb[0].mxu0
        %v1887 = vpop.f32.mrb[0].mxu0
        %v1888 = vadd.f32 0.0, %v1887
        %v1889 = vpop.f32.mrb[0].mxu0
        %1890 = vdwg.mxu0
        %v1891 = vadd.f32 %v1829, %v1885
        %v1892 = vadd.f32 %v1830, %v1888
        %v1893 = vld [vmem:[%s532 + $0x18] sm:$0xf]
        %v1894 = vld [vmem:[%s532 + $0x1c] sm:$0xf]
        %s1895 = scalar_lea.vmem %s10, 32
        %v1896 = vld [vmem:[%s1895] sm:$0xf]
        %v1897 = vld [vmem:[%s1895 + $0x4] sm:$0xf]
        %v1900 = vunpack.c.l.b16 %v1896
        %v1901 = vunpack.c.l.b16 %v1897
        %v1902 = vpack.c.b16 %v1901, %v1900
        %v1905 = vunpack.c.l.b16 %v1893
        %v1906 = vunpack.c.l.b16 %v1894
        %v1907 = vpack.c.b16 %v1906, %v1905
        %v1910 = vsel %vm544, %v1902, 0
        %1912 = vmatprep.subr.bf16.mxu0 0
        %1913 = vmatpush1.bf16.msra.mxu0 %v1907
        %1914 = vmatprep.subr.bf16.mxu0 0
        %1915 = vmatpush1.bf16.msra.mxu0 0
        %1916 = vmatprep.subr.bf16.mxu0 0
        %1917 = vmatpush1.bf16.msra.mxu0 0
        %1918 = vmatprep.subr.bf16.mxu0 0
        %1919 = vmatpush1.bf16.msra.mxu0 0
        %1920 = vmatprep.subr.bf16.mxu0 0
        %1921 = vmatpush1.bf16.msra.mxu0 0
        %1922 = vmatprep.subr.bf16.mxu0 0
        %1923 = vmatpush1.bf16.msra.mxu0 0
        %1924 = vmatprep.subr.bf16.mxu0 0
        %1925 = vmatpush1.bf16.msra.mxu0 0
        %1926 = vmatprep.subr.bf16.mxu0 0
        %1927 = vmatpush1.bf16.msra.mxu0 0
        %1928 = vmatprep.subr.bf16.mxu0 0
        %1929 = vmatpush1.bf16.msra.mxu0 0
        %1930 = vmatprep.subr.bf16.mxu0 0
        %1931 = vmatpush1.bf16.msra.mxu0 0
        %1932 = vmatprep.subr.bf16.mxu0 0
        %1933 = vmatpush1.bf16.msra.mxu0 0
        %1934 = vmatprep.subr.bf16.mxu0 0
        %1935 = vmatpush1.bf16.msra.mxu0 0
        %1936 = vmatprep.subr.bf16.mxu0 0
        %1937 = vmatpush1.bf16.msra.mxu0 0
        %1938 = vmatprep.subr.bf16.mxu0 0
        %1939 = vmatpush1.bf16.msra.mxu0 0
        %1940 = vmatprep.subr.bf16.mxu0 0
        %1941 = vmatpush1.bf16.msra.mxu0 0
        %1942 = vmatprep.subr.bf16.mxu0 0
        %1943 = vmatpush1.bf16.msra.mxu0 0
        %1944 = vmatprep.mubr.bf16.mxu0 0
        %1945 = vmatmul.mubr.bf16.gmra.mrb[0].mxu0 %v1910
        %v1946 = vpop.f32.mrb[0].mxu0
        %v1947 = vadd.f32 0.0, %v1946
        %v1948 = vpop.f32.mrb[0].mxu0
        %v1949 = vpop.f32.mrb[0].mxu0
        %v1950 = vadd.f32 0.0, %v1949
        %v1951 = vpop.f32.mrb[0].mxu0
        %1952 = vdwg.mxu0
        %v1953 = vadd.f32 %v1891, %v1947
        %v1954 = vadd.f32 %v1892, %v1950
        %s1955 = scalar_lea.vmem %s10, 40
        %v1956 = vld [vmem:[%s1955] sm:$0xf]
        %v1957 = vld [vmem:[%s1955 + $0x4] sm:$0xf]
        %v1960 = vunpack.c.l.b16 %v1956
        %v1961 = vunpack.c.l.b16 %v1957
        %v1962 = vpack.c.b16 %v1961, %v1960
        %1963 = vrot.lane.b32.xlu0 %v1845, 127
        %v1964 = vpop.permute.xlu0 %1963
        %v1967 = vsel %vm544, %v1962, 0
        %1969 = vmatprep.subr.bf16.mxu0 0
        %1970 = vmatpush1.bf16.msra.mxu0 %v1964
        %1971 = vmatprep.subr.bf16.mxu0 0
        %1972 = vmatpush1.bf16.msra.mxu0 0
        %1973 = vmatprep.subr.bf16.mxu0 0
        %1974 = vmatpush1.bf16.msra.mxu0 0
        %1975 = vmatprep.subr.bf16.mxu0 0
        %1976 = vmatpush1.bf16.msra.mxu0 0
        %1977 = vmatprep.subr.bf16.mxu0 0
        %1978 = vmatpush1.bf16.msra.mxu0 0
        %1979 = vmatprep.subr.bf16.mxu0 0
        %1980 = vmatpush1.bf16.msra.mxu0 0
        %1981 = vmatprep.subr.bf16.mxu0 0
        %1982 = vmatpush1.bf16.msra.mxu0 0
        %1983 = vmatprep.subr.bf16.mxu0 0
        %1984 = vmatpush1.bf16.msra.mxu0 0
        %1985 = vmatprep.subr.bf16.mxu0 0
        %1986 = vmatpush1.bf16.msra.mxu0 0
        %1987 = vmatprep.subr.bf16.mxu0 0
        %1988 = vmatpush1.bf16.msra.mxu0 0
        %1989 = vmatprep.subr.bf16.mxu0 0
        %1990 = vmatpush1.bf16.msra.mxu0 0
        %1991 = vmatprep.subr.bf16.mxu0 0
        %1992 = vmatpush1.bf16.msra.mxu0 0
        %1993 = vmatprep.subr.bf16.mxu0 0
        %1994 = vmatpush1.bf16.msra.mxu0 0
        %1995 = vmatprep.subr.bf16.mxu0 0
        %1996 = vmatpush1.bf16.msra.mxu0 0
        %1997 = vmatprep.subr.bf16.mxu0 0
        %1998 = vmatpush1.bf16.msra.mxu0 0
        %1999 = vmatprep.subr.bf16.mxu0 0
        %2000 = vmatpush1.bf16.msra.mxu0 0
        %2001 = vmatprep.mubr.bf16.mxu0 0
        %2002 = vmatmul.mubr.bf16.gmra.mrb[0].mxu0 %v1967
        %v2003 = vpop.f32.mrb[0].mxu0
        %v2004 = vadd.f32 0.0, %v2003
        %v2005 = vpop.f32.mrb[0].mxu0
        %v2006 = vpop.f32.mrb[0].mxu0
        %v2007 = vadd.f32 0.0, %v2006
        %v2008 = vpop.f32.mrb[0].mxu0
        %2009 = vdwg.mxu0
        %v2010 = vadd.f32 %v1953, %v2004
        %v2011 = vadd.f32 %v1954, %v2007
        %s2012 = scalar_lea.vmem %s10, 48
        %v2013 = vld [vmem:[%s2012] sm:$0xf]
        %v2014 = vld [vmem:[%s2012 + $0x4] sm:$0xf]
        %v2017 = vunpack.c.l.b16 %v2013
        %v2018 = vunpack.c.l.b16 %v2014
        %v2019 = vpack.c.b16 %v2018, %v2017
        %2020 = vrot.lane.b32.xlu0 %v1728, 118
        %v2021 = vpop.permute.xlu0 %2020
        %v2024 = vsel %vm544, %v2019, 0
        %2026 = vmatprep.subr.bf16.mxu0 0
        %2027 = vmatpush1.bf16.msra.mxu0 %v2021
        %2028 = vmatprep.subr.bf16.mxu0 0
        %2029 = vmatpush1.bf16.msra.mxu0 0
        %2030 = vmatprep.subr.bf16.mxu0 0
        %2031 = vmatpush1.bf16.msra.mxu0 0
        %2032 = vmatprep.subr.bf16.mxu0 0
        %2033 = vmatpush1.bf16.msra.mxu0 0
        %2034 = vmatprep.subr.bf16.mxu0 0
        %2035 = vmatpush1.bf16.msra.mxu0 0
        %2036 = vmatprep.subr.bf16.mxu0 0
        %2037 = vmatpush1.bf16.msra.mxu0 0
        %2038 = vmatprep.subr.bf16.mxu0 0
        %2039 = vmatpush1.bf16.msra.mxu0 0
        %2040 = vmatprep.subr.bf16.mxu0 0
        %2041 = vmatpush1.bf16.msra.mxu0 0
        %2042 = vmatprep.subr.bf16.mxu0 0
        %2043 = vmatpush1.bf16.msra.mxu0 0
        %2044 = vmatprep.subr.bf16.mxu0 0
        %2045 = vmatpush1.bf16.msra.mxu0 0
        %2046 = vmatprep.subr.bf16.mxu0 0
        %2047 = vmatpush1.bf16.msra.mxu0 0
        %2048 = vmatprep.subr.bf16.mxu0 0
        %2049 = vmatpush1.bf16.msra.mxu0 0
        %2050 = vmatprep.subr.bf16.mxu0 0
        %2051 = vmatpush1.bf16.msra.mxu0 0
        %2052 = vmatprep.subr.bf16.mxu0 0
        %2053 = vmatpush1.bf16.msra.mxu0 0
        %2054 = vmatprep.subr.bf16.mxu0 0
        %2055 = vmatpush1.bf16.msra.mxu0 0
        %2056 = vmatprep.subr.bf16.mxu0 0
        %2057 = vmatpush1.bf16.msra.mxu0 0
        %2058 = vmatprep.mubr.bf16.mxu0 0
        %2059 = vmatmul.mubr.bf16.gmra.mrb[0].mxu0 %v2024
        %v2060 = vpop.f32.mrb[0].mxu0
        %v2061 = vadd.f32 0.0, %v2060
        %v2062 = vpop.f32.mrb[0].mxu0
        %v2063 = vpop.f32.mrb[0].mxu0
        %v2064 = vadd.f32 0.0, %v2063
        %v2065 = vpop.f32.mrb[0].mxu0
        %2066 = vdwg.mxu0
        %v2067 = vadd.f32 %v2010, %v2061
        %v2068 = vadd.f32 %v2011, %v2064
        %s2069 = scalar_lea.vmem %s10, 56
        %v2070 = vld [vmem:[%s2069] sm:$0xf]
        %v2071 = vld [vmem:[%s2069 + $0x4] sm:$0xf]
        %v2074 = vunpack.c.l.b16 %v2070
        %v2075 = vunpack.c.l.b16 %v2071
        %v2076 = vpack.c.b16 %v2075, %v2074
        %2077 = vrot.lane.b32.xlu0 %v1673, 118
        %v2078 = vpop.permute.xlu0 %2077
        %v2081 = vsel %vm544, %v2076, 0
        %2083 = vmatprep.subr.bf16.mxu0 0
        %2084 = vmatpush1.bf16.msra.mxu0 %v2078
        %2085 = vmatprep.subr.bf16.mxu0 0
        %2086 = vmatpush1.bf16.msra.mxu0 0
        %2087 = vmatprep.subr.bf16.mxu0 0
        %2088 = vmatpush1.bf16.msra.mxu0 0
        %2089 = vmatprep.subr.bf16.mxu0 0
        %2090 = vmatpush1.bf16.msra.mxu0 0
        %2091 = vmatprep.subr.bf16.mxu0 0
        %2092 = vmatpush1.bf16.msra.mxu0 0
        %2093 = vmatprep.subr.bf16.mxu0 0
        %2094 = vmatpush1.bf16.msra.mxu0 0
        %2095 = vmatprep.subr.bf16.mxu0 0
        %2096 = vmatpush1.bf16.msra.mxu0 0
        %2097 = vmatprep.subr.bf16.mxu0 0
        %2098 = vmatpush1.bf16.msra.mxu0 0
        %2099 = vmatprep.subr.bf16.mxu0 0
        %2100 = vmatpush1.bf16.msra.mxu0 0
        %2101 = vmatprep.subr.bf16.mxu0 0
        %2102 = vmatpush1.bf16.msra.mxu0 0
        %2103 = vmatprep.subr.bf16.mxu0 0
        %2104 = vmatpush1.bf16.msra.mxu0 0
        %2105 = vmatprep.subr.bf16.mxu0 0
        %2106 = vmatpush1.bf16.msra.mxu0 0
        %2107 = vmatprep.subr.bf16.mxu0 0
        %2108 = vmatpush1.bf16.msra.mxu0 0
        %2109 = vmatprep.subr.bf16.mxu0 0
        %2110 = vmatpush1.bf16.msra.mxu0 0
        %2111 = vmatprep.subr.bf16.mxu0 0
        %2112 = vmatpush1.bf16.msra.mxu0 0
        %2113 = vmatprep.subr.bf16.mxu0 0
        %2114 = vmatpush1.bf16.msra.mxu0 0
        %2115 = vmatprep.mubr.bf16.mxu0 0
        %2116 = vmatmul.mubr.bf16.gmra.mrb[0].mxu0 %v2081
        %v2117 = vpop.f32.mrb[0].mxu0
        %v2118 = vadd.f32 0.0, %v2117
        %v2119 = vpop.f32.mrb[0].mxu0
        %v2120 = vpop.f32.mrb[0].mxu0
        %v2121 = vadd.f32 0.0, %v2120
        %v2122 = vpop.f32.mrb[0].mxu0
        %2123 = vdwg.mxu0
        %v2124 = vadd.f32 %v2067, %v2118
        %v2125 = vadd.f32 %v2068, %v2121
        %s2126 = scalar_lea.vmem %s10, 64
        %v2127 = vld [vmem:[%s2126] sm:$0xf]
        %v2128 = vld [vmem:[%s2126 + $0x4] sm:$0xf]
        %v2131 = vunpack.c.l.b16 %v2127
        %v2132 = vunpack.c.l.b16 %v2128
        %v2133 = vpack.c.b16 %v2132, %v2131
        %2134 = vrot.lane.b32.xlu0 %v1728, 117
        %v2135 = vpop.permute.xlu0 %2134
        %v2138 = vsel %vm544, %v2133, 0
        %2140 = vmatprep.subr.bf16.mxu0 0
        %2141 = vmatpush1.bf16.msra.mxu0 %v2135
        %2142 = vmatprep.subr.bf16.mxu0 0
        %2143 = vmatpush1.bf16.msra.mxu0 0
        %2144 = vmatprep.subr.bf16.mxu0 0
        %2145 = vmatpush1.bf16.msra.mxu0 0
        %2146 = vmatprep.subr.bf16.mxu0 0
        %2147 = vmatpush1.bf16.msra.mxu0 0
        %2148 = vmatprep.subr.bf16.mxu0 0
        %2149 = vmatpush1.bf16.msra.mxu0 0
        %2150 = vmatprep.subr.bf16.mxu0 0
        %2151 = vmatpush1.bf16.msra.mxu0 0
        %2152 = vmatprep.subr.bf16.mxu0 0
        %2153 = vmatpush1.bf16.msra.mxu0 0
        %2154 = vmatprep.subr.bf16.mxu0 0
        %2155 = vmatpush1.bf16.msra.mxu0 0
        %2156 = vmatprep.subr.bf16.mxu0 0
        %2157 = vmatpush1.bf16.msra.mxu0 0
        %2158 = vmatprep.subr.bf16.mxu0 0
        %2159 = vmatpush1.bf16.msra.mxu0 0
        %2160 = vmatprep.subr.bf16.mxu0 0
        %2161 = vmatpush1.bf16.msra.mxu0 0
        %2162 = vmatprep.subr.bf16.mxu0 0
        %2163 = vmatpush1.bf16.msra.mxu0 0
        %2164 = vmatprep.subr.bf16.mxu0 0
        %2165 = vmatpush1.bf16.msra.mxu0 0
        %2166 = vmatprep.subr.bf16.mxu0 0
        %2167 = vmatpush1.bf16.msra.mxu0 0
        %2168 = vmatprep.subr.bf16.mxu0 0
        %2169 = vmatpush1.bf16.msra.mxu0 0
        %2170 = vmatprep.subr.bf16.mxu0 0
        %2171 = vmatpush1.bf16.msra.mxu0 0
        %2172 = vmatprep.mubr.bf16.mxu0 0
        %2173 = vmatmul.mubr.bf16.gmra.mrb[0].mxu0 %v2138
        %v2174 = vpop.f32.mrb[0].mxu0
        %v2175 = vadd.f32 0.0, %v2174
        %v2176 = vpop.f32.mrb[0].mxu0
        %v2177 = vpop.f32.mrb[0].mxu0
        %v2178 = vadd.f32 0.0, %v2177
        %v2179 = vpop.f32.mrb[0].mxu0
        %2180 = vdwg.mxu0
        %v2181 = vadd.f32 %v2124, %v2175
        %v2182 = vadd.f32 %v2125, %v2178
        %v2183 = vmul.f32 %v2181, %v594
        %v2184 = vmul.f32 %v2182, %v594
        %v2185 = vsel %vm1069, %v2183, 0.0
        %2186 = vadd.xlane.f32.xlu0 %v2185
        %v2187 = vpop.xlane.xlu0 %2186
        %v2188 = vsel %vm1069, %v2184, 0.0
        %2189 = vadd.xlane.f32.xlu0 %v2188
        %v2190 = vpop.xlane.xlu0 %2189
        %v2191 = vmul.f32 %v2187, 0.015625
        %v2192 = vmul.f32 %v2190, 0.015625
        %v2193 = vsub.f32 %v2181, %v2191
        %v2194 = vsub.f32 %v2182, %v2192
        %v2195 = vmul.f32 %v2193, %v2193
        %v2196 = vmul.f32 %v2194, %v2194
        %v2197 = vmul.f32 %v2195, %v594
        %v2198 = vmul.f32 %v2196, %v594
        %v2199 = vsel %vm1069, %v2197, 0.0
        %2200 = vadd.xlane.f32.xlu0 %v2199
        %v2201 = vpop.xlane.xlu0 %2200
        %v2202 = vsel %vm1069, %v2198, 0.0
        %2203 = vadd.xlane.f32.xlu0 %v2202
        %v2204 = vpop.xlane.xlu0 %2203
        %v2205 = vmul.f32 %v2201, 0.015625
        %v2206 = vmul.f32 %v2204, 0.015625
        %v2207 = vadd.f32 %v2205, 1e-05
        %v2208 = vadd.f32 %v2206, 1e-05
        %v2209 = vrsqrt.pop %v2207
        %v2210 = vrsqrt.pop %v2208
        %v2211 = vmul.f32 %v2193, %v2209
        %v2212 = vmul.f32 %v2194, %v2210
        %v2213 = vld [vmem:[%s11] sm:$0xff]
        %v2214 = vld [vmem:[%s11 + $0x8] sm:$0xff]
        %2216 = vset.pattern.permute.xlu0 0
        %2217 = vperm.xlu0 %2216, %v2213
        %v2218 = vpop.permute.xlu0 %2217
        %2221 = vset.pattern.permute.xlu0 0
        %2222 = vperm.xlu0 %2221, %v2214
        %v2223 = vpop.permute.xlu0 %2222
        %v2225 = vmul.f32 %v2211, %v2218
        %v2226 = vmul.f32 %v2212, %v2223
        %v2227 = vld [vmem:[%s12] sm:$0xff]
        %v2228 = vld [vmem:[%s12 + $0x8] sm:$0xff]
        %2230 = vset.pattern.permute.xlu0 0
        %2231 = vperm.xlu0 %2230, %v2227
        %v2232 = vpop.permute.xlu0 %2231
        %2235 = vset.pattern.permute.xlu0 0
        %2236 = vperm.xlu0 %2235, %v2228
        %v2237 = vpop.permute.xlu0 %2236
        %v2239 = vadd.f32 %v2225, %v2232
        %v2240 = vadd.f32 %v2226, %v2237
        %v2241 = vmax.f32 %v2239, 0.0
        %v2242 = vmax.f32 %v2240, 0.0
        %vm2243 = vcmask 89088
        %2244 = vst.msk [vmem:[#allocation3] sm:$0xff] %vm2243, 0
        %v2245 = vmul.f32 %v2241, %v594
        %v2246 = vmul.f32 %v2242, %v594
        %v2247 = vpack.c.bf16 %v2246, %v2245
        %2249 = vrot.lane.b32.xlu0 %v2247, 11
        %v2250 = vpop.permute.xlu0 %2249
        %vm2252 = vcmask 744536
        %2253 = vst.msk [vmem:[#allocation3] sm:$0xff] %vm2252, %v2250
        %vm2254 = vcmask 900824
        %2255 = vst.msk [vmem:[#allocation3] sm:$0xff] %vm2254, 0
        %v2256 = vld [vmem:[#allocation3] sm:$0xff]
        %v2257 = vld [vmem:[%s13] sm:$0xf]
        %v2258 = vld [vmem:[%s13 + $0x4] sm:$0xf]
        %s2259 = scalar_lea.vmem %s13, 8
        %v2260 = vld [vmem:[%s2259] sm:$0xf]
        %v2261 = vld [vmem:[%s2259 + $0x4] sm:$0xf]
        %v2264 = vunpack.c.l.b16 %v2260
        %v2265 = vunpack.c.l.b16 %v2261
        %v2266 = vpack.c.b16 %v2265, %v2264
        %2268 = vrot.lane.b32.xlu0 %v2256, 127
        %v2269 = vpop.permute.xlu0 %2268
        %v2272 = vsel %vm544, %v2266, 0
        %2274 = vmatprep.subr.bf16.mxu0 0
        %2275 = vmatpush1.bf16.msra.mxu0 %v2269
        %2276 = vmatprep.subr.bf16.mxu0 0
        %2277 = vmatpush1.bf16.msra.mxu0 0
        %2278 = vmatprep.subr.bf16.mxu0 0
        %2279 = vmatpush1.bf16.msra.mxu0 0
        %2280 = vmatprep.subr.bf16.mxu0 0
        %2281 = vmatpush1.bf16.msra.mxu0 0
        %2282 = vmatprep.subr.bf16.mxu0 0
        %2283 = vmatpush1.bf16.msra.mxu0 0
        %2284 = vmatprep.subr.bf16.mxu0 0
        %2285 = vmatpush1.bf16.msra.mxu0 0
        %2286 = vmatprep.subr.bf16.mxu0 0
        %2287 = vmatpush1.bf16.msra.mxu0 0
        %2288 = vmatprep.subr.bf16.mxu0 0
        %2289 = vmatpush1.bf16.msra.mxu0 0
        %2290 = vmatprep.subr.bf16.mxu0 0
        %2291 = vmatpush1.bf16.msra.mxu0 0
        %2292 = vmatprep.subr.bf16.mxu0 0
        %2293 = vmatpush1.bf16.msra.mxu0 0
        %2294 = vmatprep.subr.bf16.mxu0 0
        %2295 = vmatpush1.bf16.msra.mxu0 0
        %2296 = vmatprep.subr.bf16.mxu0 0
        %2297 = vmatpush1.bf16.msra.mxu0 0
        %2298 = vmatprep.subr.bf16.mxu0 0
        %2299 = vmatpush1.bf16.msra.mxu0 0
        %2300 = vmatprep.subr.bf16.mxu0 0
        %2301 = vmatpush1.bf16.msra.mxu0 0
        %2302 = vmatprep.subr.bf16.mxu0 0
        %2303 = vmatpush1.bf16.msra.mxu0 0
        %2304 = vmatprep.subr.bf16.mxu0 0
        %2305 = vmatpush1.bf16.msra.mxu0 0
        %2306 = vmatprep.mubr.bf16.mxu0 0
        %2307 = vmatmul.mubr.bf16.gmra.mrb[0].mxu0 %v2272
        %v2308 = vpop.f32.mrb[0].mxu0
        %v2309 = vadd.f32 0.0, %v2308
        %v2310 = vpop.f32.mrb[0].mxu0
        %v2311 = vpop.f32.mrb[0].mxu0
        %v2312 = vadd.f32 0.0, %v2311
        %v2313 = vpop.f32.mrb[0].mxu0
        %2314 = vdwg.mxu0
        %v2317 = vunpack.c.l.b16 %v2257
        %v2318 = vunpack.c.l.b16 %v2258
        %v2319 = vpack.c.b16 %v2318, %v2317
        %v2321 = vsel %vm544, %v2319, 0
        %2323 = vmatprep.subr.bf16.mxu0 0
        %2324 = vmatpush1.bf16.msra.mxu0 %v2256
        %2325 = vmatprep.subr.bf16.mxu0 0
        %2326 = vmatpush1.bf16.msra.mxu0 0
        %2327 = vmatprep.subr.bf16.mxu0 0
        %2328 = vmatpush1.bf16.msra.mxu0 0
        %2329 = vmatprep.subr.bf16.mxu0 0
        %2330 = vmatpush1.bf16.msra.mxu0 0
        %2331 = vmatprep.subr.bf16.mxu0 0
        %2332 = vmatpush1.bf16.msra.mxu0 0
        %2333 = vmatprep.subr.bf16.mxu0 0
        %2334 = vmatpush1.bf16.msra.mxu0 0
        %2335 = vmatprep.subr.bf16.mxu0 0
        %2336 = vmatpush1.bf16.msra.mxu0 0
        %2337 = vmatprep.subr.bf16.mxu0 0
        %2338 = vmatpush1.bf16.msra.mxu0 0
        %2339 = vmatprep.subr.bf16.mxu0 0
        %2340 = vmatpush1.bf16.msra.mxu0 0
        %2341 = vmatprep.subr.bf16.mxu0 0
        %2342 = vmatpush1.bf16.msra.mxu0 0
        %2343 = vmatprep.subr.bf16.mxu0 0
        %2344 = vmatpush1.bf16.msra.mxu0 0
        %2345 = vmatprep.subr.bf16.mxu0 0
        %2346 = vmatpush1.bf16.msra.mxu0 0
        %2347 = vmatprep.subr.bf16.mxu0 0
        %2348 = vmatpush1.bf16.msra.mxu0 0
        %2349 = vmatprep.subr.bf16.mxu0 0
        %2350 = vmatpush1.bf16.msra.mxu0 0
        %2351 = vmatprep.subr.bf16.mxu0 0
        %2352 = vmatpush1.bf16.msra.mxu0 0
        %2353 = vmatprep.subr.bf16.mxu0 0
        %2354 = vmatpush1.bf16.msra.mxu0 0
        %2355 = vmatprep.mubr.bf16.mxu0 0
        %2356 = vmatmul.mubr.bf16.gmra.mrb[0].mxu0 %v2321
        %v2357 = vpop.f32.mrb[0].mxu0
        %v2358 = vadd.f32 %v2309, %v2357
        %v2359 = vpop.f32.mrb[0].mxu0
        %v2360 = vpop.f32.mrb[0].mxu0
        %v2361 = vadd.f32 %v2312, %v2360
        %v2362 = vpop.f32.mrb[0].mxu0
        %2363 = vdwg.mxu0
        %s2364 = scalar_lea.vmem %s13, 16
        %v2365 = vld [vmem:[%s2364] sm:$0xf]
        %v2366 = vld [vmem:[%s2364 + $0x4] sm:$0xf]
        %v2369 = vunpack.c.l.b16 %v2365
        %v2370 = vunpack.c.l.b16 %v2366
        %v2371 = vpack.c.b16 %v2370, %v2369
        %2372 = vrot.lane.b32.xlu0 %v2256, 126
        %v2373 = vpop.permute.xlu0 %2372
        %v2376 = vsel %vm544, %v2371, 0
        %2378 = vmatprep.subr.bf16.mxu0 0
        %2379 = vmatpush1.bf16.msra.mxu0 %v2373
        %2380 = vmatprep.subr.bf16.mxu0 0
        %2381 = vmatpush1.bf16.msra.mxu0 0
        %2382 = vmatprep.subr.bf16.mxu0 0
        %2383 = vmatpush1.bf16.msra.mxu0 0
        %2384 = vmatprep.subr.bf16.mxu0 0
        %2385 = vmatpush1.bf16.msra.mxu0 0
        %2386 = vmatprep.subr.bf16.mxu0 0
        %2387 = vmatpush1.bf16.msra.mxu0 0
        %2388 = vmatprep.subr.bf16.mxu0 0
        %2389 = vmatpush1.bf16.msra.mxu0 0
        %2390 = vmatprep.subr.bf16.mxu0 0
        %2391 = vmatpush1.bf16.msra.mxu0 0
        %2392 = vmatprep.subr.bf16.mxu0 0
        %2393 = vmatpush1.bf16.msra.mxu0 0
        %2394 = vmatprep.subr.bf16.mxu0 0
        %2395 = vmatpush1.bf16.msra.mxu0 0
        %2396 = vmatprep.subr.bf16.mxu0 0
        %2397 = vmatpush1.bf16.msra.mxu0 0
        %2398 = vmatprep.subr.bf16.mxu0 0
        %2399 = vmatpush1.bf16.msra.mxu0 0
        %2400 = vmatprep.subr.bf16.mxu0 0
        %2401 = vmatpush1.bf16.msra.mxu0 0
        %2402 = vmatprep.subr.bf16.mxu0 0
        %2403 = vmatpush1.bf16.msra.mxu0 0
        %2404 = vmatprep.subr.bf16.mxu0 0
        %2405 = vmatpush1.bf16.msra.mxu0 0
        %2406 = vmatprep.subr.bf16.mxu0 0
        %2407 = vmatpush1.bf16.msra.mxu0 0
        %2408 = vmatprep.subr.bf16.mxu0 0
        %2409 = vmatpush1.bf16.msra.mxu0 0
        %2410 = vmatprep.mubr.bf16.mxu0 0
        %2411 = vmatmul.mubr.bf16.gmra.mrb[0].mxu0 %v2376
        %v2412 = vpop.f32.mrb[0].mxu0
        %v2413 = vadd.f32 0.0, %v2412
        %v2414 = vpop.f32.mrb[0].mxu0
        %v2415 = vpop.f32.mrb[0].mxu0
        %v2416 = vadd.f32 0.0, %v2415
        %v2417 = vpop.f32.mrb[0].mxu0
        %2418 = vdwg.mxu0
        %v2419 = vadd.f32 %v2358, %v2413
        %v2420 = vadd.f32 %v2361, %v2416
        %s2421 = scalar_lea.vmem %s13, 24
        %v2422 = vld [vmem:[%s2421] sm:$0xf]
        %v2423 = vld [vmem:[%s2421 + $0x4] sm:$0xf]
        %v2426 = vunpack.c.l.b16 %v2422
        %v2427 = vunpack.c.l.b16 %v2423
        %v2428 = vpack.c.b16 %v2427, %v2426
        %2429 = vrot.lane.b32.xlu0 %v2256, 118
        %v2430 = vpop.permute.xlu0 %2429
        %v2433 = vsel %vm544, %v2428, 0
        %2435 = vmatprep.subr.bf16.mxu0 0
        %2436 = vmatpush1.bf16.msra.mxu0 %v2430
        %2437 = vmatprep.subr.bf16.mxu0 0
        %2438 = vmatpush1.bf16.msra.mxu0 0
        %2439 = vmatprep.subr.bf16.mxu0 0
        %2440 = vmatpush1.bf16.msra.mxu0 0
        %2441 = vmatprep.subr.bf16.mxu0 0
        %2442 = vmatpush1.bf16.msra.mxu0 0
        %2443 = vmatprep.subr.bf16.mxu0 0
        %2444 = vmatpush1.bf16.msra.mxu0 0
        %2445 = vmatprep.subr.bf16.mxu0 0
        %2446 = vmatpush1.bf16.msra.mxu0 0
        %2447 = vmatprep.subr.bf16.mxu0 0
        %2448 = vmatpush1.bf16.msra.mxu0 0
        %2449 = vmatprep.subr.bf16.mxu0 0
        %2450 = vmatpush1.bf16.msra.mxu0 0
        %2451 = vmatprep.subr.bf16.mxu0 0
        %2452 = vmatpush1.bf16.msra.mxu0 0
        %2453 = vmatprep.subr.bf16.mxu0 0
        %2454 = vmatpush1.bf16.msra.mxu0 0
        %2455 = vmatprep.subr.bf16.mxu0 0
        %2456 = vmatpush1.bf16.msra.mxu0 0
        %2457 = vmatprep.subr.bf16.mxu0 0
        %2458 = vmatpush1.bf16.msra.mxu0 0
        %2459 = vmatprep.subr.bf16.mxu0 0
        %2460 = vmatpush1.bf16.msra.mxu0 0
        %2461 = vmatprep.subr.bf16.mxu0 0
        %2462 = vmatpush1.bf16.msra.mxu0 0
        %2463 = vmatprep.subr.bf16.mxu0 0
        %2464 = vmatpush1.bf16.msra.mxu0 0
        %2465 = vmatprep.subr.bf16.mxu0 0
        %2466 = vmatpush1.bf16.msra.mxu0 0
        %2467 = vmatprep.mubr.bf16.mxu0 0
        %2468 = vmatmul.mubr.bf16.gmra.mrb[0].mxu0 %v2433
        %v2469 = vpop.f32.mrb[0].mxu0
        %v2470 = vadd.f32 0.0, %v2469
        %v2471 = vpop.f32.mrb[0].mxu0
        %v2472 = vpop.f32.mrb[0].mxu0
        %v2473 = vadd.f32 0.0, %v2472
        %v2474 = vpop.f32.mrb[0].mxu0
        %2475 = vdwg.mxu0
        %v2476 = vadd.f32 %v2419, %v2470
        %v2477 = vadd.f32 %v2420, %v2473
        %s2478 = scalar_lea.vmem %s13, 32
        %v2479 = vld [vmem:[%s2478] sm:$0xf]
        %v2480 = vld [vmem:[%s2478 + $0x4] sm:$0xf]
        %v2483 = vunpack.c.l.b16 %v2479
        %v2484 = vunpack.c.l.b16 %v2480
        %v2485 = vpack.c.b16 %v2484, %v2483
        %2486 = vrot.lane.b32.xlu0 %v2256, 117
        %v2487 = vpop.permute.xlu0 %2486
        %v2490 = vsel %vm544, %v2485, 0
        %2492 = vmatprep.subr.bf16.mxu0 0
        %2493 = vmatpush1.bf16.msra.mxu0 %v2487
        %2494 = vmatprep.subr.bf16.mxu0 0
        %2495 = vmatpush1.bf16.msra.mxu0 0
        %2496 = vmatprep.subr.bf16.mxu0 0
        %2497 = vmatpush1.bf16.msra.mxu0 0
        %2498 = vmatprep.subr.bf16.mxu0 0
        %2499 = vmatpush1.bf16.msra.mxu0 0
        %2500 = vmatprep.subr.bf16.mxu0 0
        %2501 = vmatpush1.bf16.msra.mxu0 0
        %2502 = vmatprep.subr.bf16.mxu0 0
        %2503 = vmatpush1.bf16.msra.mxu0 0
        %2504 = vmatprep.subr.bf16.mxu0 0
        %2505 = vmatpush1.bf16.msra.mxu0 0
        %2506 = vmatprep.subr.bf16.mxu0 0
        %2507 = vmatpush1.bf16.msra.mxu0 0
        %2508 = vmatprep.subr.bf16.mxu0 0
        %2509 = vmatpush1.bf16.msra.mxu0 0
        %2510 = vmatprep.subr.bf16.mxu0 0
        %2511 = vmatpush1.bf16.msra.mxu0 0
        %2512 = vmatprep.subr.bf16.mxu0 0
        %2513 = vmatpush1.bf16.msra.mxu0 0
        %2514 = vmatprep.subr.bf16.mxu0 0
        %2515 = vmatpush1.bf16.msra.mxu0 0
        %2516 = vmatprep.subr.bf16.mxu0 0
        %2517 = vmatpush1.bf16.msra.mxu0 0
        %2518 = vmatprep.subr.bf16.mxu0 0
        %2519 = vmatpush1.bf16.msra.mxu0 0
        %2520 = vmatprep.subr.bf16.mxu0 0
        %2521 = vmatpush1.bf16.msra.mxu0 0
        %2522 = vmatprep.subr.bf16.mxu0 0
        %2523 = vmatpush1.bf16.msra.mxu0 0
        %2524 = vmatprep.mubr.bf16.mxu0 0
        %2525 = vmatmul.mubr.bf16.gmra.mrb[0].mxu0 %v2490
        %v2526 = vpop.f32.mrb[0].mxu0
        %v2527 = vadd.f32 0.0, %v2526
        %v2528 = vpop.f32.mrb[0].mxu0
        %v2529 = vpop.f32.mrb[0].mxu0
        %v2530 = vadd.f32 0.0, %v2529
        %v2531 = vpop.f32.mrb[0].mxu0
        %2532 = vdwg.mxu0
        %v2533 = vadd.f32 %v2476, %v2527
        %v2534 = vadd.f32 %v2477, %v2530
        %s2535 = scalar_lea.vmem %s13, 40
        %v2536 = vld [vmem:[%s2535] sm:$0xf]
        %v2537 = vld [vmem:[%s2535 + $0x4] sm:$0xf]
        %v2540 = vunpack.c.l.b16 %v2536
        %v2541 = vunpack.c.l.b16 %v2537
        %v2542 = vpack.c.b16 %v2541, %v2540
        %2543 = vrot.lane.b32.xlu0 %v2256, 116
        %v2544 = vpop.permute.xlu0 %2543
        %v2547 = vsel %vm544, %v2542, 0
        %2549 = vmatprep.subr.bf16.mxu0 0
        %2550 = vmatpush1.bf16.msra.mxu0 %v2544
        %2551 = vmatprep.subr.bf16.mxu0 0
        %2552 = vmatpush1.bf16.msra.mxu0 0
        %2553 = vmatprep.subr.bf16.mxu0 0
        %2554 = vmatpush1.bf16.msra.mxu0 0
        %2555 = vmatprep.subr.bf16.mxu0 0
        %2556 = vmatpush1.bf16.msra.mxu0 0
        %2557 = vmatprep.subr.bf16.mxu0 0
        %2558 = vmatpush1.bf16.msra.mxu0 0
        %2559 = vmatprep.subr.bf16.mxu0 0
        %2560 = vmatpush1.bf16.msra.mxu0 0
        %2561 = vmatprep.subr.bf16.mxu0 0
        %2562 = vmatpush1.bf16.msra.mxu0 0
        %2563 = vmatprep.subr.bf16.mxu0 0
        %2564 = vmatpush1.bf16.msra.mxu0 0
        %2565 = vmatprep.subr.bf16.mxu0 0
        %2566 = vmatpush1.bf16.msra.mxu0 0
        %2567 = vmatprep.subr.bf16.mxu0 0
        %2568 = vmatpush1.bf16.msra.mxu0 0
        %2569 = vmatprep.subr.bf16.mxu0 0
        %2570 = vmatpush1.bf16.msra.mxu0 0
        %2571 = vmatprep.subr.bf16.mxu0 0
        %2572 = vmatpush1.bf16.msra.mxu0 0
        %2573 = vmatprep.subr.bf16.mxu0 0
        %2574 = vmatpush1.bf16.msra.mxu0 0
        %2575 = vmatprep.subr.bf16.mxu0 0
        %2576 = vmatpush1.bf16.msra.mxu0 0
        %2577 = vmatprep.subr.bf16.mxu0 0
        %2578 = vmatpush1.bf16.msra.mxu0 0
        %2579 = vmatprep.subr.bf16.mxu0 0
        %2580 = vmatpush1.bf16.msra.mxu0 0
        %2581 = vmatprep.mubr.bf16.mxu0 0
        %2582 = vmatmul.mubr.bf16.gmra.mrb[0].mxu0 %v2547
        %v2583 = vpop.f32.mrb[0].mxu0
        %v2584 = vadd.f32 0.0, %v2583
        %v2585 = vpop.f32.mrb[0].mxu0
        %v2586 = vpop.f32.mrb[0].mxu0
        %v2587 = vadd.f32 0.0, %v2586
        %v2588 = vpop.f32.mrb[0].mxu0
        %2589 = vdwg.mxu0
        %v2590 = vadd.f32 %v2533, %v2584
        %v2591 = vadd.f32 %v2534, %v2587
        %s2592 = scalar_lea.vmem %s13, 48
        %v2593 = vld [vmem:[%s2592] sm:$0xf]
        %v2594 = vld [vmem:[%s2592 + $0x4] sm:$0xf]
        %v2597 = vunpack.c.l.b16 %v2593
        %v2598 = vunpack.c.l.b16 %v2594
        %v2599 = vpack.c.b16 %v2598, %v2597
        %2600 = vrot.lane.b32.xlu0 %v2256, 108
        %v2601 = vpop.permute.xlu0 %2600
        %v2604 = vsel %vm544, %v2599, 0
        %2606 = vmatprep.subr.bf16.mxu0 0
        %2607 = vmatpush1.bf16.msra.mxu0 %v2601
        %2608 = vmatprep.subr.bf16.mxu0 0
        %2609 = vmatpush1.bf16.msra.mxu0 0
        %2610 = vmatprep.subr.bf16.mxu0 0
        %2611 = vmatpush1.bf16.msra.mxu0 0
        %2612 = vmatprep.subr.bf16.mxu0 0
        %2613 = vmatpush1.bf16.msra.mxu0 0
        %2614 = vmatprep.subr.bf16.mxu0 0
        %2615 = vmatpush1.bf16.msra.mxu0 0
        %2616 = vmatprep.subr.bf16.mxu0 0
        %2617 = vmatpush1.bf16.msra.mxu0 0
        %2618 = vmatprep.subr.bf16.mxu0 0
        %2619 = vmatpush1.bf16.msra.mxu0 0
        %2620 = vmatprep.subr.bf16.mxu0 0
        %2621 = vmatpush1.bf16.msra.mxu0 0
        %2622 = vmatprep.subr.bf16.mxu0 0
        %2623 = vmatpush1.bf16.msra.mxu0 0
        %2624 = vmatprep.subr.bf16.mxu0 0
        %2625 = vmatpush1.bf16.msra.mxu0 0
        %2626 = vmatprep.subr.bf16.mxu0 0
        %2627 = vmatpush1.bf16.msra.mxu0 0
        %2628 = vmatprep.subr.bf16.mxu0 0
        %2629 = vmatpush1.bf16.msra.mxu0 0
        %2630 = vmatprep.subr.bf16.mxu0 0
        %2631 = vmatpush1.bf16.msra.mxu0 0
        %2632 = vmatprep.subr.bf16.mxu0 0
        %2633 = vmatpush1.bf16.msra.mxu0 0
        %2634 = vmatprep.subr.bf16.mxu0 0
        %2635 = vmatpush1.bf16.msra.mxu0 0
        %2636 = vmatprep.subr.bf16.mxu0 0
        %2637 = vmatpush1.bf16.msra.mxu0 0
        %2638 = vmatprep.mubr.bf16.mxu0 0
        %2639 = vmatmul.mubr.bf16.gmra.mrb[0].mxu0 %v2604
        %v2640 = vpop.f32.mrb[0].mxu0
        %v2641 = vadd.f32 0.0, %v2640
        %v2642 = vpop.f32.mrb[0].mxu0
        %v2643 = vpop.f32.mrb[0].mxu0
        %v2644 = vadd.f32 0.0, %v2643
        %v2645 = vpop.f32.mrb[0].mxu0
        %2646 = vdwg.mxu0
        %v2647 = vadd.f32 %v2590, %v2641
        %v2648 = vadd.f32 %v2591, %v2644
        %s2649 = scalar_lea.vmem %s13, 56
        %v2650 = vld [vmem:[%s2649] sm:$0xf]
        %v2651 = vld [vmem:[%s2649 + $0x4] sm:$0xf]
        %v2654 = vunpack.c.l.b16 %v2650
        %v2655 = vunpack.c.l.b16 %v2651
        %v2656 = vpack.c.b16 %v2655, %v2654
        %2657 = vrot.lane.b32.xlu0 %v2256, 107
        %v2658 = vpop.permute.xlu0 %2657
        %v2661 = vsel %vm544, %v2656, 0
        %2663 = vmatprep.subr.bf16.mxu0 0
        %2664 = vmatpush1.bf16.msra.mxu0 %v2658
        %2665 = vmatprep.subr.bf16.mxu0 0
        %2666 = vmatpush1.bf16.msra.mxu0 0
        %2667 = vmatprep.subr.bf16.mxu0 0
        %2668 = vmatpush1.bf16.msra.mxu0 0
        %2669 = vmatprep.subr.bf16.mxu0 0
        %2670 = vmatpush1.bf16.msra.mxu0 0
        %2671 = vmatprep.subr.bf16.mxu0 0
        %2672 = vmatpush1.bf16.msra.mxu0 0
        %2673 = vmatprep.subr.bf16.mxu0 0
        %2674 = vmatpush1.bf16.msra.mxu0 0
        %2675 = vmatprep.subr.bf16.mxu0 0
        %2676 = vmatpush1.bf16.msra.mxu0 0
        %2677 = vmatprep.subr.bf16.mxu0 0
        %2678 = vmatpush1.bf16.msra.mxu0 0
        %2679 = vmatprep.subr.bf16.mxu0 0
        %2680 = vmatpush1.bf16.msra.mxu0 0
        %2681 = vmatprep.subr.bf16.mxu0 0
        %2682 = vmatpush1.bf16.msra.mxu0 0
        %2683 = vmatprep.subr.bf16.mxu0 0
        %2684 = vmatpush1.bf16.msra.mxu0 0
        %2685 = vmatprep.subr.bf16.mxu0 0
        %2686 = vmatpush1.bf16.msra.mxu0 0
        %2687 = vmatprep.subr.bf16.mxu0 0
        %2688 = vmatpush1.bf16.msra.mxu0 0
        %2689 = vmatprep.subr.bf16.mxu0 0
        %2690 = vmatpush1.bf16.msra.mxu0 0
        %2691 = vmatprep.subr.bf16.mxu0 0
        %2692 = vmatpush1.bf16.msra.mxu0 0
        %2693 = vmatprep.subr.bf16.mxu0 0
        %2694 = vmatpush1.bf16.msra.mxu0 0
        %2695 = vmatprep.mubr.bf16.mxu0 0
        %2696 = vmatmul.mubr.bf16.gmra.mrb[0].mxu0 %v2661
        %v2697 = vpop.f32.mrb[0].mxu0
        %v2698 = vadd.f32 0.0, %v2697
        %v2699 = vpop.f32.mrb[0].mxu0
        %v2700 = vpop.f32.mrb[0].mxu0
        %v2701 = vadd.f32 0.0, %v2700
        %v2702 = vpop.f32.mrb[0].mxu0
        %2703 = vdwg.mxu0
        %v2704 = vadd.f32 %v2647, %v2698
        %v2705 = vadd.f32 %v2648, %v2701
        %s2706 = scalar_lea.vmem %s13, 64
        %v2707 = vld [vmem:[%s2706] sm:$0xf]
        %v2708 = vld [vmem:[%s2706 + $0x4] sm:$0xf]
        %v2711 = vunpack.c.l.b16 %v2707
        %v2712 = vunpack.c.l.b16 %v2708
        %v2713 = vpack.c.b16 %v2712, %v2711
        %2714 = vrot.lane.b32.xlu0 %v2256, 106
        %v2715 = vpop.permute.xlu0 %2714
        %v2718 = vsel %vm544, %v2713, 0
        %2720 = vmatprep.subr.bf16.mxu0 0
        %2721 = vmatpush1.bf16.msra.mxu0 %v2715
        %2722 = vmatprep.subr.bf16.mxu0 0
        %2723 = vmatpush1.bf16.msra.mxu0 0
        %2724 = vmatprep.subr.bf16.mxu0 0
        %2725 = vmatpush1.bf16.msra.mxu0 0
        %2726 = vmatprep.subr.bf16.mxu0 0
        %2727 = vmatpush1.bf16.msra.mxu0 0
        %2728 = vmatprep.subr.bf16.mxu0 0
        %2729 = vmatpush1.bf16.msra.mxu0 0
        %2730 = vmatprep.subr.bf16.mxu0 0
        %2731 = vmatpush1.bf16.msra.mxu0 0
        %2732 = vmatprep.subr.bf16.mxu0 0
        %2733 = vmatpush1.bf16.msra.mxu0 0
        %2734 = vmatprep.subr.bf16.mxu0 0
        %2735 = vmatpush1.bf16.msra.mxu0 0
        %2736 = vmatprep.subr.bf16.mxu0 0
        %2737 = vmatpush1.bf16.msra.mxu0 0
        %2738 = vmatprep.subr.bf16.mxu0 0
        %2739 = vmatpush1.bf16.msra.mxu0 0
        %2740 = vmatprep.subr.bf16.mxu0 0
        %2741 = vmatpush1.bf16.msra.mxu0 0
        %2742 = vmatprep.subr.bf16.mxu0 0
        %2743 = vmatpush1.bf16.msra.mxu0 0
        %2744 = vmatprep.subr.bf16.mxu0 0
        %2745 = vmatpush1.bf16.msra.mxu0 0
        %2746 = vmatprep.subr.bf16.mxu0 0
        %2747 = vmatpush1.bf16.msra.mxu0 0
        %2748 = vmatprep.subr.bf16.mxu0 0
        %2749 = vmatpush1.bf16.msra.mxu0 0
        %2750 = vmatprep.subr.bf16.mxu0 0
        %2751 = vmatpush1.bf16.msra.mxu0 0
        %2752 = vmatprep.mubr.bf16.mxu0 0
        %2753 = vmatmul.mubr.bf16.gmra.mrb[0].mxu0 %v2718
        %v2754 = vpop.f32.mrb[0].mxu0
        %v2755 = vadd.f32 0.0, %v2754
        %v2756 = vpop.f32.mrb[0].mxu0
        %v2757 = vpop.f32.mrb[0].mxu0
        %v2758 = vadd.f32 0.0, %v2757
        %v2759 = vpop.f32.mrb[0].mxu0
        %2760 = vdwg.mxu0
        %v2761 = vadd.f32 %v2704, %v2755
        %v2762 = vadd.f32 %v2705, %v2758
        %v2763 = vmul.f32 %v2761, %v594
        %v2764 = vmul.f32 %v2762, %v594
        %v2765 = vsel %vm1069, %v2763, 0.0
        %2766 = vadd.xlane.f32.xlu0 %v2765
        %v2767 = vpop.xlane.xlu0 %2766
        %v2768 = vsel %vm1069, %v2764, 0.0
        %2769 = vadd.xlane.f32.xlu0 %v2768
        %v2770 = vpop.xlane.xlu0 %2769
        %v2771 = vmul.f32 %v2767, 0.015625
        %v2772 = vmul.f32 %v2770, 0.015625
        %v2773 = vsub.f32 %v2761, %v2771
        %v2774 = vsub.f32 %v2762, %v2772
        %v2775 = vmul.f32 %v2773, %v2773
        %v2776 = vmul.f32 %v2774, %v2774
        %v2777 = vmul.f32 %v2775, %v594
        %v2778 = vmul.f32 %v2776, %v594
        %v2779 = vsel %vm1069, %v2777, 0.0
        %2780 = vadd.xlane.f32.xlu0 %v2779
        %v2781 = vpop.xlane.xlu0 %2780
        %v2782 = vsel %vm1069, %v2778, 0.0
        %2783 = vadd.xlane.f32.xlu0 %v2782
        %v2784 = vpop.xlane.xlu0 %2783
        %v2785 = vmul.f32 %v2781, 0.015625
        %v2786 = vmul.f32 %v2784, 0.015625
        %v2787 = vadd.f32 %v2785, 1e-05
        %v2788 = vadd.f32 %v2786, 1e-05
        %v2789 = vrsqrt.pop %v2787
        %v2790 = vrsqrt.pop %v2788
        %v2791 = vmul.f32 %v2773, %v2789
        %v2792 = vmul.f32 %v2774, %v2790
        %v2793 = vld [vmem:[%s14] sm:$0xff]
        %v2794 = vld [vmem:[%s14 + $0x8] sm:$0xff]
        %2796 = vset.pattern.permute.xlu0 0
        %2797 = vperm.xlu0 %2796, %v2793
        %v2798 = vpop.permute.xlu0 %2797
        %2801 = vset.pattern.permute.xlu0 0
        %2802 = vperm.xlu0 %2801, %v2794
        %v2803 = vpop.permute.xlu0 %2802
        %v2805 = vmul.f32 %v2791, %v2798
        %v2806 = vmul.f32 %v2792, %v2803
        %v2807 = vld [vmem:[%s15] sm:$0xff]
        %v2808 = vld [vmem:[%s15 + $0x8] sm:$0xff]
        %2810 = vset.pattern.permute.xlu0 0
        %2811 = vperm.xlu0 %2810, %v2807
        %v2812 = vpop.permute.xlu0 %2811
        %2815 = vset.pattern.permute.xlu0 0
        %2816 = vperm.xlu0 %2815, %v2808
        %v2817 = vpop.permute.xlu0 %2816
        %v2819 = vadd.f32 %v2805, %v2812
        %v2820 = vadd.f32 %v2806, %v2817
        %v2821 = vmax.f32 %v2819, 0.0
        %v2822 = vmax.f32 %v2820, 0.0
        %v2823 = vmul.f32 %v1649, %v2821
        %v2824 = vmul.f32 %v1652, %v2822
        %v2825 = vadd.f32 %v2823, %v2821
        %v2826 = vadd.f32 %v2824, %v2822
        %2827 = vst.msk [vmem:[%s527] sm:$0xff] %vm1069, %v2825
        %2828 = vst.msk [vmem:[%s527 + $0x8] sm:$0xff] %vm1069, %v2826
        %s2829 = sand.u32 %s380, 1
        %s2830 = scalar_lea.sflag [#allocation6], %s2829
        %s2831 = sand.u32 %s380, 1
        %s2832 = smul.addr %s2831, 16
        %s2833 = scalar_lea.vmem [#allocation7], %s2832
        // Predicated region
        $region89: #{tpu_custom_call.1} parent=83 // pred_check
          %p2834 = pneg %p390
        $region90: #{tpu_custom_call.1} parent=83 // pred_check_branch
          %2836 = sbr.rel (%p2834) target = $region92
        $region91: #{tpu_custom_call.1} parent=83 // pred_region
          %s2838 = ssub.s32 256, 256
          %2839 = vsyncadd %s2830, %s2838
          %s2840 = smul.addr %s31, 2
          %s2841 = smul.addr %s2840, 128
          %s2842 = scalar_lea.hbm %s16, %s2841
          %s2843 = sshll.u32 %s2833, 4
          %s2844 = int_to_ptr.vmem [resolvable:$true] %s2843
          %2849 = dma.vmem_to_hbm [thread:$0]  %s2844, 256, %s2842, %s2830, 128, 128, 8
        $region92: #{tpu_custom_call.1} parent=83 // pred_fallthru
          _
      $region84: #{tpu_custom_call.1} parent=5 // pred_fallthru
        _
      %p2850 = scmp.le.s32.totalorder 2, %s26
      // Predicated region
      $region93: #{tpu_custom_call.1} parent=5 // pred_check
        %p2851 = pneg %p2850
      $region94: #{tpu_custom_call.1} parent=5 // pred_check_branch
        %2853 = sbr.rel (%p2851) target = $region96
      $region95: #{tpu_custom_call.1} parent=5 // pred_region
        %s2854 = ssub.s32 %s26, 2
        // Predicated region
        $region97: #{tpu_custom_call.1} parent=95 // pred_check
          %p2855 = pneg %p396
        $region98: #{tpu_custom_call.1} parent=95 // pred_check_branch
          %2857 = sbr.rel (%p2855) target = $region100
        $region99: #{tpu_custom_call.1} parent=95 // pred_region
          %s2858 = sand.u32 %s381, 1
          %s2859 = scalar_lea.sflag [#allocation6], %s2858
          %s2860 = sand.u32 %s381, 1
          %s2861 = smul.addr %s2860, 16
          %s2862 = scalar_lea.vmem [#allocation7], %s2861
          %2863 = dma.done %s2859, 256
        $region100: #{tpu_custom_call.1} parent=95 // pred_fallthru
          _
      $region96: #{tpu_custom_call.1} parent=5 // pred_fallthru
        _
    $region6: #{tpu_custom_call.1} parent=1 // loop_footer
      %s30 = sadd.s32 1, %s26
    $region7: #{tpu_custom_call.1} parent=1 // loop_footer_branch
      %25 = sbr.rel target = $region3
    $region8: #{tpu_custom_call.1} parent=1 // loop_exit
      _
    %2864 = vsyncpa [#allocation5], 1
    %s2865 = scalar_lea.sflag [#allocation5], 1
    %2866 = vsyncpa %s2865, 1
    %2867 = vsyncpa [#allocation6], 1
    %s2868 = scalar_lea.sflag [#allocation6], 1
    %2869 = vsyncpa %s2868, 1

</llo_original>
